<compile_context>
chip_gen: v5e
topology: v5e:2x2
jax: 0.10.0
libtpu: 0.0.40
codegen_flags: <defaults>
</compile_context>

<pallas_src>
import functools
import math

import jax
import jax.numpy as jnp
from jax.experimental import pallas as pl
from jax.experimental.pallas import tpu as pltpu

GENERIC_ID = 0  # module-level constant referenced by the PyTorch forward

_VMEM_SPEC = pl.BlockSpec(memory_space=pltpu.MemorySpace.VMEM)


def _stacked_spec(per_shape):
    """BlockSpec selecting encoder `e` from an array stacked on a leading axis."""
    per_shape = tuple(int(d) for d in per_shape)
    zeros = (0,) * len(per_shape)
    return pl.BlockSpec((None,) + per_shape, lambda e: (e,) + zeros)


def _gelu_new(x):
    # gelu_new (tanh approximation), as used by ALBERT; f32 math.
    return 0.5 * x * (1.0 + jnp.tanh(0.7978845608028654 * (x + 0.044715 * x * x * x)))


# ----------------------------------------------------------------------------
# Fused ALBERT encoder kernel (embeddings-LN -> layers -> pooler)
# ----------------------------------------------------------------------------

def _encoder_kernel(B, S, nH, dh, nlayers,
                    emb_ref, mask_ref,
                    emb_ln_g, emb_ln_b, emb_map_w, emb_map_b,
                    wqkv, bqkv, wo, bo, attn_ln_g, attn_ln_b,
                    ffn_w, ffn_b, ffn_out_w, ffn_out_b, ffn_ln_g, ffn_ln_b,
                    pool_w, pool_b,
                    out_ref):
    H = nH * dh
    scale = 1.0 / math.sqrt(dh)

    def layernorm(x, g_ref, b_ref):
        mu = jnp.mean(x, axis=-1, keepdims=True)
        xc = x - mu
        var = jnp.mean(xc * xc, axis=-1, keepdims=True)
        return xc * jax.lax.rsqrt(var + 1e-12) * g_ref[...] + b_ref[...]

    def matmul(x, w_ref, b_ref):
        # bf16 MXU inputs, f32 accumulation; bias add in f32.
        return (jnp.dot(x.astype(jnp.bfloat16), w_ref[...],
                        preferred_element_type=jnp.float32) + b_ref[...])

    # embedding LayerNorm + embedding_size -> hidden_size mapping
    emb = layernorm(emb_ref[...], emb_ln_g, emb_ln_b)          # (B*S, E) f32
    h = matmul(emb, emb_map_w, emb_map_b)                      # (B*S, H) f32

    mask = mask_ref[...]                                       # (B, S) additive

    # ALBERT parameter sharing: the same layer weights repeated nlayers times.
    for _ in range(nlayers):
        qkv = matmul(h, wqkv, bqkv)                            # (B*S, 3H)

        attn_rows = []
        for b in range(B):
            rows = slice(b * S, (b + 1) * S)
            m_b = mask[b:b + 1, :]                             # (1, S)
            acc = None
            for hd in range(nH):
                q = qkv[rows, hd * dh:(hd + 1) * dh]
                k = qkv[rows, H + hd * dh:H + (hd + 1) * dh]
                v = qkv[rows, 2 * H + hd * dh:2 * H + (hd + 1) * dh]
                # scores without an explicit k transpose
                s = jax.lax.dot_general(
                    q.astype(jnp.bfloat16), k.astype(jnp.bfloat16),
                    (((1,), (1,)), ((), ())),
                    preferred_element_type=jnp.float32) * scale + m_b
                s = s - jnp.max(s, axis=-1, keepdims=True)
                p = jnp.exp(s)
                p = p * pl.reciprocal(jnp.sum(p, axis=-1, keepdims=True),
                                      approx=True)
                ctx = jnp.dot(p.astype(jnp.bfloat16), v.astype(jnp.bfloat16),
                              preferred_element_type=jnp.float32)   # (S, dh)
                # fold the per-head output projection: ctx @ wo == sum_h ctx_h @ wo_h
                contrib = jnp.dot(ctx.astype(jnp.bfloat16),
                                  wo[hd * dh:(hd + 1) * dh, :],
                                  preferred_element_type=jnp.float32)
                acc = contrib if acc is None else acc + contrib
            attn_rows.append(acc)                              # (S, H)

        attn_out = jnp.concatenate(attn_rows, axis=0) + bo[...]  # (B*S, H)
        h = layernorm(attn_out + h, attn_ln_g, attn_ln_b)

        ffn = _gelu_new(matmul(h, ffn_w, ffn_b))
        ffn_out = matmul(ffn, ffn_out_w, ffn_out_b)
        h = layernorm(ffn_out + h, ffn_ln_g, ffn_ln_b)

    # pooler: tanh(W @ first-token + b), written row-by-row into the output
    for b in range(B):
        first = h[b * S:b * S + 1, :]                          # (1, H)
        out_ref[b:b + 1, :] = jnp.tanh(matmul(first, pool_w, pool_b))


def encoders_pallas(stacked, emb, mask, cfg):
    """Run both encoders in one pallas_call.

    stacked: list of per-encoder-stacked weight arrays (leading dim 2)
    emb:     (2, B*S, E) f32 summed token+pos+type embeddings
    mask:    (2, B, S)  f32 additive attention mask
    returns  (2, B, H)  f32 pooled outputs
    """
    nE = emb.shape[0]
    B, S = int(mask.shape[1]), int(mask.shape[2])
    H = cfg["hidden"]
    operands = [emb, mask] + list(stacked)
    in_specs = [_stacked_spec(a.shape[1:]) for a in operands]
    kern = functools.partial(_encoder_kernel, B, S, cfg["nheads"],
                             cfg["head_dim"], cfg["nlayers"])
    return pl.pallas_call(
        kern,
        out_shape=jax.ShapeDtypeStruct((nE, B, H), jnp.float32),
        grid=(nE,),
        in_specs=in_specs,
        out_specs=_stacked_spec((B, H)),
        compiler_params=pltpu.CompilerParams(
            dimension_semantics=("parallel",)),   # one encoder per TC on v7x
    )(*operands)


# ----------------------------------------------------------------------------
# Regression head kernel (concat + subreddit blend + classifier, lane-padded)
# ----------------------------------------------------------------------------

def _head_kernel(tlc_ref, post_ref, meta_ref, sub_id_ref, sub_gen_ref,
                 w_tlc_ref, w_post_ref, w_meta_ref, w_sub_ref, b_ref, o_ref):
    # subreddit_output = 0.5 * E[ids] + 0.5 * E[GENERIC_ID]
    sub = 0.5 * sub_id_ref[...] + 0.5 * sub_gen_ref[...]
    # logits = concat(tlc, post, meta, sub) @ W + b  (concat fused as split dots)
    o_ref[...] = (
        jnp.dot(tlc_ref[...], w_tlc_ref[...], preferred_element_type=jnp.float32)
        + jnp.dot(post_ref[...], w_post_ref[...], preferred_element_type=jnp.float32)
        + jnp.dot(meta_ref[...], w_meta_ref[...], preferred_element_type=jnp.float32)
        + jnp.dot(sub, w_sub_ref[...], preferred_element_type=jnp.float32)
        + b_ref[...])


def head_pallas(tlc_repr, post_repr, meta_data, sub_id_emb, sub_gen_emb,
                W, bias, num_labels):
    B, H = tlc_repr.shape
    M = meta_data.shape[1]
    NPAD = 128  # lane-dense output slab; real logits sliced out in JAX
    Wp = jnp.zeros((W.shape[0], NPAD), jnp.float32).at[:, :num_labels].set(W)
    bp = jnp.zeros((1, NPAD), jnp.float32).at[:, :num_labels].set(bias.reshape(1, -1))
    w_tlc, w_post = Wp[:H], Wp[H:2 * H]
    w_meta, w_sub = Wp[2 * H:2 * H + M], Wp[2 * H + M:]
    out = pl.pallas_call(
        _head_kernel,
        out_shape=jax.ShapeDtypeStruct((B, NPAD), jnp.float32),
        in_specs=[_VMEM_SPEC] * 10,
        out_specs=_VMEM_SPEC,
    )(tlc_repr, post_repr, meta_data, sub_id_emb, sub_gen_emb,
      w_tlc, w_post, w_meta, w_sub, bp)
    return out[:, :num_labels]


# ----------------------------------------------------------------------------
# Parameter construction / stacking
# ----------------------------------------------------------------------------

def init_albert_params(key, cfg):
    ks = jax.random.split(key, 12)
    H, E, I = cfg["hidden"], cfg["emb"], cfg["intermediate"]

    def nrm(k, shape, std=0.02):
        return (std * jax.random.normal(k, shape)).astype(jnp.float32)

    z = lambda n: jnp.zeros((n,), jnp.float32)
    return {
        "word_emb": nrm(ks[0], (cfg["vocab"], E)),
        "pos_emb": nrm(ks[1], (cfg["max_pos"], E)),
        "type_emb": nrm(ks[2], (cfg["type_vocab"], E)),
        "emb_ln_g": jnp.ones((1, E), jnp.float32),
        "emb_ln_b": jnp.zeros((1, E), jnp.float32),
        "emb_map_w": nrm(ks[3], (E, H)), "emb_map_b": z(H),
        "wq": nrm(ks[4], (H, H)), "bq": z(H),
        "wk": nrm(ks[5], (H, H)), "bk": z(H),
        "wv": nrm(ks[6], (H, H)), "bv": z(H),
        "wo": nrm(ks[7], (H, H)), "bo": z(H),
        "attn_ln_g": jnp.ones((1, H), jnp.float32),
        "attn_ln_b": jnp.zeros((1, H), jnp.float32),
        "ffn_w": nrm(ks[8], (H, I)), "ffn_b": z(I),
        "ffn_out_w": nrm(ks[9], (I, H)), "ffn_out_b": z(H),
        "ffn_ln_g": jnp.ones((1, H), jnp.float32),
        "ffn_ln_b": jnp.zeros((1, H), jnp.float32),
        "pool_w": nrm(ks[10], (H, H)), "pool_b": z(H),
    }


def prepare_stacked_encoder(p_tlc, p_post):
    """Stack the two encoders' weights on a leading axis; merge QKV; cast
    matmul weights to bf16 (f32 accumulation in-kernel)."""
    H = p_tlc["wq"].shape[0]

    def stk(name, dtype=jnp.float32, reshape=None):
        a, b = p_tlc[name], p_post[name]
        if reshape is not None:
            a, b = a.reshape(reshape), b.reshape(reshape)
        return jnp.stack([a, b], axis=0).astype(dtype)

    wqkv = jnp.stack([
        jnp.concatenate([p_tlc["wq"], p_tlc["wk"], p_tlc["wv"]], axis=1),
        jnp.concatenate([p_post["wq"], p_post["wk"], p_post["wv"]], axis=1),
    ], axis=0).astype(jnp.bfloat16)
    bqkv = jnp.stack([
        jnp.concatenate([p_tlc["bq"], p_tlc["bk"], p_tlc["bv"]]).reshape(1, 3 * H),
        jnp.concatenate([p_post["bq"], p_post["bk"], p_post["bv"]]).reshape(1, 3 * H),
    ], axis=0)

    return [
        stk("emb_ln_g"), stk("emb_ln_b"),
        stk("emb_map_w", jnp.bfloat16), stk("emb_map_b", reshape=(1, -1)),
        wqkv, bqkv,
        stk("wo", jnp.bfloat16), stk("bo", reshape=(1, -1)),
        stk("attn_ln_g"), stk("attn_ln_b"),
        stk("ffn_w", jnp.bfloat16), stk("ffn_b", reshape=(1, -1)),
        stk("ffn_out_w", jnp.bfloat16), stk("ffn_out_b", reshape=(1, -1)),
        stk("ffn_ln_g"), stk("ffn_ln_b"),
        stk("pool_w", jnp.bfloat16), stk("pool_b", reshape=(1, -1)),
    ]


def embed(p, input_ids, token_type_ids, cfg):
    """Token/position/type embedding gather + sum (data-dependent -> JAX)."""
    B, S = input_ids.shape
    we = jnp.take(p["word_emb"], input_ids, axis=0)               # (B,S,E)
    pe = p["pos_emb"][:S][None, :, :]                             # (1,S,E)
    te = jnp.take(p["type_emb"], token_type_ids, axis=0)          # (B,S,E)
    return (we + pe + te).reshape(B * S, cfg["emb"])


# ----------------------------------------------------------------------------
# AlbertForEigenmetricRegression forward
# ----------------------------------------------------------------------------

def forward(params, cfg, meta_data, subreddit_ids,
            input_ids_tlc, attention_mask_tlc, token_type_ids_tlc,
            input_ids_post, attention_mask_post, token_type_ids_post,
            labels=None, is_feature_extractor=False):
    num_labels = cfg["num_labels"]

    # embeddings for both encoders, stacked on a leading "encoder" axis
    emb = jnp.stack([
        embed(params["tlc"], input_ids_tlc, token_type_ids_tlc, cfg),
        embed(params["post"], input_ids_post, token_type_ids_post, cfg)], axis=0)
    mask = jnp.stack([
        (1.0 - attention_mask_tlc.astype(jnp.float32)) * -10000.0,
        (1.0 - attention_mask_post.astype(jnp.float32)) * -10000.0], axis=0)

    # one fused pallas_call runs both encoders end-to-end (pooled outputs)
    pooled = encoders_pallas(params["stacked_enc"], emb, mask, cfg)   # (2,B,H)
    tlc_albert_repr, post_albert_repr = pooled[0], pooled[1]

    # nn.Dropout in eval mode is identity (inference semantics).
    emb_tbl = params["subreddit_embeddings"]
    sub_id_emb = jnp.take(emb_tbl, subreddit_ids, axis=0)
    sub_gen_emb = jnp.take(emb_tbl, jnp.full_like(subreddit_ids, GENERIC_ID), axis=0)

    if is_feature_extractor:
        sub = 0.5 * sub_id_emb + 0.5 * sub_gen_emb
        return jnp.concatenate(
            (tlc_albert_repr, post_albert_repr, meta_data, sub), axis=1)

    logits = head_pallas(tlc_albert_repr, post_albert_repr, meta_data,
                         sub_id_emb, sub_gen_emb,
                         params["classifier_w"], params["classifier_b"],
                         num_labels)

    # Mirrors the PyTorch `(logits,) + (repr[2:],) + (repr[2:],)` literally
    # (it slices batch rows of the pooled tensors, as the original code does).
    outputs = (logits, tlc_albert_repr[2:], post_albert_repr[2:])

    if labels is not None:
        if num_labels == 1:
            loss = jnp.mean((logits.reshape(-1) - labels.reshape(-1)) ** 2)
        else:
            lp = jax.nn.log_softmax(logits.reshape(-1, num_labels), axis=-1)
            loss = -jnp.mean(jnp.take_along_axis(
                lp, labels.reshape(-1, 1).astype(jnp.int32), axis=1))
        outputs = (loss,) + outputs
    return outputs


# ----------------------------------------------------------------------------
# main
# ----------------------------------------------------------------------------

if __name__ == "__main__":
    cfg = dict(
        vocab=50, emb=64, hidden=128, nheads=2, head_dim=64,
        intermediate=256, nlayers=2, max_pos=32, type_vocab=2,
        num_labels=3, meta_data_size=8,
        num_subreddit_embeddings=10, subreddit_embeddings_size=16,
    )
    B, S = 2, 8
    hidden_dimension = (cfg["hidden"] + cfg["hidden"]
                        + cfg["meta_data_size"] + cfg["subreddit_embeddings_size"])

    key = jax.random.PRNGKey(0)
    (k_tlc, k_post, k_cls, k_sub, k_ids1, k_ids2, k_meta, k_sid) = jax.random.split(key, 8)

    params = {
        "tlc": init_albert_params(k_tlc, cfg),
        "post": init_albert_params(k_post, cfg),
        # classifier: kaiming_normal_ on torch weight (out,in) == std sqrt(2/fan_in)
        "classifier_w": (math.sqrt(2.0 / hidden_dimension)
                         * jax.random.normal(k_cls, (hidden_dimension, cfg["num_labels"]))
                         ).astype(jnp.float32),
        "classifier_b": jnp.zeros((cfg["num_labels"],), jnp.float32),
        # subreddit embeddings: normal(mean=0, std=0.49)
        "subreddit_embeddings": (0.49 * jax.random.normal(
            k_sub, (cfg["num_subreddit_embeddings"], cfg["subreddit_embeddings_size"]))
            ).astype(jnp.float32),
    }
    # one-time weight stacking / QKV merge / bf16 cast (kept out of forward)
    params["stacked_enc"] = prepare_stacked_encoder(params["tlc"], params["post"])

    input_ids_tlc = jax.random.randint(k_ids1, (B, S), 0, cfg["vocab"], dtype=jnp.int32)
    input_ids_post = jax.random.randint(k_ids2, (B, S), 0, cfg["vocab"], dtype=jnp.int32)
    attention_mask = jnp.ones((B, S), jnp.int32)
    token_type_ids = jnp.zeros((B, S), jnp.int32)
    meta_data = jax.random.normal(k_meta, (B, cfg["meta_data_size"]), jnp.float32)
    subreddit_ids = jax.random.randint(k_sid, (B,), 0,
                                       cfg["num_subreddit_embeddings"], dtype=jnp.int32)

    outputs = forward(params, cfg, meta_data, subreddit_ids,
                      input_ids_tlc, attention_mask, token_type_ids,
                      input_ids_post, attention_mask, token_type_ids,
                      labels=None)

    logits = outputs[0]
    jax.block_until_ready(logits)
    assert logits.shape == (B, cfg["num_labels"])
    print("KERNEL_OK")
</pallas_src>

<mosaic_0001>
module attributes {stable_mosaic.version = 11 : i64} {
  func.func @_encoder_kernel(%arg0: i32, %arg1: memref<1x16x64xf32, #tpu.memory_space<vmem>>, %arg2: memref<1x2x8xf32, #tpu.memory_space<vmem>>, %arg3: memref<1x1x64xf32, #tpu.memory_space<vmem>>, %arg4: memref<1x1x64xf32, #tpu.memory_space<vmem>>, %arg5: memref<1x64x128xbf16, #tpu.memory_space<vmem>>, %arg6: memref<1x1x128xf32, #tpu.memory_space<vmem>>, %arg7: memref<1x128x384xbf16, #tpu.memory_space<vmem>>, %arg8: memref<1x1x384xf32, #tpu.memory_space<vmem>>, %arg9: memref<1x128x128xbf16, #tpu.memory_space<vmem>>, %arg10: memref<1x1x128xf32, #tpu.memory_space<vmem>>, %arg11: memref<1x1x128xf32, #tpu.memory_space<vmem>>, %arg12: memref<1x1x128xf32, #tpu.memory_space<vmem>>, %arg13: memref<1x128x256xbf16, #tpu.memory_space<vmem>>, %arg14: memref<1x1x256xf32, #tpu.memory_space<vmem>>, %arg15: memref<1x256x128xbf16, #tpu.memory_space<vmem>>, %arg16: memref<1x1x128xf32, #tpu.memory_space<vmem>>, %arg17: memref<1x1x128xf32, #tpu.memory_space<vmem>>, %arg18: memref<1x1x128xf32, #tpu.memory_space<vmem>>, %arg19: memref<1x128x128xbf16, #tpu.memory_space<vmem>>, %arg20: memref<1x1x128xf32, #tpu.memory_space<vmem>>, %arg21: memref<1x2x128xf32, #tpu.memory_space<vmem>>) attributes {dimension_semantics = [#tpu.dimension_semantics<parallel>], iteration_bounds = array<i64: 2>, scalar_prefetch = 0 : i64, scratch_operands = 0 : i64, tpu.core_type = #tpu.core_type<tc>, window_params = [{transform_indices = @transform_0, window_bounds = array<i64: 1, 16, 64>}, {transform_indices = @transform_1, window_bounds = array<i64: 1, 2, 8>}, {transform_indices = @transform_2, window_bounds = array<i64: 1, 1, 64>}, {transform_indices = @transform_3, window_bounds = array<i64: 1, 1, 64>}, {transform_indices = @transform_4, window_bounds = array<i64: 1, 64, 128>}, {transform_indices = @transform_5, window_bounds = array<i64: 1, 1, 128>}, {transform_indices = @transform_6, window_bounds = array<i64: 1, 128, 384>}, {transform_indices = @transform_7, window_bounds = array<i64: 1, 1, 384>}, {transform_indices = @transform_8, window_bounds = array<i64: 1, 128, 128>}, {transform_indices = @transform_9, window_bounds = array<i64: 1, 1, 128>}, {transform_indices = @transform_10, window_bounds = array<i64: 1, 1, 128>}, {transform_indices = @transform_11, window_bounds = array<i64: 1, 1, 128>}, {transform_indices = @transform_12, window_bounds = array<i64: 1, 128, 256>}, {transform_indices = @transform_13, window_bounds = array<i64: 1, 1, 256>}, {transform_indices = @transform_14, window_bounds = array<i64: 1, 256, 128>}, {transform_indices = @transform_15, window_bounds = array<i64: 1, 1, 128>}, {transform_indices = @transform_16, window_bounds = array<i64: 1, 1, 128>}, {transform_indices = @transform_17, window_bounds = array<i64: 1, 1, 128>}, {transform_indices = @transform_18, window_bounds = array<i64: 1, 128, 128>}, {transform_indices = @transform_19, window_bounds = array<i64: 1, 1, 128>}, {transform_indices = @transform_20, window_bounds = array<i64: 1, 2, 128>}]} {
    %c0 = arith.constant 0 : index
    %c0_0 = arith.constant 0 : index
    %c0_1 = arith.constant 0 : index
    %0 = vector.load %arg1[%c0, %c0_0, %c0_1] : memref<1x16x64xf32, #tpu.memory_space<vmem>>, vector<1x16x64xf32>
    %1 = vector.shape_cast %0 : vector<1x16x64xf32> to vector<16x64xf32>
    %cst = arith.constant dense<0.000000e+00> : vector<16xf32>
    %2 = vector.multi_reduction <add>, %1, %cst [1] : vector<16x64xf32> to vector<16xf32>
    %3 = vector.shape_cast %2 : vector<16xf32> to vector<16x1xf32>
    %cst_2 = arith.constant 6.400000e+01 : f32
    %4 = vector.broadcast %cst_2 : f32 to vector<16x1xf32>
    %5 = arith.divf %3, %4 : vector<16x1xf32>
    %6 = vector.broadcast %5 : vector<16x1xf32> to vector<16x64xf32>
    %7 = arith.subf %1, %6 : vector<16x64xf32>
    %8 = arith.mulf %7, %7 : vector<16x64xf32>
    %cst_3 = arith.constant dense<0.000000e+00> : vector<16xf32>
    %9 = vector.multi_reduction <add>, %8, %cst_3 [1] : vector<16x64xf32> to vector<16xf32>
    %10 = vector.shape_cast %9 : vector<16xf32> to vector<16x1xf32>
    %cst_4 = arith.constant 6.400000e+01 : f32
    %11 = vector.broadcast %cst_4 : f32 to vector<16x1xf32>
    %12 = arith.divf %10, %11 : vector<16x1xf32>
    %cst_5 = arith.constant 9.99999996E-13 : f32
    %13 = vector.broadcast %cst_5 : f32 to vector<16x1xf32>
    %14 = arith.addf %12, %13 : vector<16x1xf32>
    %15 = math.rsqrt %14 : vector<16x1xf32>
    %16 = vector.broadcast %15 : vector<16x1xf32> to vector<16x64xf32>
    %17 = arith.mulf %7, %16 : vector<16x64xf32>
    %c0_6 = arith.constant 0 : index
    %c0_7 = arith.constant 0 : index
    %c0_8 = arith.constant 0 : index
    %18 = vector.load %arg3[%c0_6, %c0_7, %c0_8] : memref<1x1x64xf32, #tpu.memory_space<vmem>>, vector<1x1x64xf32>
    %19 = vector.shape_cast %18 : vector<1x1x64xf32> to vector<1x64xf32>
    %20 = vector.broadcast %19 : vector<1x64xf32> to vector<16x64xf32>
    %21 = arith.mulf %17, %20 : vector<16x64xf32>
    %c0_9 = arith.constant 0 : index
    %c0_10 = arith.constant 0 : index
    %c0_11 = arith.constant 0 : index
    %22 = vector.load %arg4[%c0_9, %c0_10, %c0_11] : memref<1x1x64xf32, #tpu.memory_space<vmem>>, vector<1x1x64xf32>
    %23 = vector.shape_cast %22 : vector<1x1x64xf32> to vector<1x64xf32>
    %24 = vector.broadcast %23 : vector<1x64xf32> to vector<16x64xf32>
    %25 = arith.addf %21, %24 : vector<16x64xf32>
    %26 = arith.truncf %25 : vector<16x64xf32> to vector<16x64xbf16>
    %c0_12 = arith.constant 0 : index
    %c0_13 = arith.constant 0 : index
    %c0_14 = arith.constant 0 : index
    %27 = vector.load %arg5[%c0_12, %c0_13, %c0_14] : memref<1x64x128xbf16, #tpu.memory_space<vmem>>, vector<1x64x128xbf16>
    %28 = vector.shape_cast %27 : vector<1x64x128xbf16> to vector<64x128xbf16>
    %cst_15 = arith.constant dense<0.000000e+00> : vector<16x128xf32>
    %29 = tpu.matmul %26, %28, %cst_15 {dimension_numbers = #tpu.dot_dimension_numbers<[1], [0], [0], [1], [0, 0, 1, 1], [], []>} : vector<16x64xbf16>, vector<64x128xbf16>, vector<16x128xf32> -> vector<16x128xf32>
    %c0_16 = arith.constant 0 : index
    %c0_17 = arith.constant 0 : index
    %c0_18 = arith.constant 0 : index
    %30 = vector.load %arg6[%c0_16, %c0_17, %c0_18] : memref<1x1x128xf32, #tpu.memory_space<vmem>>, vector<1x1x128xf32>
    %31 = vector.shape_cast %30 : vector<1x1x128xf32> to vector<1x128xf32>
    %32 = vector.broadcast %31 : vector<1x128xf32> to vector<16x128xf32>
    %33 = arith.addf %29, %32 : vector<16x128xf32>
    %c0_19 = arith.constant 0 : index
    %c0_20 = arith.constant 0 : index
    %c0_21 = arith.constant 0 : index
    %34 = vector.load %arg2[%c0_19, %c0_20, %c0_21] : memref<1x2x8xf32, #tpu.memory_space<vmem>>, vector<1x2x8xf32>
    %35 = vector.shape_cast %34 : vector<1x2x8xf32> to vector<2x8xf32>
    %36 = arith.truncf %33 : vector<16x128xf32> to vector<16x128xbf16>
    %c0_22 = arith.constant 0 : index
    %c0_23 = arith.constant 0 : index
    %c0_24 = arith.constant 0 : index
    %37 = vector.load %arg7[%c0_22, %c0_23, %c0_24] : memref<1x128x384xbf16, #tpu.memory_space<vmem>>, vector<1x128x384xbf16>
    %38 = vector.shape_cast %37 : vector<1x128x384xbf16> to vector<128x384xbf16>
    %cst_25 = arith.constant dense<0.000000e+00> : vector<16x384xf32>
    %39 = tpu.matmul %36, %38, %cst_25 {dimension_numbers = #tpu.dot_dimension_numbers<[1], [0], [0], [1], [0, 0, 1, 1], [], []>} : vector<16x128xbf16>, vector<128x384xbf16>, vector<16x384xf32> -> vector<16x384xf32>
    %c0_26 = arith.constant 0 : index
    %c0_27 = arith.constant 0 : index
    %c0_28 = arith.constant 0 : index
    %40 = vector.load %arg8[%c0_26, %c0_27, %c0_28] : memref<1x1x384xf32, #tpu.memory_space<vmem>>, vector<1x1x384xf32>
    %41 = vector.shape_cast %40 : vector<1x1x384xf32> to vector<1x384xf32>
    %42 = vector.broadcast %41 : vector<1x384xf32> to vector<16x384xf32>
    %43 = arith.addf %39, %42 : vector<16x384xf32>
    %44 = vector.extract_strided_slice %35 {offsets = [0, 0], sizes = [1, 8], strides = [1, 1]} : vector<2x8xf32> to vector<1x8xf32>
    %45 = vector.extract_strided_slice %43 {offsets = [0, 0], sizes = [8, 64], strides = [1, 1]} : vector<16x384xf32> to vector<8x64xf32>
    %46 = vector.extract_strided_slice %43 {offsets = [0, 128], sizes = [8, 64], strides = [1, 1]} : vector<16x384xf32> to vector<8x64xf32>
    %47 = vector.extract_strided_slice %43 {offsets = [0, 256], sizes = [8, 64], strides = [1, 1]} : vector<16x384xf32> to vector<8x64xf32>
    %48 = arith.truncf %45 : vector<8x64xf32> to vector<8x64xbf16>
    %49 = arith.truncf %46 : vector<8x64xf32> to vector<8x64xbf16>
    %cst_29 = arith.constant dense<0.000000e+00> : vector<8x8xf32>
    %50 = tpu.matmul %48, %49, %cst_29 {dimension_numbers = #tpu.dot_dimension_numbers<[1], [1], [0], [0], [0, 0, 1, 0], [], []>} : vector<8x64xbf16>, vector<8x64xbf16>, vector<8x8xf32> -> vector<8x8xf32>
    %cst_30 = arith.constant 1.250000e-01 : f32
    %51 = vector.broadcast %cst_30 : f32 to vector<8x8xf32>
    %52 = arith.mulf %50, %51 : vector<8x8xf32>
    %53 = vector.broadcast %44 : vector<1x8xf32> to vector<8x8xf32>
    %54 = arith.addf %52, %53 : vector<8x8xf32>
    %cst_31 = arith.constant dense<0xFF800000> : vector<8xf32>
    %55 = vector.multi_reduction <maximumf>, %54, %cst_31 [1] : vector<8x8xf32> to vector<8xf32>
    %56 = vector.shape_cast %55 : vector<8xf32> to vector<8x1xf32>
    %57 = vector.broadcast %56 : vector<8x1xf32> to vector<8x8xf32>
    %58 = arith.subf %54, %57 : vector<8x8xf32>
    %59 = math.exp %58 : vector<8x8xf32>
    %cst_32 = arith.constant dense<0.000000e+00> : vector<8xf32>
    %60 = vector.multi_reduction <add>, %59, %cst_32 [1] : vector<8x8xf32> to vector<8xf32>
    %61 = vector.shape_cast %60 : vector<8xf32> to vector<8x1xf32>
    %62 = tpu.reciprocal %61 {approx = true} : vector<8x1xf32> -> vector<8x1xf32>
    %63 = vector.broadcast %62 : vector<8x1xf32> to vector<8x8xf32>
    %64 = arith.mulf %59, %63 : vector<8x8xf32>
    %65 = arith.truncf %64 : vector<8x8xf32> to vector<8x8xbf16>
    %66 = arith.truncf %47 : vector<8x64xf32> to vector<8x64xbf16>
    %cst_33 = arith.constant dense<0.000000e+00> : vector<8x64xf32>
    %67 = tpu.matmul %65, %66, %cst_33 {dimension_numbers = #tpu.dot_dimension_numbers<[1], [0], [0], [1], [0, 0, 1, 1], [], []>} : vector<8x8xbf16>, vector<8x64xbf16>, vector<8x64xf32> -> vector<8x64xf32>
    %68 = arith.truncf %67 : vector<8x64xf32> to vector<8x64xbf16>
    %c0_34 = arith.constant 0 : index
    %c0_35 = arith.constant 0 : index
    %c0_36 = arith.constant 0 : index
    %69 = vector.load %arg9[%c0_34, %c0_35, %c0_36] : memref<1x128x128xbf16, #tpu.memory_space<vmem>>, vector<1x64x128xbf16>
    %70 = vector.shape_cast %69 : vector<1x64x128xbf16> to vector<64x128xbf16>
    %cst_37 = arith.constant dense<0.000000e+00> : vector<8x128xf32>
    %71 = tpu.matmul %68, %70, %cst_37 {dimension_numbers = #tpu.dot_dimension_numbers<[1], [0], [0], [1], [0, 0, 1, 1], [], []>} : vector<8x64xbf16>, vector<64x128xbf16>, vector<8x128xf32> -> vector<8x128xf32>
    %72 = vector.extract_strided_slice %43 {offsets = [0, 64], sizes = [8, 64], strides = [1, 1]} : vector<16x384xf32> to vector<8x64xf32>
    %73 = vector.extract_strided_slice %43 {offsets = [0, 192], sizes = [8, 64], strides = [1, 1]} : vector<16x384xf32> to vector<8x64xf32>
    %74 = vector.extract_strided_slice %43 {offsets = [0, 320], sizes = [8, 64], strides = [1, 1]} : vector<16x384xf32> to vector<8x64xf32>
    %75 = arith.truncf %72 : vector<8x64xf32> to vector<8x64xbf16>
    %76 = arith.truncf %73 : vector<8x64xf32> to vector<8x64xbf16>
    %cst_38 = arith.constant dense<0.000000e+00> : vector<8x8xf32>
    %77 = tpu.matmul %75, %76, %cst_38 {dimension_numbers = #tpu.dot_dimension_numbers<[1], [1], [0], [0], [0, 0, 1, 0], [], []>} : vector<8x64xbf16>, vector<8x64xbf16>, vector<8x8xf32> -> vector<8x8xf32>
    %cst_39 = arith.constant 1.250000e-01 : f32
    %78 = vector.broadcast %cst_39 : f32 to vector<8x8xf32>
    %79 = arith.mulf %77, %78 : vector<8x8xf32>
    %80 = vector.broadcast %44 : vector<1x8xf32> to vector<8x8xf32>
    %81 = arith.addf %79, %80 : vector<8x8xf32>
    %cst_40 = arith.constant dense<0xFF800000> : vector<8xf32>
    %82 = vector.multi_reduction <maximumf>, %81, %cst_40 [1] : vector<8x8xf32> to vector<8xf32>
    %83 = vector.shape_cast %82 : vector<8xf32> to vector<8x1xf32>
    %84 = vector.broadcast %83 : vector<8x1xf32> to vector<8x8xf32>
    %85 = arith.subf %81, %84 : vector<8x8xf32>
    %86 = math.exp %85 : vector<8x8xf32>
    %cst_41 = arith.constant dense<0.000000e+00> : vector<8xf32>
    %87 = vector.multi_reduction <add>, %86, %cst_41 [1] : vector<8x8xf32> to vector<8xf32>
    %88 = vector.shape_cast %87 : vector<8xf32> to vector<8x1xf32>
    %89 = tpu.reciprocal %88 {approx = true} : vector<8x1xf32> -> vector<8x1xf32>
    %90 = vector.broadcast %89 : vector<8x1xf32> to vector<8x8xf32>
    %91 = arith.mulf %86, %90 : vector<8x8xf32>
    %92 = arith.truncf %91 : vector<8x8xf32> to vector<8x8xbf16>
    %93 = arith.truncf %74 : vector<8x64xf32> to vector<8x64xbf16>
    %cst_42 = arith.constant dense<0.000000e+00> : vector<8x64xf32>
    %94 = tpu.matmul %92, %93, %cst_42 {dimension_numbers = #tpu.dot_dimension_numbers<[1], [0], [0], [1], [0, 0, 1, 1], [], []>} : vector<8x8xbf16>, vector<8x64xbf16>, vector<8x64xf32> -> vector<8x64xf32>
    %95 = arith.truncf %94 : vector<8x64xf32> to vector<8x64xbf16>
    %c0_43 = arith.constant 0 : index
    %c64 = arith.constant 64 : index
    %c0_44 = arith.constant 0 : index
    %96 = vector.load %arg9[%c0_43, %c64, %c0_44] : memref<1x128x128xbf16, #tpu.memory_space<vmem>>, vector<1x64x128xbf16>
    %97 = vector.shape_cast %96 : vector<1x64x128xbf16> to vector<64x128xbf16>
    %cst_45 = arith.constant dense<0.000000e+00> : vector<8x128xf32>
    %98 = tpu.matmul %95, %97, %cst_45 {dimension_numbers = #tpu.dot_dimension_numbers<[1], [0], [0], [1], [0, 0, 1, 1], [], []>} : vector<8x64xbf16>, vector<64x128xbf16>, vector<8x128xf32> -> vector<8x128xf32>
    %99 = arith.addf %71, %98 : vector<8x128xf32>
    %100 = vector.extract_strided_slice %35 {offsets = [1, 0], sizes = [1, 8], strides = [1, 1]} : vector<2x8xf32> to vector<1x8xf32>
    %101 = vector.extract_strided_slice %43 {offsets = [8, 0], sizes = [8, 64], strides = [1, 1]} : vector<16x384xf32> to vector<8x64xf32>
    %102 = vector.extract_strided_slice %43 {offsets = [8, 128], sizes = [8, 64], strides = [1, 1]} : vector<16x384xf32> to vector<8x64xf32>
    %103 = vector.extract_strided_slice %43 {offsets = [8, 256], sizes = [8, 64], strides = [1, 1]} : vector<16x384xf32> to vector<8x64xf32>
    %104 = arith.truncf %101 : vector<8x64xf32> to vector<8x64xbf16>
    %105 = arith.truncf %102 : vector<8x64xf32> to vector<8x64xbf16>
    %cst_46 = arith.constant dense<0.000000e+00> : vector<8x8xf32>
    %106 = tpu.matmul %104, %105, %cst_46 {dimension_numbers = #tpu.dot_dimension_numbers<[1], [1], [0], [0], [0, 0, 1, 0], [], []>} : vector<8x64xbf16>, vector<8x64xbf16>, vector<8x8xf32> -> vector<8x8xf32>
    %cst_47 = arith.constant 1.250000e-01 : f32
    %107 = vector.broadcast %cst_47 : f32 to vector<8x8xf32>
    %108 = arith.mulf %106, %107 : vector<8x8xf32>
    %109 = vector.broadcast %100 : vector<1x8xf32> to vector<8x8xf32>
    %110 = arith.addf %108, %109 : vector<8x8xf32>
    %cst_48 = arith.constant dense<0xFF800000> : vector<8xf32>
    %111 = vector.multi_reduction <maximumf>, %110, %cst_48 [1] : vector<8x8xf32> to vector<8xf32>
    %112 = vector.shape_cast %111 : vector<8xf32> to vector<8x1xf32>
    %113 = vector.broadcast %112 : vector<8x1xf32> to vector<8x8xf32>
    %114 = arith.subf %110, %113 : vector<8x8xf32>
    %115 = math.exp %114 : vector<8x8xf32>
    %cst_49 = arith.constant dense<0.000000e+00> : vector<8xf32>
    %116 = vector.multi_reduction <add>, %115, %cst_49 [1] : vector<8x8xf32> to vector<8xf32>
    %117 = vector.shape_cast %116 : vector<8xf32> to vector<8x1xf32>
    %118 = tpu.reciprocal %117 {approx = true} : vector<8x1xf32> -> vector<8x1xf32>
    %119 = vector.broadcast %118 : vector<8x1xf32> to vector<8x8xf32>
    %120 = arith.mulf %115, %119 : vector<8x8xf32>
    %121 = arith.truncf %120 : vector<8x8xf32> to vector<8x8xbf16>
    %122 = arith.truncf %103 : vector<8x64xf32> to vector<8x64xbf16>
    %cst_50 = arith.constant dense<0.000000e+00> : vector<8x64xf32>
    %123 = tpu.matmul %121, %122, %cst_50 {dimension_numbers = #tpu.dot_dimension_numbers<[1], [0], [0], [1], [0, 0, 1, 1], [], []>} : vector<8x8xbf16>, vector<8x64xbf16>, vector<8x64xf32> -> vector<8x64xf32>
    %124 = arith.truncf %123 : vector<8x64xf32> to vector<8x64xbf16>
    %c0_51 = arith.constant 0 : index
    %c0_52 = arith.constant 0 : index
    %c0_53 = arith.constant 0 : index
    %125 = vector.load %arg9[%c0_51, %c0_52, %c0_53] : memref<1x128x128xbf16, #tpu.memory_space<vmem>>, vector<1x64x128xbf16>
    %126 = vector.shape_cast %125 : vector<1x64x128xbf16> to vector<64x128xbf16>
    %cst_54 = arith.constant dense<0.000000e+00> : vector<8x128xf32>
    %127 = tpu.matmul %124, %126, %cst_54 {dimension_numbers = #tpu.dot_dimension_numbers<[1], [0], [0], [1], [0, 0, 1, 1], [], []>} : vector<8x64xbf16>, vector<64x128xbf16>, vector<8x128xf32> -> vector<8x128xf32>
    %128 = vector.extract_strided_slice %43 {offsets = [8, 64], sizes = [8, 64], strides = [1, 1]} : vector<16x384xf32> to vector<8x64xf32>
    %129 = vector.extract_strided_slice %43 {offsets = [8, 192], sizes = [8, 64], strides = [1, 1]} : vector<16x384xf32> to vector<8x64xf32>
    %130 = vector.extract_strided_slice %43 {offsets = [8, 320], sizes = [8, 64], strides = [1, 1]} : vector<16x384xf32> to vector<8x64xf32>
    %131 = arith.truncf %128 : vector<8x64xf32> to vector<8x64xbf16>
    %132 = arith.truncf %129 : vector<8x64xf32> to vector<8x64xbf16>
    %cst_55 = arith.constant dense<0.000000e+00> : vector<8x8xf32>
    %133 = tpu.matmul %131, %132, %cst_55 {dimension_numbers = #tpu.dot_dimension_numbers<[1], [1], [0], [0], [0, 0, 1, 0], [], []>} : vector<8x64xbf16>, vector<8x64xbf16>, vector<8x8xf32> -> vector<8x8xf32>
    %cst_56 = arith.constant 1.250000e-01 : f32
    %134 = vector.broadcast %cst_56 : f32 to vector<8x8xf32>
    %135 = arith.mulf %133, %134 : vector<8x8xf32>
    %136 = vector.broadcast %100 : vector<1x8xf32> to vector<8x8xf32>
    %137 = arith.addf %135, %136 : vector<8x8xf32>
    %cst_57 = arith.constant dense<0xFF800000> : vector<8xf32>
    %138 = vector.multi_reduction <maximumf>, %137, %cst_57 [1] : vector<8x8xf32> to vector<8xf32>
    %139 = vector.shape_cast %138 : vector<8xf32> to vector<8x1xf32>
    %140 = vector.broadcast %139 : vector<8x1xf32> to vector<8x8xf32>
    %141 = arith.subf %137, %140 : vector<8x8xf32>
    %142 = math.exp %141 : vector<8x8xf32>
    %cst_58 = arith.constant dense<0.000000e+00> : vector<8xf32>
    %143 = vector.multi_reduction <add>, %142, %cst_58 [1] : vector<8x8xf32> to vector<8xf32>
    %144 = vector.shape_cast %143 : vector<8xf32> to vector<8x1xf32>
    %145 = tpu.reciprocal %144 {approx = true} : vector<8x1xf32> -> vector<8x1xf32>
    %146 = vector.broadcast %145 : vector<8x1xf32> to vector<8x8xf32>
    %147 = arith.mulf %142, %146 : vector<8x8xf32>
    %148 = arith.truncf %147 : vector<8x8xf32> to vector<8x8xbf16>
    %149 = arith.truncf %130 : vector<8x64xf32> to vector<8x64xbf16>
    %cst_59 = arith.constant dense<0.000000e+00> : vector<8x64xf32>
    %150 = tpu.matmul %148, %149, %cst_59 {dimension_numbers = #tpu.dot_dimension_numbers<[1], [0], [0], [1], [0, 0, 1, 1], [], []>} : vector<8x8xbf16>, vector<8x64xbf16>, vector<8x64xf32> -> vector<8x64xf32>
    %151 = arith.truncf %150 : vector<8x64xf32> to vector<8x64xbf16>
    %c0_60 = arith.constant 0 : index
    %c64_61 = arith.constant 64 : index
    %c0_62 = arith.constant 0 : index
    %152 = vector.load %arg9[%c0_60, %c64_61, %c0_62] : memref<1x128x128xbf16, #tpu.memory_space<vmem>>, vector<1x64x128xbf16>
    %153 = vector.shape_cast %152 : vector<1x64x128xbf16> to vector<64x128xbf16>
    %cst_63 = arith.constant dense<0.000000e+00> : vector<8x128xf32>
    %154 = tpu.matmul %151, %153, %cst_63 {dimension_numbers = #tpu.dot_dimension_numbers<[1], [0], [0], [1], [0, 0, 1, 1], [], []>} : vector<8x64xbf16>, vector<64x128xbf16>, vector<8x128xf32> -> vector<8x128xf32>
    %155 = arith.addf %127, %154 : vector<8x128xf32>
    %156 = tpu.concatenate %99, %155 in 0 : vector<8x128xf32>, vector<8x128xf32> -> vector<16x128xf32>
    %c0_64 = arith.constant 0 : index
    %c0_65 = arith.constant 0 : index
    %c0_66 = arith.constant 0 : index
    %157 = vector.load %arg10[%c0_64, %c0_65, %c0_66] : memref<1x1x128xf32, #tpu.memory_space<vmem>>, vector<1x1x128xf32>
    %158 = vector.shape_cast %157 : vector<1x1x128xf32> to vector<1x128xf32>
    %159 = vector.broadcast %158 : vector<1x128xf32> to vector<16x128xf32>
    %160 = arith.addf %156, %159 : vector<16x128xf32>
    %161 = arith.addf %160, %33 : vector<16x128xf32>
    %cst_67 = arith.constant dense<0.000000e+00> : vector<16xf32>
    %162 = vector.multi_reduction <add>, %161, %cst_67 [1] : vector<16x128xf32> to vector<16xf32>
    %163 = vector.shape_cast %162 : vector<16xf32> to vector<16x1xf32>
    %cst_68 = arith.constant 1.280000e+02 : f32
    %164 = vector.broadcast %cst_68 : f32 to vector<16x1xf32>
    %165 = arith.divf %163, %164 : vector<16x1xf32>
    %166 = vector.broadcast %165 : vector<16x1xf32> to vector<16x128xf32>
    %167 = arith.subf %161, %166 : vector<16x128xf32>
    %168 = arith.mulf %167, %167 : vector<16x128xf32>
    %cst_69 = arith.constant dense<0.000000e+00> : vector<16xf32>
    %169 = vector.multi_reduction <add>, %168, %cst_69 [1] : vector<16x128xf32> to vector<16xf32>
    %170 = vector.shape_cast %169 : vector<16xf32> to vector<16x1xf32>
    %cst_70 = arith.constant 1.280000e+02 : f32
    %171 = vector.broadcast %cst_70 : f32 to vector<16x1xf32>
    %172 = arith.divf %170, %171 : vector<16x1xf32>
    %cst_71 = arith.constant 9.99999996E-13 : f32
    %173 = vector.broadcast %cst_71 : f32 to vector<16x1xf32>
    %174 = arith.addf %172, %173 : vector<16x1xf32>
    %175 = math.rsqrt %174 : vector<16x1xf32>
    %176 = vector.broadcast %175 : vector<16x1xf32> to vector<16x128xf32>
    %177 = arith.mulf %167, %176 : vector<16x128xf32>
    %c0_72 = arith.constant 0 : index
    %c0_73 = arith.constant 0 : index
    %c0_74 = arith.constant 0 : index
    %178 = vector.load %arg11[%c0_72, %c0_73, %c0_74] : memref<1x1x128xf32, #tpu.memory_space<vmem>>, vector<1x1x128xf32>
    %179 = vector.shape_cast %178 : vector<1x1x128xf32> to vector<1x128xf32>
    %180 = vector.broadcast %179 : vector<1x128xf32> to vector<16x128xf32>
    %181 = arith.mulf %177, %180 : vector<16x128xf32>
    %c0_75 = arith.constant 0 : index
    %c0_76 = arith.constant 0 : index
    %c0_77 = arith.constant 0 : index
    %182 = vector.load %arg12[%c0_75, %c0_76, %c0_77] : memref<1x1x128xf32, #tpu.memory_space<vmem>>, vector<1x1x128xf32>
    %183 = vector.shape_cast %182 : vector<1x1x128xf32> to vector<1x128xf32>
    %184 = vector.broadcast %183 : vector<1x128xf32> to vector<16x128xf32>
    %185 = arith.addf %181, %184 : vector<16x128xf32>
    %186 = arith.truncf %185 : vector<16x128xf32> to vector<16x128xbf16>
    %c0_78 = arith.constant 0 : index
    %c0_79 = arith.constant 0 : index
    %c0_80 = arith.constant 0 : index
    %187 = vector.load %arg13[%c0_78, %c0_79, %c0_80] : memref<1x128x256xbf16, #tpu.memory_space<vmem>>, vector<1x128x256xbf16>
    %188 = vector.shape_cast %187 : vector<1x128x256xbf16> to vector<128x256xbf16>
    %cst_81 = arith.constant dense<0.000000e+00> : vector<16x256xf32>
    %189 = tpu.matmul %186, %188, %cst_81 {dimension_numbers = #tpu.dot_dimension_numbers<[1], [0], [0], [1], [0, 0, 1, 1], [], []>} : vector<16x128xbf16>, vector<128x256xbf16>, vector<16x256xf32> -> vector<16x256xf32>
    %c0_82 = arith.constant 0 : index
    %c0_83 = arith.constant 0 : index
    %c0_84 = arith.constant 0 : index
    %190 = vector.load %arg14[%c0_82, %c0_83, %c0_84] : memref<1x1x256xf32, #tpu.memory_space<vmem>>, vector<1x1x256xf32>
    %191 = vector.shape_cast %190 : vector<1x1x256xf32> to vector<1x256xf32>
    %192 = vector.broadcast %191 : vector<1x256xf32> to vector<16x256xf32>
    %193 = arith.addf %189, %192 : vector<16x256xf32>
    %cst_85 = arith.constant 5.000000e-01 : f32
    %194 = vector.broadcast %cst_85 : f32 to vector<16x256xf32>
    %195 = arith.mulf %194, %193 : vector<16x256xf32>
    %cst_86 = arith.constant 4.471500e-02 : f32
    %196 = vector.broadcast %cst_86 : f32 to vector<16x256xf32>
    %197 = arith.mulf %196, %193 : vector<16x256xf32>
    %198 = arith.mulf %197, %193 : vector<16x256xf32>
    %199 = arith.mulf %198, %193 : vector<16x256xf32>
    %200 = arith.addf %193, %199 : vector<16x256xf32>
    %cst_87 = arith.constant 0.797884583 : f32
    %201 = vector.broadcast %cst_87 : f32 to vector<16x256xf32>
    %202 = arith.mulf %201, %200 : vector<16x256xf32>
    %203 = math.tanh %202 : vector<16x256xf32>
    %cst_88 = arith.constant 1.000000e+00 : f32
    %204 = vector.broadcast %cst_88 : f32 to vector<16x256xf32>
    %205 = arith.addf %204, %203 : vector<16x256xf32>
    %206 = arith.mulf %195, %205 : vector<16x256xf32>
    %207 = arith.truncf %206 : vector<16x256xf32> to vector<16x256xbf16>
    %c0_89 = arith.constant 0 : index
    %c0_90 = arith.constant 0 : index
    %c0_91 = arith.constant 0 : index
    %208 = vector.load %arg15[%c0_89, %c0_90, %c0_91] : memref<1x256x128xbf16, #tpu.memory_space<vmem>>, vector<1x256x128xbf16>
    %209 = vector.shape_cast %208 : vector<1x256x128xbf16> to vector<256x128xbf16>
    %cst_92 = arith.constant dense<0.000000e+00> : vector<16x128xf32>
    %210 = tpu.matmul %207, %209, %cst_92 {dimension_numbers = #tpu.dot_dimension_numbers<[1], [0], [0], [1], [0, 0, 1, 1], [], []>} : vector<16x256xbf16>, vector<256x128xbf16>, vector<16x128xf32> -> vector<16x128xf32>
    %c0_93 = arith.constant 0 : index
    %c0_94 = arith.constant 0 : index
    %c0_95 = arith.constant 0 : index
    %211 = vector.load %arg16[%c0_93, %c0_94, %c0_95] : memref<1x1x128xf32, #tpu.memory_space<vmem>>, vector<1x1x128xf32>
    %212 = vector.shape_cast %211 : vector<1x1x128xf32> to vector<1x128xf32>
    %213 = vector.broadcast %212 : vector<1x128xf32> to vector<16x128xf32>
    %214 = arith.addf %210, %213 : vector<16x128xf32>
    %215 = arith.addf %214, %185 : vector<16x128xf32>
    %cst_96 = arith.constant dense<0.000000e+00> : vector<16xf32>
    %216 = vector.multi_reduction <add>, %215, %cst_96 [1] : vector<16x128xf32> to vector<16xf32>
    %217 = vector.shape_cast %216 : vector<16xf32> to vector<16x1xf32>
    %cst_97 = arith.constant 1.280000e+02 : f32
    %218 = vector.broadcast %cst_97 : f32 to vector<16x1xf32>
    %219 = arith.divf %217, %218 : vector<16x1xf32>
    %220 = vector.broadcast %219 : vector<16x1xf32> to vector<16x128xf32>
    %221 = arith.subf %215, %220 : vector<16x128xf32>
    %222 = arith.mulf %221, %221 : vector<16x128xf32>
    %cst_98 = arith.constant dense<0.000000e+00> : vector<16xf32>
    %223 = vector.multi_reduction <add>, %222, %cst_98 [1] : vector<16x128xf32> to vector<16xf32>
    %224 = vector.shape_cast %223 : vector<16xf32> to vector<16x1xf32>
    %cst_99 = arith.constant 1.280000e+02 : f32
    %225 = vector.broadcast %cst_99 : f32 to vector<16x1xf32>
    %226 = arith.divf %224, %225 : vector<16x1xf32>
    %cst_100 = arith.constant 9.99999996E-13 : f32
    %227 = vector.broadcast %cst_100 : f32 to vector<16x1xf32>
    %228 = arith.addf %226, %227 : vector<16x1xf32>
    %229 = math.rsqrt %228 : vector<16x1xf32>
    %230 = vector.broadcast %229 : vector<16x1xf32> to vector<16x128xf32>
    %231 = arith.mulf %221, %230 : vector<16x128xf32>
    %c0_101 = arith.constant 0 : index
    %c0_102 = arith.constant 0 : index
    %c0_103 = arith.constant 0 : index
    %232 = vector.load %arg17[%c0_101, %c0_102, %c0_103] : memref<1x1x128xf32, #tpu.memory_space<vmem>>, vector<1x1x128xf32>
    %233 = vector.shape_cast %232 : vector<1x1x128xf32> to vector<1x128xf32>
    %234 = vector.broadcast %233 : vector<1x128xf32> to vector<16x128xf32>
    %235 = arith.mulf %231, %234 : vector<16x128xf32>
    %c0_104 = arith.constant 0 : index
    %c0_105 = arith.constant 0 : index
    %c0_106 = arith.constant 0 : index
    %236 = vector.load %arg18[%c0_104, %c0_105, %c0_106] : memref<1x1x128xf32, #tpu.memory_space<vmem>>, vector<1x1x128xf32>
    %237 = vector.shape_cast %236 : vector<1x1x128xf32> to vector<1x128xf32>
    %238 = vector.broadcast %237 : vector<1x128xf32> to vector<16x128xf32>
    %239 = arith.addf %235, %238 : vector<16x128xf32>
    %240 = arith.truncf %239 : vector<16x128xf32> to vector<16x128xbf16>
    %c0_107 = arith.constant 0 : index
    %c0_108 = arith.constant 0 : index
    %c0_109 = arith.constant 0 : index
    %241 = vector.load %arg7[%c0_107, %c0_108, %c0_109] : memref<1x128x384xbf16, #tpu.memory_space<vmem>>, vector<1x128x384xbf16>
    %242 = vector.shape_cast %241 : vector<1x128x384xbf16> to vector<128x384xbf16>
    %cst_110 = arith.constant dense<0.000000e+00> : vector<16x384xf32>
    %243 = tpu.matmul %240, %242, %cst_110 {dimension_numbers = #tpu.dot_dimension_numbers<[1], [0], [0], [1], [0, 0, 1, 1], [], []>} : vector<16x128xbf16>, vector<128x384xbf16>, vector<16x384xf32> -> vector<16x384xf32>
    %c0_111 = arith.constant 0 : index
    %c0_112 = arith.constant 0 : index
    %c0_113 = arith.constant 0 : index
    %244 = vector.load %arg8[%c0_111, %c0_112, %c0_113] : memref<1x1x384xf32, #tpu.memory_space<vmem>>, vector<1x1x384xf32>
    %245 = vector.shape_cast %244 : vector<1x1x384xf32> to vector<1x384xf32>
    %246 = vector.broadcast %245 : vector<1x384xf32> to vector<16x384xf32>
    %247 = arith.addf %243, %246 : vector<16x384xf32>
    %248 = vector.extract_strided_slice %35 {offsets = [0, 0], sizes = [1, 8], strides = [1, 1]} : vector<2x8xf32> to vector<1x8xf32>
    %249 = vector.extract_strided_slice %247 {offsets = [0, 0], sizes = [8, 64], strides = [1, 1]} : vector<16x384xf32> to vector<8x64xf32>
    %250 = vector.extract_strided_slice %247 {offsets = [0, 128], sizes = [8, 64], strides = [1, 1]} : vector<16x384xf32> to vector<8x64xf32>
    %251 = vector.extract_strided_slice %247 {offsets = [0, 256], sizes = [8, 64], strides = [1, 1]} : vector<16x384xf32> to vector<8x64xf32>
    %252 = arith.truncf %249 : vector<8x64xf32> to vector<8x64xbf16>
    %253 = arith.truncf %250 : vector<8x64xf32> to vector<8x64xbf16>
    %cst_114 = arith.constant dense<0.000000e+00> : vector<8x8xf32>
    %254 = tpu.matmul %252, %253, %cst_114 {dimension_numbers = #tpu.dot_dimension_numbers<[1], [1], [0], [0], [0, 0, 1, 0], [], []>} : vector<8x64xbf16>, vector<8x64xbf16>, vector<8x8xf32> -> vector<8x8xf32>
    %cst_115 = arith.constant 1.250000e-01 : f32
    %255 = vector.broadcast %cst_115 : f32 to vector<8x8xf32>
    %256 = arith.mulf %254, %255 : vector<8x8xf32>
    %257 = vector.broadcast %248 : vector<1x8xf32> to vector<8x8xf32>
    %258 = arith.addf %256, %257 : vector<8x8xf32>
    %cst_116 = arith.constant dense<0xFF800000> : vector<8xf32>
    %259 = vector.multi_reduction <maximumf>, %258, %cst_116 [1] : vector<8x8xf32> to vector<8xf32>
    %260 = vector.shape_cast %259 : vector<8xf32> to vector<8x1xf32>
    %261 = vector.broadcast %260 : vector<8x1xf32> to vector<8x8xf32>
    %262 = arith.subf %258, %261 : vector<8x8xf32>
    %263 = math.exp %262 : vector<8x8xf32>
    %cst_117 = arith.constant dense<0.000000e+00> : vector<8xf32>
    %264 = vector.multi_reduction <add>, %263, %cst_117 [1] : vector<8x8xf32> to vector<8xf32>
    %265 = vector.shape_cast %264 : vector<8xf32> to vector<8x1xf32>
    %266 = tpu.reciprocal %265 {approx = true} : vector<8x1xf32> -> vector<8x1xf32>
    %267 = vector.broadcast %266 : vector<8x1xf32> to vector<8x8xf32>
    %268 = arith.mulf %263, %267 : vector<8x8xf32>
    %269 = arith.truncf %268 : vector<8x8xf32> to vector<8x8xbf16>
    %270 = arith.truncf %251 : vector<8x64xf32> to vector<8x64xbf16>
    %cst_118 = arith.constant dense<0.000000e+00> : vector<8x64xf32>
    %271 = tpu.matmul %269, %270, %cst_118 {dimension_numbers = #tpu.dot_dimension_numbers<[1], [0], [0], [1], [0, 0, 1, 1], [], []>} : vector<8x8xbf16>, vector<8x64xbf16>, vector<8x64xf32> -> vector<8x64xf32>
    %272 = arith.truncf %271 : vector<8x64xf32> to vector<8x64xbf16>
    %c0_119 = arith.constant 0 : index
    %c0_120 = arith.constant 0 : index
    %c0_121 = arith.constant 0 : index
    %273 = vector.load %arg9[%c0_119, %c0_120, %c0_121] : memref<1x128x128xbf16, #tpu.memory_space<vmem>>, vector<1x64x128xbf16>
    %274 = vector.shape_cast %273 : vector<1x64x128xbf16> to vector<64x128xbf16>
    %cst_122 = arith.constant dense<0.000000e+00> : vector<8x128xf32>
    %275 = tpu.matmul %272, %274, %cst_122 {dimension_numbers = #tpu.dot_dimension_numbers<[1], [0], [0], [1], [0, 0, 1, 1], [], []>} : vector<8x64xbf16>, vector<64x128xbf16>, vector<8x128xf32> -> vector<8x128xf32>
    %276 = vector.extract_strided_slice %247 {offsets = [0, 64], sizes = [8, 64], strides = [1, 1]} : vector<16x384xf32> to vector<8x64xf32>
    %277 = vector.extract_strided_slice %247 {offsets = [0, 192], sizes = [8, 64], strides = [1, 1]} : vector<16x384xf32> to vector<8x64xf32>
    %278 = vector.extract_strided_slice %247 {offsets = [0, 320], sizes = [8, 64], strides = [1, 1]} : vector<16x384xf32> to vector<8x64xf32>
    %279 = arith.truncf %276 : vector<8x64xf32> to vector<8x64xbf16>
    %280 = arith.truncf %277 : vector<8x64xf32> to vector<8x64xbf16>
    %cst_123 = arith.constant dense<0.000000e+00> : vector<8x8xf32>
    %281 = tpu.matmul %279, %280, %cst_123 {dimension_numbers = #tpu.dot_dimension_numbers<[1], [1], [0], [0], [0, 0, 1, 0], [], []>} : vector<8x64xbf16>, vector<8x64xbf16>, vector<8x8xf32> -> vector<8x8xf32>
    %cst_124 = arith.constant 1.250000e-01 : f32
    %282 = vector.broadcast %cst_124 : f32 to vector<8x8xf32>
    %283 = arith.mulf %281, %282 : vector<8x8xf32>
    %284 = vector.broadcast %248 : vector<1x8xf32> to vector<8x8xf32>
    %285 = arith.addf %283, %284 : vector<8x8xf32>
    %cst_125 = arith.constant dense<0xFF800000> : vector<8xf32>
    %286 = vector.multi_reduction <maximumf>, %285, %cst_125 [1] : vector<8x8xf32> to vector<8xf32>
    %287 = vector.shape_cast %286 : vector<8xf32> to vector<8x1xf32>
    %288 = vector.broadcast %287 : vector<8x1xf32> to vector<8x8xf32>
    %289 = arith.subf %285, %288 : vector<8x8xf32>
    %290 = math.exp %289 : vector<8x8xf32>
    %cst_126 = arith.constant dense<0.000000e+00> : vector<8xf32>
    %291 = vector.multi_reduction <add>, %290, %cst_126 [1] : vector<8x8xf32> to vector<8xf32>
    %292 = vector.shape_cast %291 : vector<8xf32> to vector<8x1xf32>
    %293 = tpu.reciprocal %292 {approx = true} : vector<8x1xf32> -> vector<8x1xf32>
    %294 = vector.broadcast %293 : vector<8x1xf32> to vector<8x8xf32>
    %295 = arith.mulf %290, %294 : vector<8x8xf32>
    %296 = arith.truncf %295 : vector<8x8xf32> to vector<8x8xbf16>
    %297 = arith.truncf %278 : vector<8x64xf32> to vector<8x64xbf16>
    %cst_127 = arith.constant dense<0.000000e+00> : vector<8x64xf32>
    %298 = tpu.matmul %296, %297, %cst_127 {dimension_numbers = #tpu.dot_dimension_numbers<[1], [0], [0], [1], [0, 0, 1, 1], [], []>} : vector<8x8xbf16>, vector<8x64xbf16>, vector<8x64xf32> -> vector<8x64xf32>
    %299 = arith.truncf %298 : vector<8x64xf32> to vector<8x64xbf16>
    %c0_128 = arith.constant 0 : index
    %c64_129 = arith.constant 64 : index
    %c0_130 = arith.constant 0 : index
    %300 = vector.load %arg9[%c0_128, %c64_129, %c0_130] : memref<1x128x128xbf16, #tpu.memory_space<vmem>>, vector<1x64x128xbf16>
    %301 = vector.shape_cast %300 : vector<1x64x128xbf16> to vector<64x128xbf16>
    %cst_131 = arith.constant dense<0.000000e+00> : vector<8x128xf32>
    %302 = tpu.matmul %299, %301, %cst_131 {dimension_numbers = #tpu.dot_dimension_numbers<[1], [0], [0], [1], [0, 0, 1, 1], [], []>} : vector<8x64xbf16>, vector<64x128xbf16>, vector<8x128xf32> -> vector<8x128xf32>
    %303 = arith.addf %275, %302 : vector<8x128xf32>
    %304 = vector.extract_strided_slice %35 {offsets = [1, 0], sizes = [1, 8], strides = [1, 1]} : vector<2x8xf32> to vector<1x8xf32>
    %305 = vector.extract_strided_slice %247 {offsets = [8, 0], sizes = [8, 64], strides = [1, 1]} : vector<16x384xf32> to vector<8x64xf32>
    %306 = vector.extract_strided_slice %247 {offsets = [8, 128], sizes = [8, 64], strides = [1, 1]} : vector<16x384xf32> to vector<8x64xf32>
    %307 = vector.extract_strided_slice %247 {offsets = [8, 256], sizes = [8, 64], strides = [1, 1]} : vector<16x384xf32> to vector<8x64xf32>
    %308 = arith.truncf %305 : vector<8x64xf32> to vector<8x64xbf16>
    %309 = arith.truncf %306 : vector<8x64xf32> to vector<8x64xbf16>
    %cst_132 = arith.constant dense<0.000000e+00> : vector<8x8xf32>
    %310 = tpu.matmul %308, %309, %cst_132 {dimension_numbers = #tpu.dot_dimension_numbers<[1], [1], [0], [0], [0, 0, 1, 0], [], []>} : vector<8x64xbf16>, vector<8x64xbf16>, vector<8x8xf32> -> vector<8x8xf32>
    %cst_133 = arith.constant 1.250000e-01 : f32
    %311 = vector.broadcast %cst_133 : f32 to vector<8x8xf32>
    %312 = arith.mulf %310, %311 : vector<8x8xf32>
    %313 = vector.broadcast %304 : vector<1x8xf32> to vector<8x8xf32>
    %314 = arith.addf %312, %313 : vector<8x8xf32>
    %cst_134 = arith.constant dense<0xFF800000> : vector<8xf32>
    %315 = vector.multi_reduction <maximumf>, %314, %cst_134 [1] : vector<8x8xf32> to vector<8xf32>
    %316 = vector.shape_cast %315 : vector<8xf32> to vector<8x1xf32>
    %317 = vector.broadcast %316 : vector<8x1xf32> to vector<8x8xf32>
    %318 = arith.subf %314, %317 : vector<8x8xf32>
    %319 = math.exp %318 : vector<8x8xf32>
    %cst_135 = arith.constant dense<0.000000e+00> : vector<8xf32>
    %320 = vector.multi_reduction <add>, %319, %cst_135 [1] : vector<8x8xf32> to vector<8xf32>
    %321 = vector.shape_cast %320 : vector<8xf32> to vector<8x1xf32>
    %322 = tpu.reciprocal %321 {approx = true} : vector<8x1xf32> -> vector<8x1xf32>
    %323 = vector.broadcast %322 : vector<8x1xf32> to vector<8x8xf32>
    %324 = arith.mulf %319, %323 : vector<8x8xf32>
    %325 = arith.truncf %324 : vector<8x8xf32> to vector<8x8xbf16>
    %326 = arith.truncf %307 : vector<8x64xf32> to vector<8x64xbf16>
    %cst_136 = arith.constant dense<0.000000e+00> : vector<8x64xf32>
    %327 = tpu.matmul %325, %326, %cst_136 {dimension_numbers = #tpu.dot_dimension_numbers<[1], [0], [0], [1], [0, 0, 1, 1], [], []>} : vector<8x8xbf16>, vector<8x64xbf16>, vector<8x64xf32> -> vector<8x64xf32>
    %328 = arith.truncf %327 : vector<8x64xf32> to vector<8x64xbf16>
    %c0_137 = arith.constant 0 : index
    %c0_138 = arith.constant 0 : index
    %c0_139 = arith.constant 0 : index
    %329 = vector.load %arg9[%c0_137, %c0_138, %c0_139] : memref<1x128x128xbf16, #tpu.memory_space<vmem>>, vector<1x64x128xbf16>
    %330 = vector.shape_cast %329 : vector<1x64x128xbf16> to vector<64x128xbf16>
    %cst_140 = arith.constant dense<0.000000e+00> : vector<8x128xf32>
    %331 = tpu.matmul %328, %330, %cst_140 {dimension_numbers = #tpu.dot_dimension_numbers<[1], [0], [0], [1], [0, 0, 1, 1], [], []>} : vector<8x64xbf16>, vector<64x128xbf16>, vector<8x128xf32> -> vector<8x128xf32>
    %332 = vector.extract_strided_slice %247 {offsets = [8, 64], sizes = [8, 64], strides = [1, 1]} : vector<16x384xf32> to vector<8x64xf32>
    %333 = vector.extract_strided_slice %247 {offsets = [8, 192], sizes = [8, 64], strides = [1, 1]} : vector<16x384xf32> to vector<8x64xf32>
    %334 = vector.extract_strided_slice %247 {offsets = [8, 320], sizes = [8, 64], strides = [1, 1]} : vector<16x384xf32> to vector<8x64xf32>
    %335 = arith.truncf %332 : vector<8x64xf32> to vector<8x64xbf16>
    %336 = arith.truncf %333 : vector<8x64xf32> to vector<8x64xbf16>
    %cst_141 = arith.constant dense<0.000000e+00> : vector<8x8xf32>
    %337 = tpu.matmul %335, %336, %cst_141 {dimension_numbers = #tpu.dot_dimension_numbers<[1], [1], [0], [0], [0, 0, 1, 0], [], []>} : vector<8x64xbf16>, vector<8x64xbf16>, vector<8x8xf32> -> vector<8x8xf32>
    %cst_142 = arith.constant 1.250000e-01 : f32
    %338 = vector.broadcast %cst_142 : f32 to vector<8x8xf32>
    %339 = arith.mulf %337, %338 : vector<8x8xf32>
    %340 = vector.broadcast %304 : vector<1x8xf32> to vector<8x8xf32>
    %341 = arith.addf %339, %340 : vector<8x8xf32>
    %cst_143 = arith.constant dense<0xFF800000> : vector<8xf32>
    %342 = vector.multi_reduction <maximumf>, %341, %cst_143 [1] : vector<8x8xf32> to vector<8xf32>
    %343 = vector.shape_cast %342 : vector<8xf32> to vector<8x1xf32>
    %344 = vector.broadcast %343 : vector<8x1xf32> to vector<8x8xf32>
    %345 = arith.subf %341, %344 : vector<8x8xf32>
    %346 = math.exp %345 : vector<8x8xf32>
    %cst_144 = arith.constant dense<0.000000e+00> : vector<8xf32>
    %347 = vector.multi_reduction <add>, %346, %cst_144 [1] : vector<8x8xf32> to vector<8xf32>
    %348 = vector.shape_cast %347 : vector<8xf32> to vector<8x1xf32>
    %349 = tpu.reciprocal %348 {approx = true} : vector<8x1xf32> -> vector<8x1xf32>
    %350 = vector.broadcast %349 : vector<8x1xf32> to vector<8x8xf32>
    %351 = arith.mulf %346, %350 : vector<8x8xf32>
    %352 = arith.truncf %351 : vector<8x8xf32> to vector<8x8xbf16>
    %353 = arith.truncf %334 : vector<8x64xf32> to vector<8x64xbf16>
    %cst_145 = arith.constant dense<0.000000e+00> : vector<8x64xf32>
    %354 = tpu.matmul %352, %353, %cst_145 {dimension_numbers = #tpu.dot_dimension_numbers<[1], [0], [0], [1], [0, 0, 1, 1], [], []>} : vector<8x8xbf16>, vector<8x64xbf16>, vector<8x64xf32> -> vector<8x64xf32>
    %355 = arith.truncf %354 : vector<8x64xf32> to vector<8x64xbf16>
    %c0_146 = arith.constant 0 : index
    %c64_147 = arith.constant 64 : index
    %c0_148 = arith.constant 0 : index
    %356 = vector.load %arg9[%c0_146, %c64_147, %c0_148] : memref<1x128x128xbf16, #tpu.memory_space<vmem>>, vector<1x64x128xbf16>
    %357 = vector.shape_cast %356 : vector<1x64x128xbf16> to vector<64x128xbf16>
    %cst_149 = arith.constant dense<0.000000e+00> : vector<8x128xf32>
    %358 = tpu.matmul %355, %357, %cst_149 {dimension_numbers = #tpu.dot_dimension_numbers<[1], [0], [0], [1], [0, 0, 1, 1], [], []>} : vector<8x64xbf16>, vector<64x128xbf16>, vector<8x128xf32> -> vector<8x128xf32>
    %359 = arith.addf %331, %358 : vector<8x128xf32>
    %360 = tpu.concatenate %303, %359 in 0 : vector<8x128xf32>, vector<8x128xf32> -> vector<16x128xf32>
    %c0_150 = arith.constant 0 : index
    %c0_151 = arith.constant 0 : index
    %c0_152 = arith.constant 0 : index
    %361 = vector.load %arg10[%c0_150, %c0_151, %c0_152] : memref<1x1x128xf32, #tpu.memory_space<vmem>>, vector<1x1x128xf32>
    %362 = vector.shape_cast %361 : vector<1x1x128xf32> to vector<1x128xf32>
    %363 = vector.broadcast %362 : vector<1x128xf32> to vector<16x128xf32>
    %364 = arith.addf %360, %363 : vector<16x128xf32>
    %365 = arith.addf %364, %239 : vector<16x128xf32>
    %cst_153 = arith.constant dense<0.000000e+00> : vector<16xf32>
    %366 = vector.multi_reduction <add>, %365, %cst_153 [1] : vector<16x128xf32> to vector<16xf32>
    %367 = vector.shape_cast %366 : vector<16xf32> to vector<16x1xf32>
    %cst_154 = arith.constant 1.280000e+02 : f32
    %368 = vector.broadcast %cst_154 : f32 to vector<16x1xf32>
    %369 = arith.divf %367, %368 : vector<16x1xf32>
    %370 = vector.broadcast %369 : vector<16x1xf32> to vector<16x128xf32>
    %371 = arith.subf %365, %370 : vector<16x128xf32>
    %372 = arith.mulf %371, %371 : vector<16x128xf32>
    %cst_155 = arith.constant dense<0.000000e+00> : vector<16xf32>
    %373 = vector.multi_reduction <add>, %372, %cst_155 [1] : vector<16x128xf32> to vector<16xf32>
    %374 = vector.shape_cast %373 : vector<16xf32> to vector<16x1xf32>
    %cst_156 = arith.constant 1.280000e+02 : f32
    %375 = vector.broadcast %cst_156 : f32 to vector<16x1xf32>
    %376 = arith.divf %374, %375 : vector<16x1xf32>
    %cst_157 = arith.constant 9.99999996E-13 : f32
    %377 = vector.broadcast %cst_157 : f32 to vector<16x1xf32>
    %378 = arith.addf %376, %377 : vector<16x1xf32>
    %379 = math.rsqrt %378 : vector<16x1xf32>
    %380 = vector.broadcast %379 : vector<16x1xf32> to vector<16x128xf32>
    %381 = arith.mulf %371, %380 : vector<16x128xf32>
    %c0_158 = arith.constant 0 : index
    %c0_159 = arith.constant 0 : index
    %c0_160 = arith.constant 0 : index
    %382 = vector.load %arg11[%c0_158, %c0_159, %c0_160] : memref<1x1x128xf32, #tpu.memory_space<vmem>>, vector<1x1x128xf32>
    %383 = vector.shape_cast %382 : vector<1x1x128xf32> to vector<1x128xf32>
    %384 = vector.broadcast %383 : vector<1x128xf32> to vector<16x128xf32>
    %385 = arith.mulf %381, %384 : vector<16x128xf32>
    %c0_161 = arith.constant 0 : index
    %c0_162 = arith.constant 0 : index
    %c0_163 = arith.constant 0 : index
    %386 = vector.load %arg12[%c0_161, %c0_162, %c0_163] : memref<1x1x128xf32, #tpu.memory_space<vmem>>, vector<1x1x128xf32>
    %387 = vector.shape_cast %386 : vector<1x1x128xf32> to vector<1x128xf32>
    %388 = vector.broadcast %387 : vector<1x128xf32> to vector<16x128xf32>
    %389 = arith.addf %385, %388 : vector<16x128xf32>
    %390 = arith.truncf %389 : vector<16x128xf32> to vector<16x128xbf16>
    %c0_164 = arith.constant 0 : index
    %c0_165 = arith.constant 0 : index
    %c0_166 = arith.constant 0 : index
    %391 = vector.load %arg13[%c0_164, %c0_165, %c0_166] : memref<1x128x256xbf16, #tpu.memory_space<vmem>>, vector<1x128x256xbf16>
    %392 = vector.shape_cast %391 : vector<1x128x256xbf16> to vector<128x256xbf16>
    %cst_167 = arith.constant dense<0.000000e+00> : vector<16x256xf32>
    %393 = tpu.matmul %390, %392, %cst_167 {dimension_numbers = #tpu.dot_dimension_numbers<[1], [0], [0], [1], [0, 0, 1, 1], [], []>} : vector<16x128xbf16>, vector<128x256xbf16>, vector<16x256xf32> -> vector<16x256xf32>
    %c0_168 = arith.constant 0 : index
    %c0_169 = arith.constant 0 : index
    %c0_170 = arith.constant 0 : index
    %394 = vector.load %arg14[%c0_168, %c0_169, %c0_170] : memref<1x1x256xf32, #tpu.memory_space<vmem>>, vector<1x1x256xf32>
    %395 = vector.shape_cast %394 : vector<1x1x256xf32> to vector<1x256xf32>
    %396 = vector.broadcast %395 : vector<1x256xf32> to vector<16x256xf32>
    %397 = arith.addf %393, %396 : vector<16x256xf32>
    %cst_171 = arith.constant 5.000000e-01 : f32
    %398 = vector.broadcast %cst_171 : f32 to vector<16x256xf32>
    %399 = arith.mulf %398, %397 : vector<16x256xf32>
    %cst_172 = arith.constant 4.471500e-02 : f32
    %400 = vector.broadcast %cst_172 : f32 to vector<16x256xf32>
    %401 = arith.mulf %400, %397 : vector<16x256xf32>
    %402 = arith.mulf %401, %397 : vector<16x256xf32>
    %403 = arith.mulf %402, %397 : vector<16x256xf32>
    %404 = arith.addf %397, %403 : vector<16x256xf32>
    %cst_173 = arith.constant 0.797884583 : f32
    %405 = vector.broadcast %cst_173 : f32 to vector<16x256xf32>
    %406 = arith.mulf %405, %404 : vector<16x256xf32>
    %407 = math.tanh %406 : vector<16x256xf32>
    %cst_174 = arith.constant 1.000000e+00 : f32
    %408 = vector.broadcast %cst_174 : f32 to vector<16x256xf32>
    %409 = arith.addf %408, %407 : vector<16x256xf32>
    %410 = arith.mulf %399, %409 : vector<16x256xf32>
    %411 = arith.truncf %410 : vector<16x256xf32> to vector<16x256xbf16>
    %c0_175 = arith.constant 0 : index
    %c0_176 = arith.constant 0 : index
    %c0_177 = arith.constant 0 : index
    %412 = vector.load %arg15[%c0_175, %c0_176, %c0_177] : memref<1x256x128xbf16, #tpu.memory_space<vmem>>, vector<1x256x128xbf16>
    %413 = vector.shape_cast %412 : vector<1x256x128xbf16> to vector<256x128xbf16>
    %cst_178 = arith.constant dense<0.000000e+00> : vector<16x128xf32>
    %414 = tpu.matmul %411, %413, %cst_178 {dimension_numbers = #tpu.dot_dimension_numbers<[1], [0], [0], [1], [0, 0, 1, 1], [], []>} : vector<16x256xbf16>, vector<256x128xbf16>, vector<16x128xf32> -> vector<16x128xf32>
    %c0_179 = arith.constant 0 : index
    %c0_180 = arith.constant 0 : index
    %c0_181 = arith.constant 0 : index
    %415 = vector.load %arg16[%c0_179, %c0_180, %c0_181] : memref<1x1x128xf32, #tpu.memory_space<vmem>>, vector<1x1x128xf32>
    %416 = vector.shape_cast %415 : vector<1x1x128xf32> to vector<1x128xf32>
    %417 = vector.broadcast %416 : vector<1x128xf32> to vector<16x128xf32>
    %418 = arith.addf %414, %417 : vector<16x128xf32>
    %419 = arith.addf %418, %389 : vector<16x128xf32>
    %cst_182 = arith.constant dense<0.000000e+00> : vector<16xf32>
    %420 = vector.multi_reduction <add>, %419, %cst_182 [1] : vector<16x128xf32> to vector<16xf32>
    %421 = vector.shape_cast %420 : vector<16xf32> to vector<16x1xf32>
    %cst_183 = arith.constant 1.280000e+02 : f32
    %422 = vector.broadcast %cst_183 : f32 to vector<16x1xf32>
    %423 = arith.divf %421, %422 : vector<16x1xf32>
    %424 = vector.broadcast %423 : vector<16x1xf32> to vector<16x128xf32>
    %425 = arith.subf %419, %424 : vector<16x128xf32>
    %426 = arith.mulf %425, %425 : vector<16x128xf32>
    %cst_184 = arith.constant dense<0.000000e+00> : vector<16xf32>
    %427 = vector.multi_reduction <add>, %426, %cst_184 [1] : vector<16x128xf32> to vector<16xf32>
    %428 = vector.shape_cast %427 : vector<16xf32> to vector<16x1xf32>
    %cst_185 = arith.constant 1.280000e+02 : f32
    %429 = vector.broadcast %cst_185 : f32 to vector<16x1xf32>
    %430 = arith.divf %428, %429 : vector<16x1xf32>
    %cst_186 = arith.constant 9.99999996E-13 : f32
    %431 = vector.broadcast %cst_186 : f32 to vector<16x1xf32>
    %432 = arith.addf %430, %431 : vector<16x1xf32>
    %433 = math.rsqrt %432 : vector<16x1xf32>
    %434 = vector.broadcast %433 : vector<16x1xf32> to vector<16x128xf32>
    %435 = arith.mulf %425, %434 : vector<16x128xf32>
    %c0_187 = arith.constant 0 : index
    %c0_188 = arith.constant 0 : index
    %c0_189 = arith.constant 0 : index
    %436 = vector.load %arg17[%c0_187, %c0_188, %c0_189] : memref<1x1x128xf32, #tpu.memory_space<vmem>>, vector<1x1x128xf32>
    %437 = vector.shape_cast %436 : vector<1x1x128xf32> to vector<1x128xf32>
    %438 = vector.broadcast %437 : vector<1x128xf32> to vector<16x128xf32>
    %439 = arith.mulf %435, %438 : vector<16x128xf32>
    %c0_190 = arith.constant 0 : index
    %c0_191 = arith.constant 0 : index
    %c0_192 = arith.constant 0 : index
    %440 = vector.load %arg18[%c0_190, %c0_191, %c0_192] : memref<1x1x128xf32, #tpu.memory_space<vmem>>, vector<1x1x128xf32>
    %441 = vector.shape_cast %440 : vector<1x1x128xf32> to vector<1x128xf32>
    %442 = vector.broadcast %441 : vector<1x128xf32> to vector<16x128xf32>
    %443 = arith.addf %439, %442 : vector<16x128xf32>
    %444 = vector.extract_strided_slice %443 {offsets = [0, 0], sizes = [1, 128], strides = [1, 1]} : vector<16x128xf32> to vector<1x128xf32>
    %445 = arith.truncf %444 : vector<1x128xf32> to vector<1x128xbf16>
    %c0_193 = arith.constant 0 : index
    %c0_194 = arith.constant 0 : index
    %c0_195 = arith.constant 0 : index
    %446 = vector.load %arg19[%c0_193, %c0_194, %c0_195] : memref<1x128x128xbf16, #tpu.memory_space<vmem>>, vector<1x128x128xbf16>
    %447 = vector.shape_cast %446 : vector<1x128x128xbf16> to vector<128x128xbf16>
    %cst_196 = arith.constant dense<0.000000e+00> : vector<1x128xf32>
    %448 = tpu.matmul %445, %447, %cst_196 {dimension_numbers = #tpu.dot_dimension_numbers<[1], [0], [0], [1], [0, 0, 1, 1], [], []>} : vector<1x128xbf16>, vector<128x128xbf16>, vector<1x128xf32> -> vector<1x128xf32>
    %c0_197 = arith.constant 0 : index
    %c0_198 = arith.constant 0 : index
    %c0_199 = arith.constant 0 : index
    %449 = vector.load %arg20[%c0_197, %c0_198, %c0_199] : memref<1x1x128xf32, #tpu.memory_space<vmem>>, vector<1x1x128xf32>
    %450 = vector.shape_cast %449 : vector<1x1x128xf32> to vector<1x128xf32>
    %451 = arith.addf %448, %450 : vector<1x128xf32>
    %452 = math.tanh %451 : vector<1x128xf32>
    %c0_200 = arith.constant 0 : index
    %c0_201 = arith.constant 0 : index
    %c0_202 = arith.constant 0 : index
    %453 = vector.load %arg21[%c0_200, %c0_201, %c0_202] : memref<1x2x128xf32, #tpu.memory_space<vmem>>, vector<1x1x128xf32>
    %454 = vector.shape_cast %453 : vector<1x1x128xf32> to vector<1x128xf32>
    %455 = vector.shape_cast %452 : vector<1x128xf32> to vector<1x1x128xf32>
    tpu.vector_store %arg21[%c0_200, %c0_201, %c0_202], %455 {strides = array<i32>} : memref<1x2x128xf32, #tpu.memory_space<vmem>>, vector<1x1x128xf32>,
    %456 = vector.extract_strided_slice %443 {offsets = [8, 0], sizes = [1, 128], strides = [1, 1]} : vector<16x128xf32> to vector<1x128xf32>
    %457 = arith.truncf %456 : vector<1x128xf32> to vector<1x128xbf16>
    %c0_203 = arith.constant 0 : index
    %c0_204 = arith.constant 0 : index
    %c0_205 = arith.constant 0 : index
    %458 = vector.load %arg19[%c0_203, %c0_204, %c0_205] : memref<1x128x128xbf16, #tpu.memory_space<vmem>>, vector<1x128x128xbf16>
    %459 = vector.shape_cast %458 : vector<1x128x128xbf16> to vector<128x128xbf16>
    %cst_206 = arith.constant dense<0.000000e+00> : vector<1x128xf32>
    %460 = tpu.matmul %457, %459, %cst_206 {dimension_numbers = #tpu.dot_dimension_numbers<[1], [0], [0], [1], [0, 0, 1, 1], [], []>} : vector<1x128xbf16>, vector<128x128xbf16>, vector<1x128xf32> -> vector<1x128xf32>
    %c0_207 = arith.constant 0 : index
    %c0_208 = arith.constant 0 : index
    %c0_209 = arith.constant 0 : index
    %461 = vector.load %arg20[%c0_207, %c0_208, %c0_209] : memref<1x1x128xf32, #tpu.memory_space<vmem>>, vector<1x1x128xf32>
    %462 = vector.shape_cast %461 : vector<1x1x128xf32> to vector<1x128xf32>
    %463 = arith.addf %460, %462 : vector<1x128xf32>
    %464 = math.tanh %463 : vector<1x128xf32>
    %c0_210 = arith.constant 0 : index
    %c1 = arith.constant 1 : index
    %c0_211 = arith.constant 0 : index
    %465 = vector.load %arg21[%c0_210, %c1, %c0_211] : memref<1x2x128xf32, #tpu.memory_space<vmem>>, vector<1x1x128xf32>
    %466 = vector.shape_cast %465 : vector<1x1x128xf32> to vector<1x128xf32>
    %467 = vector.shape_cast %464 : vector<1x128xf32> to vector<1x1x128xf32>
    tpu.vector_store %arg21[%c0_210, %c1, %c0_211], %467 {strides = array<i32>} : memref<1x2x128xf32, #tpu.memory_space<vmem>>, vector<1x1x128xf32>,
    return
  }
  func.func @transform_0(%arg0: i32) -> (i32, i32, i32) {
    %c0_i32 = arith.constant 0 : i32
    %c0_i32_0 = arith.constant 0 : i32
    %c0_i32_1 = arith.constant 0 : i32
    return %arg0, %c0_i32, %c0_i32_0 : i32, i32, i32
  }
  func.func @transform_1(%arg0: i32) -> (i32, i32, i32) {
    %c0_i32 = arith.constant 0 : i32
    %c0_i32_0 = arith.constant 0 : i32
    %c0_i32_1 = arith.constant 0 : i32
    return %arg0, %c0_i32, %c0_i32_0 : i32, i32, i32
  }
  func.func @transform_2(%arg0: i32) -> (i32, i32, i32) {
    %c0_i32 = arith.constant 0 : i32
    %c0_i32_0 = arith.constant 0 : i32
    %c0_i32_1 = arith.constant 0 : i32
    return %arg0, %c0_i32, %c0_i32_0 : i32, i32, i32
  }
  func.func @transform_3(%arg0: i32) -> (i32, i32, i32) {
    %c0_i32 = arith.constant 0 : i32
    %c0_i32_0 = arith.constant 0 : i32
    %c0_i32_1 = arith.constant 0 : i32
    return %arg0, %c0_i32, %c0_i32_0 : i32, i32, i32
  }
  func.func @transform_4(%arg0: i32) -> (i32, i32, i32) {
    %c0_i32 = arith.constant 0 : i32
    %c0_i32_0 = arith.constant 0 : i32
    %c0_i32_1 = arith.constant 0 : i32
    return %arg0, %c0_i32, %c0_i32_0 : i32, i32, i32
  }
  func.func @transform_5(%arg0: i32) -> (i32, i32, i32) {
    %c0_i32 = arith.constant 0 : i32
    %c0_i32_0 = arith.constant 0 : i32
    %c0_i32_1 = arith.constant 0 : i32
    return %arg0, %c0_i32, %c0_i32_0 : i32, i32, i32
  }
  func.func @transform_6(%arg0: i32) -> (i32, i32, i32) {
    %c0_i32 = arith.constant 0 : i32
    %c0_i32_0 = arith.constant 0 : i32
    %c0_i32_1 = arith.constant 0 : i32
    return %arg0, %c0_i32, %c0_i32_0 : i32, i32, i32
  }
  func.func @transform_7(%arg0: i32) -> (i32, i32, i32) {
    %c0_i32 = arith.constant 0 : i32
    %c0_i32_0 = arith.constant 0 : i32
    %c0_i32_1 = arith.constant 0 : i32
    return %arg0, %c0_i32, %c0_i32_0 : i32, i32, i32
  }
  func.func @transform_8(%arg0: i32) -> (i32, i32, i32) {
    %c0_i32 = arith.constant 0 : i32
    %c0_i32_0 = arith.constant 0 : i32
    %c0_i32_1 = arith.constant 0 : i32
    return %arg0, %c0_i32, %c0_i32_0 : i32, i32, i32
  }
  func.func @transform_9(%arg0: i32) -> (i32, i32, i32) {
    %c0_i32 = arith.constant 0 : i32
    %c0_i32_0 = arith.constant 0 : i32
    %c0_i32_1 = arith.constant 0 : i32
    return %arg0, %c0_i32, %c0_i32_0 : i32, i32, i32
  }
  func.func @transform_10(%arg0: i32) -> (i32, i32, i32) {
    %c0_i32 = arith.constant 0 : i32
    %c0_i32_0 = arith.constant 0 : i32
    %c0_i32_1 = arith.constant 0 : i32
    return %arg0, %c0_i32, %c0_i32_0 : i32, i32, i32
  }
  func.func @transform_11(%arg0: i32) -> (i32, i32, i32) {
    %c0_i32 = arith.constant 0 : i32
    %c0_i32_0 = arith.constant 0 : i32
    %c0_i32_1 = arith.constant 0 : i32
    return %arg0, %c0_i32, %c0_i32_0 : i32, i32, i32
  }
  func.func @transform_12(%arg0: i32) -> (i32, i32, i32) {
    %c0_i32 = arith.constant 0 : i32
    %c0_i32_0 = arith.constant 0 : i32
    %c0_i32_1 = arith.constant 0 : i32
    return %arg0, %c0_i32, %c0_i32_0 : i32, i32, i32
  }
  func.func @transform_13(%arg0: i32) -> (i32, i32, i32) {
    %c0_i32 = arith.constant 0 : i32
    %c0_i32_0 = arith.constant 0 : i32
    %c0_i32_1 = arith.constant 0 : i32
    return %arg0, %c0_i32, %c0_i32_0 : i32, i32, i32
  }
  func.func @transform_14(%arg0: i32) -> (i32, i32, i32) {
    %c0_i32 = arith.constant 0 : i32
    %c0_i32_0 = arith.constant 0 : i32
    %c0_i32_1 = arith.constant 0 : i32
    return %arg0, %c0_i32, %c0_i32_0 : i32, i32, i32
  }
  func.func @transform_15(%arg0: i32) -> (i32, i32, i32) {
    %c0_i32 = arith.constant 0 : i32
    %c0_i32_0 = arith.constant 0 : i32
    %c0_i32_1 = arith.constant 0 : i32
    return %arg0, %c0_i32, %c0_i32_0 : i32, i32, i32
  }
  func.func @transform_16(%arg0: i32) -> (i32, i32, i32) {
    %c0_i32 = arith.constant 0 : i32
    %c0_i32_0 = arith.constant 0 : i32
    %c0_i32_1 = arith.constant 0 : i32
    return %arg0, %c0_i32, %c0_i32_0 : i32, i32, i32
  }
  func.func @transform_17(%arg0: i32) -> (i32, i32, i32) {
    %c0_i32 = arith.constant 0 : i32
    %c0_i32_0 = arith.constant 0 : i32
    %c0_i32_1 = arith.constant 0 : i32
    return %arg0, %c0_i32, %c0_i32_0 : i32, i32, i32
  }
  func.func @transform_18(%arg0: i32) -> (i32, i32, i32) {
    %c0_i32 = arith.constant 0 : i32
    %c0_i32_0 = arith.constant 0 : i32
    %c0_i32_1 = arith.constant 0 : i32
    return %arg0, %c0_i32, %c0_i32_0 : i32, i32, i32
  }
  func.func @transform_19(%arg0: i32) -> (i32, i32, i32) {
    %c0_i32 = arith.constant 0 : i32
    %c0_i32_0 = arith.constant 0 : i32
    %c0_i32_1 = arith.constant 0 : i32
    return %arg0, %c0_i32, %c0_i32_0 : i32, i32, i32
  }
  func.func @transform_20(%arg0: i32) -> (i32, i32, i32) {
    %c0_i32 = arith.constant 0 : i32
    %c0_i32_0 = arith.constant 0 : i32
    %c0_i32_1 = arith.constant 0 : i32
    return %arg0, %c0_i32, %c0_i32_0 : i32, i32, i32
  }
}

</mosaic_0001>

<llo_original>
// kernel: tpu_custom_call.1
$region0: #{tpu_custom_call.1}
  #allocation0 [shape = 'u32[]', space=smem, size = 0x4, offset = 0x4, fixed_abs, tag = 'smem constant byte address 0x4 - core index']
  #allocation1 [shape = 'u32[72,128]{1,0:T(1,128)}', space=vmem, size = 0x9000, scoped, tag = 'internal scratch']
  %s0 = inlined_call_operand.hbm [shape: f32[2,16,64], index: 0, kind: input, shape index: {}]
  %s1 = inlined_call_operand.hbm [shape: f32[2,2,8], index: 1, kind: input, shape index: {}]
  %s2 = inlined_call_operand.hbm [shape: f32[2,1,64], index: 2, kind: input, shape index: {}]
  %s3 = inlined_call_operand.hbm [shape: f32[2,1,64], index: 3, kind: input, shape index: {}]
  %s4 = inlined_call_operand.hbm [shape: bf16[2,64,128], index: 4, kind: input, shape index: {}]
  %s5 = inlined_call_operand.hbm [shape: f32[2,1,128], index: 5, kind: input, shape index: {}]
  %s6 = inlined_call_operand.hbm [shape: bf16[2,128,384], index: 6, kind: input, shape index: {}]
  %s7 = inlined_call_operand.vmem [shape: f32[2,1,384], index: 7, kind: input, shape index: {}]
  %s8 = inlined_call_operand.hbm [shape: bf16[2,128,128], index: 8, kind: input, shape index: {}]
  %s9 = inlined_call_operand.hbm [shape: f32[2,1,128], index: 9, kind: input, shape index: {}]
  %s10 = inlined_call_operand.hbm [shape: f32[2,1,128], index: 10, kind: input, shape index: {}]
  %s11 = inlined_call_operand.hbm [shape: f32[2,1,128], index: 11, kind: input, shape index: {}]
  %s12 = inlined_call_operand.hbm [shape: bf16[2,128,256], index: 12, kind: input, shape index: {}]
  %s13 = inlined_call_operand.vmem [shape: f32[2,1,256], index: 13, kind: input, shape index: {}]
  %s14 = inlined_call_operand.hbm [shape: bf16[2,256,128], index: 14, kind: input, shape index: {}]
  %s15 = inlined_call_operand.vmem [shape: f32[2,1,128], index: 15, kind: input, shape index: {}]
  %s16 = inlined_call_operand.vmem [shape: f32[2,1,128], index: 16, kind: input, shape index: {}]
  %s17 = inlined_call_operand.vmem [shape: f32[2,1,128], index: 17, kind: input, shape index: {}]
  %s18 = inlined_call_operand.hbm [shape: bf16[2,128,128], index: 18, kind: input, shape index: {}]
  %s19 = inlined_call_operand.vmem [shape: f32[2,1,128], index: 19, kind: input, shape index: {}]
  %s20 = inlined_call_operand.hbm [shape: f32[2,2,128], index: 20, kind: output, shape index: {}]
  %s21 = sld [smem:[#allocation0]]
  $region169: #{tpu_custom_call.1} parent=0
    _
  %s23 = ssub.s32 1, %s21
  %s24 = scalar_select 0, %s23, %s21
  $region1: #{tpu_custom_call.1} parent=0
    #allocation2 [shape = 'u8[16384]{0}', space=vmem, size = 0x4000, scoped, tag = 'input window, operand 0']
    #allocation3 [shape = 's32[2]{0}', space=sflag, size = 0x8, scoped, tag = 'scoped memory for tpu_custom_call.1']
    #allocation4 [shape = 's32[2]{0}', space=sflag, size = 0x8, scoped, tag = 'scoped memory for tpu_custom_call.1']
    #allocation5 [shape = 'u8[2048]{0}', space=vmem, size = 0x800, scoped, tag = 'input window, operand 1']
    #allocation6 [shape = 's32[2]{0}', space=sflag, size = 0x8, scoped, tag = 'scoped memory for tpu_custom_call.1']
    #allocation7 [shape = 'u8[1024]{0}', space=vmem, size = 0x400, scoped, tag = 'input window, operand 2']
    #allocation8 [shape = 'u8[1024]{0}', space=vmem, size = 0x400, scoped, tag = 'input window, operand 3']
    #allocation9 [shape = 's32[2]{0}', space=sflag, size = 0x8, scoped, tag = 'scoped memory for tpu_custom_call.1']
    #allocation10 [shape = 'u8[32768]{0}', space=vmem, size = 0x8000, scoped, tag = 'input window, operand 4']
    #allocation11 [shape = 'u8[1024]{0}', space=vmem, size = 0x400, scoped, tag = 'input window, operand 5']
    #allocation12 [shape = 's32[2]{0}', space=sflag, size = 0x8, scoped, tag = 'scoped memory for tpu_custom_call.1']
    #allocation13 [shape = 'u8[196608]{0}', space=vmem, size = 0x30000, scoped, tag = 'input window, operand 6']
    #allocation14 [shape = 'u8[65536]{0}', space=vmem, size = 0x10000, scoped, tag = 'input window, operand 8']
    #allocation15 [shape = 's32[2]{0}', space=sflag, size = 0x8, scoped, tag = 'scoped memory for tpu_custom_call.1']
    #allocation16 [shape = 'u8[1024]{0}', space=vmem, size = 0x400, scoped, tag = 'input window, operand 9']
    #allocation17 [shape = 'u8[1024]{0}', space=vmem, size = 0x400, scoped, tag = 'input window, operand 10']
    #allocation18 [shape = 's32[2]{0}', space=sflag, size = 0x8, scoped, tag = 'scoped memory for tpu_custom_call.1']
    #allocation19 [shape = 'u8[1024]{0}', space=vmem, size = 0x400, scoped, tag = 'input window, operand 11']
    #allocation20 [shape = 'u8[131072]{0}', space=vmem, size = 0x20000, scoped, tag = 'input window, operand 12']
    #allocation21 [shape = 's32[2]{0}', space=sflag, size = 0x8, scoped, tag = 'scoped memory for tpu_custom_call.1']
    #allocation22 [shape = 'u8[131072]{0}', space=vmem, size = 0x20000, scoped, tag = 'input window, operand 14']
    #allocation23 [shape = 'u8[65536]{0}', space=vmem, size = 0x10000, scoped, tag = 'input window, operand 18']
    #allocation24 [shape = 's32[2]{0}', space=sflag, size = 0x8, scoped, tag = 'scoped memory for tpu_custom_call.1']
    #allocation25 [shape = 'u8[2048]{0}', space=vmem, size = 0x800, scoped, tag = 'output window, operand 0']
    %25 = vsyncpa [#allocation3], 0
    %s26 = scalar_lea.sflag [#allocation3], 1
    %27 = vsyncpa %s26, 0
    %28 = vsyncpa [#allocation6], 0
    %s29 = scalar_lea.sflag [#allocation6], 1
    %30 = vsyncpa %s29, 0
    %31 = vsyncpa [#allocation9], 0
    %s32 = scalar_lea.sflag [#allocation9], 1
    %33 = vsyncpa %s32, 0
    %34 = vsyncpa [#allocation12], 0
    %s35 = scalar_lea.sflag [#allocation12], 1
    %36 = vsyncpa %s35, 0
    %37 = vsyncpa [#allocation15], 0
    %s38 = scalar_lea.sflag [#allocation15], 1
    %39 = vsyncpa %s38, 0
    %40 = vsyncpa [#allocation18], 0
    %s41 = scalar_lea.sflag [#allocation18], 1
    %42 = vsyncpa %s41, 0
    %43 = vsyncpa [#allocation21], 0
    %s44 = scalar_lea.sflag [#allocation21], 1
    %45 = vsyncpa %s44, 0
    %46 = vsyncpa [#allocation24], 0
    %s47 = scalar_lea.sflag [#allocation24], 1
    %48 = vsyncpa %s47, 0
    %49 = vsyncpa [#allocation4], 0
    %s50 = scalar_lea.sflag [#allocation4], 1
    %51 = vsyncpa %s50, 0
    loop: start=0, step=1, limit=4
    $region2: #{tpu_custom_call.1} parent=1 // loop_pre_header
      _
    $region3: #{tpu_custom_call.1} parent=1 // loop_header
      %s53 = sphi 0, %s57
      %p54 = scmp.ge.s32.totalorder %s53, 4
      %s63 = sphi 0, %s65
      %s66 = sphi 0, %s63
      %s67 = sphi 0, %s66
      %s83 = sphi 0, %s67
      %s89 = sphi 0, %s91
      %s92 = sphi 0, %s89
      %s93 = sphi 0, %s92
      %s109 = sphi 0, %s93
      %s115 = sphi 0, %s117
      %s118 = sphi 0, %s115
      %s119 = sphi 0, %s118
      %s135 = sphi 0, %s119
      %s141 = sphi 0, %s143
      %s144 = sphi 0, %s141
      %s145 = sphi 0, %s144
      %s161 = sphi 0, %s145
      %s167 = sphi 0, %s169
      %s170 = sphi 0, %s167
      %s171 = sphi 0, %s170
      %s187 = sphi 0, %s171
      %s193 = sphi 0, %s195
      %s196 = sphi 0, %s193
      %s197 = sphi 0, %s196
      %s213 = sphi 0, %s197
      %s219 = sphi 0, %s221
      %s222 = sphi 0, %s219
      %s223 = sphi 0, %s222
      %s239 = sphi 0, %s223
      %s245 = sphi 0, %s247
      %s248 = sphi 0, %s245
      %s249 = sphi 0, %s248
      %s265 = sphi 0, %s249
      %s271 = sphi 0, %s273
      %s274 = sphi 0, %s271
      %s275 = sphi 0, %s274
      %s291 = sphi 0, %s275
      %s297 = sphi 0, %s299
      %s300 = sphi 0, %s297
      %s301 = sphi 0, %s300
      %s317 = sphi 0, %s301
      %s323 = sphi 0, %s325
      %s326 = sphi 0, %s323
      %s327 = sphi 0, %s326
      %s343 = sphi 0, %s327
      %s349 = sphi 0, %s351
      %s352 = sphi 0, %s349
      %s353 = sphi 0, %s352
      %s369 = sphi 0, %s353
      %s375 = sphi 0, %s377
      %s378 = sphi 0, %s375
      %s379 = sphi 0, %s378
      %s395 = sphi 0, %s379
      %s401 = sphi 0, %s403
      %s404 = sphi 0, %s401
      %s405 = sphi 0, %s404
      %s421 = sphi 0, %s405
      %s427 = sphi 0, %s429
      %s430 = sphi 0, %s427
      %s431 = sphi 0, %s430
      %s447 = sphi 0, %s431
      %s453 = sphi 0, %s455
      %s456 = sphi 0, %s453
      %s457 = sphi 0, %s456
      %s473 = sphi 0, %s457
      %s479 = sphi 0, %s481
      %s482 = sphi 0, %s479
      %s483 = sphi 0, %s482
      %s499 = sphi 0, %s483
      %s505 = sphi 0, %s507
      %s508 = sphi 0, %s505
      %s509 = sphi 0, %s508
      %s525 = sphi 0, %s509
      %s531 = sphi 0, %s533
      %s534 = sphi 0, %s531
      %s535 = sphi 0, %s534
      %s551 = sphi 0, %s535
      %s557 = sphi 0, %s559
      %s560 = sphi 0, %s557
      %s561 = sphi 0, %s560
      %s577 = sphi 0, %s561
      %s583 = sphi 0, %s585
      %s586 = sphi 0, %s583
      %s587 = sphi 0, %s586
      %s603 = sphi 0, %s587
    $region4: #{tpu_custom_call.1} parent=1 // loop_header_branch
      %56 = sbr.rel (%p54) target = $region8
    $region5: #{tpu_custom_call.1} parent=1 // loop_body
      %s58 = ssub.s32 %s53, 1
      %s59 = ssub.s32 %s53, 2
      %s60 = sadd.s32 %s53, 1
      %s61 = ssub.s32 %s53, %s60
      %p62 = scmp.eq.s32.totalorder %s61, 0
      %s64 = sadd.s32 %s63, 1
      %s65 = scalar_select %p62, %s63, %s64
      %p68 = pneg %p62
      %p69 = scmp.eq.s32.totalorder %s53, 1
      %p70 = por %p68, %p69
      %p71 = scmp.ne.s32.totalorder %s63, %s66
      %p72 = scmp.eq.s32.totalorder %s53, 0
      %p73 = por %p71, %p72
      %p74 = scmp.ne.s32.totalorder %s63, %s66
      %p75 = scmp.eq.s32.totalorder %s58, 1
      %p76 = por %p74, %p75
      %p77 = scmp.ne.s32.totalorder %s66, %s67
      %p78 = scmp.eq.s32.totalorder %s58, 0
      %p79 = por %p77, %p78
      %p80 = scmp.ne.s32.totalorder %s66, %s67
      %p81 = scmp.eq.s32.totalorder %s59, 1
      %p82 = por %p80, %p81
      %p84 = scmp.ne.s32.totalorder %s67, %s83
      %p85 = scmp.eq.s32.totalorder %s59, 0
      %p86 = por %p84, %p85
      %s87 = ssub.s32 %s53, %s60
      %p88 = scmp.eq.s32.totalorder %s87, 0
      %s90 = sadd.s32 %s89, 1
      %s91 = scalar_select %p88, %s89, %s90
      %p94 = pneg %p88
      %p95 = scmp.eq.s32.totalorder %s53, 1
      %p96 = por %p94, %p95
      %p97 = scmp.ne.s32.totalorder %s89, %s92
      %p98 = scmp.eq.s32.totalorder %s53, 0
      %p99 = por %p97, %p98
      %p100 = scmp.ne.s32.totalorder %s89, %s92
      %p101 = scmp.eq.s32.totalorder %s58, 1
      %p102 = por %p100, %p101
      %p103 = scmp.ne.s32.totalorder %s92, %s93
      %p104 = scmp.eq.s32.totalorder %s58, 0
      %p105 = por %p103, %p104
      %p106 = scmp.ne.s32.totalorder %s92, %s93
      %p107 = scmp.eq.s32.totalorder %s59, 1
      %p108 = por %p106, %p107
      %p110 = scmp.ne.s32.totalorder %s93, %s109
      %p111 = scmp.eq.s32.totalorder %s59, 0
      %p112 = por %p110, %p111
      %s113 = ssub.s32 %s53, %s60
      %p114 = scmp.eq.s32.totalorder %s113, 0
      %s116 = sadd.s32 %s115, 1
      %s117 = scalar_select %p114, %s115, %s116
      %p120 = pneg %p114
      %p121 = scmp.eq.s32.totalorder %s53, 1
      %p122 = por %p120, %p121
      %p123 = scmp.ne.s32.totalorder %s115, %s118
      %p124 = scmp.eq.s32.totalorder %s53, 0
      %p125 = por %p123, %p124
      %p126 = scmp.ne.s32.totalorder %s115, %s118
      %p127 = scmp.eq.s32.totalorder %s58, 1
      %p128 = por %p126, %p127
      %p129 = scmp.ne.s32.totalorder %s118, %s119
      %p130 = scmp.eq.s32.totalorder %s58, 0
      %p131 = por %p129, %p130
      %p132 = scmp.ne.s32.totalorder %s118, %s119
      %p133 = scmp.eq.s32.totalorder %s59, 1
      %p134 = por %p132, %p133
      %p136 = scmp.ne.s32.totalorder %s119, %s135
      %p137 = scmp.eq.s32.totalorder %s59, 0
      %p138 = por %p136, %p137
      %s139 = ssub.s32 %s53, %s60
      %p140 = scmp.eq.s32.totalorder %s139, 0
      %s142 = sadd.s32 %s141, 1
      %s143 = scalar_select %p140, %s141, %s142
      %p146 = pneg %p140
      %p147 = scmp.eq.s32.totalorder %s53, 1
      %p148 = por %p146, %p147
      %p149 = scmp.ne.s32.totalorder %s141, %s144
      %p150 = scmp.eq.s32.totalorder %s53, 0
      %p151 = por %p149, %p150
      %p152 = scmp.ne.s32.totalorder %s141, %s144
      %p153 = scmp.eq.s32.totalorder %s58, 1
      %p154 = por %p152, %p153
      %p155 = scmp.ne.s32.totalorder %s144, %s145
      %p156 = scmp.eq.s32.totalorder %s58, 0
      %p157 = por %p155, %p156
      %p158 = scmp.ne.s32.totalorder %s144, %s145
      %p159 = scmp.eq.s32.totalorder %s59, 1
      %p160 = por %p158, %p159
      %p162 = scmp.ne.s32.totalorder %s145, %s161
      %p163 = scmp.eq.s32.totalorder %s59, 0
      %p164 = por %p162, %p163
      %s165 = ssub.s32 %s53, %s60
      %p166 = scmp.eq.s32.totalorder %s165, 0
      %s168 = sadd.s32 %s167, 1
      %s169 = scalar_select %p166, %s167, %s168
      %p172 = pneg %p166
      %p173 = scmp.eq.s32.totalorder %s53, 1
      %p174 = por %p172, %p173
      %p175 = scmp.ne.s32.totalorder %s167, %s170
      %p176 = scmp.eq.s32.totalorder %s53, 0
      %p177 = por %p175, %p176
      %p178 = scmp.ne.s32.totalorder %s167, %s170
      %p179 = scmp.eq.s32.totalorder %s58, 1
      %p180 = por %p178, %p179
      %p181 = scmp.ne.s32.totalorder %s170, %s171
      %p182 = scmp.eq.s32.totalorder %s58, 0
      %p183 = por %p181, %p182
      %p184 = scmp.ne.s32.totalorder %s170, %s171
      %p185 = scmp.eq.s32.totalorder %s59, 1
      %p186 = por %p184, %p185
      %p188 = scmp.ne.s32.totalorder %s171, %s187
      %p189 = scmp.eq.s32.totalorder %s59, 0
      %p190 = por %p188, %p189
      %s191 = ssub.s32 %s53, %s60
      %p192 = scmp.eq.s32.totalorder %s191, 0
      %s194 = sadd.s32 %s193, 1
      %s195 = scalar_select %p192, %s193, %s194
      %p198 = pneg %p192
      %p199 = scmp.eq.s32.totalorder %s53, 1
      %p200 = por %p198, %p199
      %p201 = scmp.ne.s32.totalorder %s193, %s196
      %p202 = scmp.eq.s32.totalorder %s53, 0
      %p203 = por %p201, %p202
      %p204 = scmp.ne.s32.totalorder %s193, %s196
      %p205 = scmp.eq.s32.totalorder %s58, 1
      %p206 = por %p204, %p205
      %p207 = scmp.ne.s32.totalorder %s196, %s197
      %p208 = scmp.eq.s32.totalorder %s58, 0
      %p209 = por %p207, %p208
      %p210 = scmp.ne.s32.totalorder %s196, %s197
      %p211 = scmp.eq.s32.totalorder %s59, 1
      %p212 = por %p210, %p211
      %p214 = scmp.ne.s32.totalorder %s197, %s213
      %p215 = scmp.eq.s32.totalorder %s59, 0
      %p216 = por %p214, %p215
      %s217 = ssub.s32 %s53, %s60
      %p218 = scmp.eq.s32.totalorder %s217, 0
      %s220 = sadd.s32 %s219, 1
      %s221 = scalar_select %p218, %s219, %s220
      %p224 = pneg %p218
      %p225 = scmp.eq.s32.totalorder %s53, 1
      %p226 = por %p224, %p225
      %p227 = scmp.ne.s32.totalorder %s219, %s222
      %p228 = scmp.eq.s32.totalorder %s53, 0
      %p229 = por %p227, %p228
      %p230 = scmp.ne.s32.totalorder %s219, %s222
      %p231 = scmp.eq.s32.totalorder %s58, 1
      %p232 = por %p230, %p231
      %p233 = scmp.ne.s32.totalorder %s222, %s223
      %p234 = scmp.eq.s32.totalorder %s58, 0
      %p235 = por %p233, %p234
      %p236 = scmp.ne.s32.totalorder %s222, %s223
      %p237 = scmp.eq.s32.totalorder %s59, 1
      %p238 = por %p236, %p237
      %p240 = scmp.ne.s32.totalorder %s223, %s239
      %p241 = scmp.eq.s32.totalorder %s59, 0
      %p242 = por %p240, %p241
      %s243 = ssub.s32 %s53, %s60
      %p244 = scmp.eq.s32.totalorder %s243, 0
      %s246 = sadd.s32 %s245, 1
      %s247 = scalar_select %p244, %s245, %s246
      %p250 = pneg %p244
      %p251 = scmp.eq.s32.totalorder %s53, 1
      %p252 = por %p250, %p251
      %p253 = scmp.ne.s32.totalorder %s245, %s248
      %p254 = scmp.eq.s32.totalorder %s53, 0
      %p255 = por %p253, %p254
      %p256 = scmp.ne.s32.totalorder %s245, %s248
      %p257 = scmp.eq.s32.totalorder %s58, 1
      %p258 = por %p256, %p257
      %p259 = scmp.ne.s32.totalorder %s248, %s249
      %p260 = scmp.eq.s32.totalorder %s58, 0
      %p261 = por %p259, %p260
      %p262 = scmp.ne.s32.totalorder %s248, %s249
      %p263 = scmp.eq.s32.totalorder %s59, 1
      %p264 = por %p262, %p263
      %p266 = scmp.ne.s32.totalorder %s249, %s265
      %p267 = scmp.eq.s32.totalorder %s59, 0
      %p268 = por %p266, %p267
      %s269 = ssub.s32 %s53, %s60
      %p270 = scmp.eq.s32.totalorder %s269, 0
      %s272 = sadd.s32 %s271, 1
      %s273 = scalar_select %p270, %s271, %s272
      %p276 = pneg %p270
      %p277 = scmp.eq.s32.totalorder %s53, 1
      %p278 = por %p276, %p277
      %p279 = scmp.ne.s32.totalorder %s271, %s274
      %p280 = scmp.eq.s32.totalorder %s53, 0
      %p281 = por %p279, %p280
      %p282 = scmp.ne.s32.totalorder %s271, %s274
      %p283 = scmp.eq.s32.totalorder %s58, 1
      %p284 = por %p282, %p283
      %p285 = scmp.ne.s32.totalorder %s274, %s275
      %p286 = scmp.eq.s32.totalorder %s58, 0
      %p287 = por %p285, %p286
      %p288 = scmp.ne.s32.totalorder %s274, %s275
      %p289 = scmp.eq.s32.totalorder %s59, 1
      %p290 = por %p288, %p289
      %p292 = scmp.ne.s32.totalorder %s275, %s291
      %p293 = scmp.eq.s32.totalorder %s59, 0
      %p294 = por %p292, %p293
      %s295 = ssub.s32 %s53, %s60
      %p296 = scmp.eq.s32.totalorder %s295, 0
      %s298 = sadd.s32 %s297, 1
      %s299 = scalar_select %p296, %s297, %s298
      %p302 = pneg %p296
      %p303 = scmp.eq.s32.totalorder %s53, 1
      %p304 = por %p302, %p303
      %p305 = scmp.ne.s32.totalorder %s297, %s300
      %p306 = scmp.eq.s32.totalorder %s53, 0
      %p307 = por %p305, %p306
      %p308 = scmp.ne.s32.totalorder %s297, %s300
      %p309 = scmp.eq.s32.totalorder %s58, 1
      %p310 = por %p308, %p309
      %p311 = scmp.ne.s32.totalorder %s300, %s301
      %p312 = scmp.eq.s32.totalorder %s58, 0
      %p313 = por %p311, %p312
      %p314 = scmp.ne.s32.totalorder %s300, %s301
      %p315 = scmp.eq.s32.totalorder %s59, 1
      %p316 = por %p314, %p315
      %p318 = scmp.ne.s32.totalorder %s301, %s317
      %p319 = scmp.eq.s32.totalorder %s59, 0
      %p320 = por %p318, %p319
      %s321 = ssub.s32 %s53, %s60
      %p322 = scmp.eq.s32.totalorder %s321, 0
      %s324 = sadd.s32 %s323, 1
      %s325 = scalar_select %p322, %s323, %s324
      %p328 = pneg %p322
      %p329 = scmp.eq.s32.totalorder %s53, 1
      %p330 = por %p328, %p329
      %p331 = scmp.ne.s32.totalorder %s323, %s326
      %p332 = scmp.eq.s32.totalorder %s53, 0
      %p333 = por %p331, %p332
      %p334 = scmp.ne.s32.totalorder %s323, %s326
      %p335 = scmp.eq.s32.totalorder %s58, 1
      %p336 = por %p334, %p335
      %p337 = scmp.ne.s32.totalorder %s326, %s327
      %p338 = scmp.eq.s32.totalorder %s58, 0
      %p339 = por %p337, %p338
      %p340 = scmp.ne.s32.totalorder %s326, %s327
      %p341 = scmp.eq.s32.totalorder %s59, 1
      %p342 = por %p340, %p341
      %p344 = scmp.ne.s32.totalorder %s327, %s343
      %p345 = scmp.eq.s32.totalorder %s59, 0
      %p346 = por %p344, %p345
      %s347 = ssub.s32 %s53, %s60
      %p348 = scmp.eq.s32.totalorder %s347, 0
      %s350 = sadd.s32 %s349, 1
      %s351 = scalar_select %p348, %s349, %s350
      %p354 = pneg %p348
      %p355 = scmp.eq.s32.totalorder %s53, 1
      %p356 = por %p354, %p355
      %p357 = scmp.ne.s32.totalorder %s349, %s352
      %p358 = scmp.eq.s32.totalorder %s53, 0
      %p359 = por %p357, %p358
      %p360 = scmp.ne.s32.totalorder %s349, %s352
      %p361 = scmp.eq.s32.totalorder %s58, 1
      %p362 = por %p360, %p361
      %p363 = scmp.ne.s32.totalorder %s352, %s353
      %p364 = scmp.eq.s32.totalorder %s58, 0
      %p365 = por %p363, %p364
      %p366 = scmp.ne.s32.totalorder %s352, %s353
      %p367 = scmp.eq.s32.totalorder %s59, 1
      %p368 = por %p366, %p367
      %p370 = scmp.ne.s32.totalorder %s353, %s369
      %p371 = scmp.eq.s32.totalorder %s59, 0
      %p372 = por %p370, %p371
      %s373 = ssub.s32 %s53, %s60
      %p374 = scmp.eq.s32.totalorder %s373, 0
      %s376 = sadd.s32 %s375, 1
      %s377 = scalar_select %p374, %s375, %s376
      %p380 = pneg %p374
      %p381 = scmp.eq.s32.totalorder %s53, 1
      %p382 = por %p380, %p381
      %p383 = scmp.ne.s32.totalorder %s375, %s378
      %p384 = scmp.eq.s32.totalorder %s53, 0
      %p385 = por %p383, %p384
      %p386 = scmp.ne.s32.totalorder %s375, %s378
      %p387 = scmp.eq.s32.totalorder %s58, 1
      %p388 = por %p386, %p387
      %p389 = scmp.ne.s32.totalorder %s378, %s379
      %p390 = scmp.eq.s32.totalorder %s58, 0
      %p391 = por %p389, %p390
      %p392 = scmp.ne.s32.totalorder %s378, %s379
      %p393 = scmp.eq.s32.totalorder %s59, 1
      %p394 = por %p392, %p393
      %p396 = scmp.ne.s32.totalorder %s379, %s395
      %p397 = scmp.eq.s32.totalorder %s59, 0
      %p398 = por %p396, %p397
      %s399 = ssub.s32 %s53, %s60
      %p400 = scmp.eq.s32.totalorder %s399, 0
      %s402 = sadd.s32 %s401, 1
      %s403 = scalar_select %p400, %s401, %s402
      %p406 = pneg %p400
      %p407 = scmp.eq.s32.totalorder %s53, 1
      %p408 = por %p406, %p407
      %p409 = scmp.ne.s32.totalorder %s401, %s404
      %p410 = scmp.eq.s32.totalorder %s53, 0
      %p411 = por %p409, %p410
      %p412 = scmp.ne.s32.totalorder %s401, %s404
      %p413 = scmp.eq.s32.totalorder %s58, 1
      %p414 = por %p412, %p413
      %p415 = scmp.ne.s32.totalorder %s404, %s405
      %p416 = scmp.eq.s32.totalorder %s58, 0
      %p417 = por %p415, %p416
      %p418 = scmp.ne.s32.totalorder %s404, %s405
      %p419 = scmp.eq.s32.totalorder %s59, 1
      %p420 = por %p418, %p419
      %p422 = scmp.ne.s32.totalorder %s405, %s421
      %p423 = scmp.eq.s32.totalorder %s59, 0
      %p424 = por %p422, %p423
      %s425 = ssub.s32 %s53, %s60
      %p426 = scmp.eq.s32.totalorder %s425, 0
      %s428 = sadd.s32 %s427, 1
      %s429 = scalar_select %p426, %s427, %s428
      %p432 = pneg %p426
      %p433 = scmp.eq.s32.totalorder %s53, 1
      %p434 = por %p432, %p433
      %p435 = scmp.ne.s32.totalorder %s427, %s430
      %p436 = scmp.eq.s32.totalorder %s53, 0
      %p437 = por %p435, %p436
      %p438 = scmp.ne.s32.totalorder %s427, %s430
      %p439 = scmp.eq.s32.totalorder %s58, 1
      %p440 = por %p438, %p439
      %p441 = scmp.ne.s32.totalorder %s430, %s431
      %p442 = scmp.eq.s32.totalorder %s58, 0
      %p443 = por %p441, %p442
      %p444 = scmp.ne.s32.totalorder %s430, %s431
      %p445 = scmp.eq.s32.totalorder %s59, 1
      %p446 = por %p444, %p445
      %p448 = scmp.ne.s32.totalorder %s431, %s447
      %p449 = scmp.eq.s32.totalorder %s59, 0
      %p450 = por %p448, %p449
      %s451 = ssub.s32 %s53, %s60
      %p452 = scmp.eq.s32.totalorder %s451, 0
      %s454 = sadd.s32 %s453, 1
      %s455 = scalar_select %p452, %s453, %s454
      %p458 = pneg %p452
      %p459 = scmp.eq.s32.totalorder %s53, 1
      %p460 = por %p458, %p459
      %p461 = scmp.ne.s32.totalorder %s453, %s456
      %p462 = scmp.eq.s32.totalorder %s53, 0
      %p463 = por %p461, %p462
      %p464 = scmp.ne.s32.totalorder %s453, %s456
      %p465 = scmp.eq.s32.totalorder %s58, 1
      %p466 = por %p464, %p465
      %p467 = scmp.ne.s32.totalorder %s456, %s457
      %p468 = scmp.eq.s32.totalorder %s58, 0
      %p469 = por %p467, %p468
      %p470 = scmp.ne.s32.totalorder %s456, %s457
      %p471 = scmp.eq.s32.totalorder %s59, 1
      %p472 = por %p470, %p471
      %p474 = scmp.ne.s32.totalorder %s457, %s473
      %p475 = scmp.eq.s32.totalorder %s59, 0
      %p476 = por %p474, %p475
      %s477 = ssub.s32 %s53, %s60
      %p478 = scmp.eq.s32.totalorder %s477, 0
      %s480 = sadd.s32 %s479, 1
      %s481 = scalar_select %p478, %s479, %s480
      %p484 = pneg %p478
      %p485 = scmp.eq.s32.totalorder %s53, 1
      %p486 = por %p484, %p485
      %p487 = scmp.ne.s32.totalorder %s479, %s482
      %p488 = scmp.eq.s32.totalorder %s53, 0
      %p489 = por %p487, %p488
      %p490 = scmp.ne.s32.totalorder %s479, %s482
      %p491 = scmp.eq.s32.totalorder %s58, 1
      %p492 = por %p490, %p491
      %p493 = scmp.ne.s32.totalorder %s482, %s483
      %p494 = scmp.eq.s32.totalorder %s58, 0
      %p495 = por %p493, %p494
      %p496 = scmp.ne.s32.totalorder %s482, %s483
      %p497 = scmp.eq.s32.totalorder %s59, 1
      %p498 = por %p496, %p497
      %p500 = scmp.ne.s32.totalorder %s483, %s499
      %p501 = scmp.eq.s32.totalorder %s59, 0
      %p502 = por %p500, %p501
      %s503 = ssub.s32 %s53, %s60
      %p504 = scmp.eq.s32.totalorder %s503, 0
      %s506 = sadd.s32 %s505, 1
      %s507 = scalar_select %p504, %s505, %s506
      %p510 = pneg %p504
      %p511 = scmp.eq.s32.totalorder %s53, 1
      %p512 = por %p510, %p511
      %p513 = scmp.ne.s32.totalorder %s505, %s508
      %p514 = scmp.eq.s32.totalorder %s53, 0
      %p515 = por %p513, %p514
      %p516 = scmp.ne.s32.totalorder %s505, %s508
      %p517 = scmp.eq.s32.totalorder %s58, 1
      %p518 = por %p516, %p517
      %p519 = scmp.ne.s32.totalorder %s508, %s509
      %p520 = scmp.eq.s32.totalorder %s58, 0
      %p521 = por %p519, %p520
      %p522 = scmp.ne.s32.totalorder %s508, %s509
      %p523 = scmp.eq.s32.totalorder %s59, 1
      %p524 = por %p522, %p523
      %p526 = scmp.ne.s32.totalorder %s509, %s525
      %p527 = scmp.eq.s32.totalorder %s59, 0
      %p528 = por %p526, %p527
      %s529 = ssub.s32 %s53, %s60
      %p530 = scmp.eq.s32.totalorder %s529, 0
      %s532 = sadd.s32 %s531, 1
      %s533 = scalar_select %p530, %s531, %s532
      %p536 = pneg %p530
      %p537 = scmp.eq.s32.totalorder %s53, 1
      %p538 = por %p536, %p537
      %p539 = scmp.ne.s32.totalorder %s531, %s534
      %p540 = scmp.eq.s32.totalorder %s53, 0
      %p541 = por %p539, %p540
      %p542 = scmp.ne.s32.totalorder %s531, %s534
      %p543 = scmp.eq.s32.totalorder %s58, 1
      %p544 = por %p542, %p543
      %p545 = scmp.ne.s32.totalorder %s534, %s535
      %p546 = scmp.eq.s32.totalorder %s58, 0
      %p547 = por %p545, %p546
      %p548 = scmp.ne.s32.totalorder %s534, %s535
      %p549 = scmp.eq.s32.totalorder %s59, 1
      %p550 = por %p548, %p549
      %p552 = scmp.ne.s32.totalorder %s535, %s551
      %p553 = scmp.eq.s32.totalorder %s59, 0
      %p554 = por %p552, %p553
      %s555 = ssub.s32 %s53, %s60
      %p556 = scmp.eq.s32.totalorder %s555, 0
      %s558 = sadd.s32 %s557, 1
      %s559 = scalar_select %p556, %s557, %s558
      %p562 = pneg %p556
      %p563 = scmp.eq.s32.totalorder %s53, 1
      %p564 = por %p562, %p563
      %p565 = scmp.ne.s32.totalorder %s557, %s560
      %p566 = scmp.eq.s32.totalorder %s53, 0
      %p567 = por %p565, %p566
      %p568 = scmp.ne.s32.totalorder %s557, %s560
      %p569 = scmp.eq.s32.totalorder %s58, 1
      %p570 = por %p568, %p569
      %p571 = scmp.ne.s32.totalorder %s560, %s561
      %p572 = scmp.eq.s32.totalorder %s58, 0
      %p573 = por %p571, %p572
      %p574 = scmp.ne.s32.totalorder %s560, %s561
      %p575 = scmp.eq.s32.totalorder %s59, 1
      %p576 = por %p574, %p575
      %p578 = scmp.ne.s32.totalorder %s561, %s577
      %p579 = scmp.eq.s32.totalorder %s59, 0
      %p580 = por %p578, %p579
      %s581 = ssub.s32 %s53, %s60
      %p582 = scmp.eq.s32.totalorder %s581, 0
      %s584 = sadd.s32 %s583, 1
      %s585 = scalar_select %p582, %s583, %s584
      %p588 = pneg %p582
      %p589 = scmp.eq.s32.totalorder %s53, 1
      %p590 = por %p588, %p589
      %p591 = scmp.ne.s32.totalorder %s583, %s586
      %p592 = scmp.eq.s32.totalorder %s53, 0
      %p593 = por %p591, %p592
      %p594 = scmp.ne.s32.totalorder %s583, %s586
      %p595 = scmp.eq.s32.totalorder %s58, 1
      %p596 = por %p594, %p595
      %p597 = scmp.ne.s32.totalorder %s586, %s587
      %p598 = scmp.eq.s32.totalorder %s58, 0
      %p599 = por %p597, %p598
      %p600 = scmp.ne.s32.totalorder %s586, %s587
      %p601 = scmp.eq.s32.totalorder %s59, 1
      %p602 = por %p600, %p601
      %p604 = scmp.ne.s32.totalorder %s587, %s603
      %p605 = scmp.eq.s32.totalorder %s59, 0
      %p606 = por %p604, %p605
      %p607 = scmp.le.s32.totalorder 1, %s53
      %p608 = scmp.lt.s32.totalorder %s53, 3
      %p609 = pnand %p607, %p608
      %p610 = pneg %p609
      // Predicated region
      $region9: #{tpu_custom_call.1} parent=5 // pred_check
        _
      $region10: #{tpu_custom_call.1} parent=5 // pred_check_branch
        %612 = sbr.rel (%p609) target = $region12
      $region11: #{tpu_custom_call.1} parent=5 // pred_region
        %s613 = ssub.s32 %s53, 1
      $region12: #{tpu_custom_call.1} parent=5 // pred_fallthru
        _
      %p614 = scmp.lt.s32.totalorder %s53, 2
      // Predicated region
      $region13: #{tpu_custom_call.1} parent=5 // pred_check
        %p615 = pneg %p614
      $region14: #{tpu_custom_call.1} parent=5 // pred_check_branch
        %617 = sbr.rel (%p615) target = $region16
      $region15: #{tpu_custom_call.1} parent=5 // pred_region
        // Predicated region
        $region17: #{tpu_custom_call.1} parent=15 // pred_check
          %p618 = pneg %p73
        $region18: #{tpu_custom_call.1} parent=15 // pred_check_branch
          %620 = sbr.rel (%p618) target = $region20
        $region19: #{tpu_custom_call.1} parent=15 // pred_region
          %s621 = sand.u32 %s63, 1
          %s622 = scalar_lea.sflag [#allocation3], %s621
          %s623 = sand.u32 %s63, 1
          %s624 = smul.addr %s623, 16
          %s625 = scalar_lea.vmem [#allocation2], %s624
          %627 = vsyncadd %s622, 0
          %s628 = smul.addr %s53, 2
          %s629 = smul.addr %s628, 8
          %s630 = scalar_lea.hbm %s0, %s629
          %s631 = sshll.u32 %s630, 4
          %s632 = int_to_ptr.hbm [resolvable:$true] %s631
          %s633 = sshll.u32 %s625, 4
          %s634 = int_to_ptr.vmem [resolvable:$true] %s633
          %639 = dma.hbm_to_vmem [thread:$0]  %s632, 256, %s634, %s622, 128, 128, 8
        $region20: #{tpu_custom_call.1} parent=15 // pred_fallthru
          _
        // Predicated region
        $region21: #{tpu_custom_call.1} parent=15 // pred_check
          %p640 = pneg %p99
        $region22: #{tpu_custom_call.1} parent=15 // pred_check_branch
          %642 = sbr.rel (%p640) target = $region24
        $region23: #{tpu_custom_call.1} parent=15 // pred_region
          %s643 = sand.u32 %s53, 1
          %s644 = scalar_lea.sflag [#allocation6], %s643
          %s645 = sand.u32 %s89, 1
          %s646 = smul.addr %s645, 2
          %s647 = scalar_lea.vmem [#allocation5], %s646
          %649 = vsyncadd %s644, 0
          %s650 = smul.addr %s53, 2
          %s651 = scalar_lea.hbm %s1, %s650
          %s653 = sshll.u32 %s651, 4
          %s654 = int_to_ptr.hbm [resolvable:$true] %s653
          %s655 = sshll.u32 %s647, 4
          %s656 = int_to_ptr.vmem [resolvable:$true] %s655
          %658 = dma.hbm_to_vmem [thread:$0]  %s654, 32, %s656, %s644
        $region24: #{tpu_custom_call.1} parent=15 // pred_fallthru
          _
        // Predicated region
        $region25: #{tpu_custom_call.1} parent=15 // pred_check
          %p659 = pneg %p125
        $region26: #{tpu_custom_call.1} parent=15 // pred_check_branch
          %661 = sbr.rel (%p659) target = $region28
        $region27: #{tpu_custom_call.1} parent=15 // pred_region
          %s662 = sand.u32 %s53, 1
          %s663 = scalar_lea.sflag [#allocation6], %s662
          %s664 = sand.u32 %s115, 1
          %s665 = scalar_lea.vmem [#allocation7], %s664
          %667 = vsyncadd %s663, 0
          %s668 = scalar_lea.hbm %s2, %s53
          %s670 = sshll.u32 %s668, 4
          %s671 = int_to_ptr.hbm [resolvable:$true] %s670
          %s672 = sshll.u32 %s665, 4
          %s673 = int_to_ptr.vmem [resolvable:$true] %s672
          %675 = dma.hbm_to_vmem [thread:$0]  %s671, 16, %s673, %s663
        $region28: #{tpu_custom_call.1} parent=15 // pred_fallthru
          _
        // Predicated region
        $region29: #{tpu_custom_call.1} parent=15 // pred_check
          %p676 = pneg %p151
        $region30: #{tpu_custom_call.1} parent=15 // pred_check_branch
          %678 = sbr.rel (%p676) target = $region32
        $region31: #{tpu_custom_call.1} parent=15 // pred_region
          %s679 = sand.u32 %s53, 1
          %s680 = scalar_lea.sflag [#allocation9], %s679
          %s681 = sand.u32 %s141, 1
          %s682 = scalar_lea.vmem [#allocation8], %s681
          %684 = vsyncadd %s680, 0
          %s685 = scalar_lea.hbm %s3, %s53
          %s687 = sshll.u32 %s685, 4
          %s688 = int_to_ptr.hbm [resolvable:$true] %s687
          %s689 = sshll.u32 %s682, 4
          %s690 = int_to_ptr.vmem [resolvable:$true] %s689
          %692 = dma.hbm_to_vmem [thread:$0]  %s688, 16, %s690, %s680
        $region32: #{tpu_custom_call.1} parent=15 // pred_fallthru
          _
        // Predicated region
        $region33: #{tpu_custom_call.1} parent=15 // pred_check
          %p693 = pneg %p177
        $region34: #{tpu_custom_call.1} parent=15 // pred_check_branch
          %695 = sbr.rel (%p693) target = $region36
        $region35: #{tpu_custom_call.1} parent=15 // pred_region
          %s696 = sand.u32 %s53, 1
          %s697 = scalar_lea.sflag [#allocation9], %s696
          %s698 = sand.u32 %s167, 1
          %s699 = smul.addr %s698, 32
          %s700 = scalar_lea.vmem [#allocation10], %s699
          %702 = vsyncadd %s697, 0
          %s703 = smul.addr %s53, 8
          %s704 = smul.addr %s703, 4
          %s705 = scalar_lea.hbm %s4, %s704
          %s706 = sshll.u32 %s705, 4
          %s707 = int_to_ptr.hbm [resolvable:$true] %s706
          %s708 = sshll.u32 %s700, 4
          %s709 = int_to_ptr.vmem [resolvable:$true] %s708
          %714 = dma.hbm_to_vmem [thread:$0]  %s707, 512, %s709, %s697, 64, 64, 4
        $region36: #{tpu_custom_call.1} parent=15 // pred_fallthru
          _
        // Predicated region
        $region37: #{tpu_custom_call.1} parent=15 // pred_check
          %p715 = pneg %p203
        $region38: #{tpu_custom_call.1} parent=15 // pred_check_branch
          %717 = sbr.rel (%p715) target = $region40
        $region39: #{tpu_custom_call.1} parent=15 // pred_region
          %s718 = sand.u32 %s53, 1
          %s719 = scalar_lea.sflag [#allocation12], %s718
          %s720 = sand.u32 %s193, 1
          %s721 = scalar_lea.vmem [#allocation11], %s720
          %723 = vsyncadd %s719, 0
          %s724 = scalar_lea.hbm %s5, %s53
          %s726 = sshll.u32 %s724, 4
          %s727 = int_to_ptr.hbm [resolvable:$true] %s726
          %s728 = sshll.u32 %s721, 4
          %s729 = int_to_ptr.vmem [resolvable:$true] %s728
          %731 = dma.hbm_to_vmem [thread:$0]  %s727, 16, %s729, %s719
        $region40: #{tpu_custom_call.1} parent=15 // pred_fallthru
          _
        // Predicated region
        $region41: #{tpu_custom_call.1} parent=15 // pred_check
          %p732 = pneg %p229
        $region42: #{tpu_custom_call.1} parent=15 // pred_check_branch
          %734 = sbr.rel (%p732) target = $region44
        $region43: #{tpu_custom_call.1} parent=15 // pred_region
          %s735 = sand.u32 %s53, 1
          %s736 = scalar_lea.sflag [#allocation12], %s735
          %s737 = sand.u32 %s219, 1
          %s738 = smul.addr %s737, 192
          %s739 = scalar_lea.vmem [#allocation13], %s738
          %741 = vsyncadd %s736, 0
          %s742 = smul.addr %s53, 48
          %s743 = smul.addr %s742, 4
          %s744 = scalar_lea.hbm %s6, %s743
          %s745 = sshll.u32 %s744, 4
          %s746 = int_to_ptr.hbm [resolvable:$true] %s745
          %s747 = sshll.u32 %s739, 4
          %s748 = int_to_ptr.vmem [resolvable:$true] %s747
          %753 = dma.hbm_to_vmem [thread:$0]  %s746, 3072, %s748, %s736, 192, 192, 12
        $region44: #{tpu_custom_call.1} parent=15 // pred_fallthru
          _
        // Predicated region
        $region45: #{tpu_custom_call.1} parent=15 // pred_check
          %p754 = pneg %p255
        $region46: #{tpu_custom_call.1} parent=15 // pred_check_branch
          %756 = sbr.rel (%p754) target = $region48
        $region47: #{tpu_custom_call.1} parent=15 // pred_region
          %p757 = scmp.lt.s32.totalorder %s53, 1
          %s758 = scalar_select %p757, %s53, 1
          %s759 = smul.addr %s758, 3
          %s760 = scalar_lea.vmem %s7, %s759
        $region48: #{tpu_custom_call.1} parent=15 // pred_fallthru
          _
        // Predicated region
        $region49: #{tpu_custom_call.1} parent=15 // pred_check
          %p761 = pneg %p281
        $region50: #{tpu_custom_call.1} parent=15 // pred_check_branch
          %763 = sbr.rel (%p761) target = $region52
        $region51: #{tpu_custom_call.1} parent=15 // pred_region
          %s764 = sand.u32 %s53, 1
          %s765 = scalar_lea.sflag [#allocation15], %s764
          %s766 = sand.u32 %s271, 1
          %s767 = smul.addr %s766, 64
          %s768 = scalar_lea.vmem [#allocation14], %s767
          %770 = vsyncadd %s765, 0
          %s771 = smul.addr %s53, 16
          %s772 = smul.addr %s771, 4
          %s773 = scalar_lea.hbm %s8, %s772
          %s774 = sshll.u32 %s773, 4
          %s775 = int_to_ptr.hbm [resolvable:$true] %s774
          %s776 = sshll.u32 %s768, 4
          %s777 = int_to_ptr.vmem [resolvable:$true] %s776
          %782 = dma.hbm_to_vmem [thread:$0]  %s775, 1024, %s777, %s765, 64, 64, 4
        $region52: #{tpu_custom_call.1} parent=15 // pred_fallthru
          _
        // Predicated region
        $region53: #{tpu_custom_call.1} parent=15 // pred_check
          %p783 = pneg %p307
        $region54: #{tpu_custom_call.1} parent=15 // pred_check_branch
          %785 = sbr.rel (%p783) target = $region56
        $region55: #{tpu_custom_call.1} parent=15 // pred_region
          %s786 = sand.u32 %s53, 1
          %s787 = scalar_lea.sflag [#allocation15], %s786
          %s788 = sand.u32 %s297, 1
          %s789 = scalar_lea.vmem [#allocation16], %s788
          %791 = vsyncadd %s787, 0
          %s792 = scalar_lea.hbm %s9, %s53
          %s794 = sshll.u32 %s792, 4
          %s795 = int_to_ptr.hbm [resolvable:$true] %s794
          %s796 = sshll.u32 %s789, 4
          %s797 = int_to_ptr.vmem [resolvable:$true] %s796
          %799 = dma.hbm_to_vmem [thread:$0]  %s795, 16, %s797, %s787
        $region56: #{tpu_custom_call.1} parent=15 // pred_fallthru
          _
        // Predicated region
        $region57: #{tpu_custom_call.1} parent=15 // pred_check
          %p800 = pneg %p333
        $region58: #{tpu_custom_call.1} parent=15 // pred_check_branch
          %802 = sbr.rel (%p800) target = $region60
        $region59: #{tpu_custom_call.1} parent=15 // pred_region
          %s803 = sand.u32 %s53, 1
          %s804 = scalar_lea.sflag [#allocation18], %s803
          %s805 = sand.u32 %s323, 1
          %s806 = scalar_lea.vmem [#allocation17], %s805
          %808 = vsyncadd %s804, 0
          %s809 = scalar_lea.hbm %s10, %s53
          %s811 = sshll.u32 %s809, 4
          %s812 = int_to_ptr.hbm [resolvable:$true] %s811
          %s813 = sshll.u32 %s806, 4
          %s814 = int_to_ptr.vmem [resolvable:$true] %s813
          %816 = dma.hbm_to_vmem [thread:$0]  %s812, 16, %s814, %s804
        $region60: #{tpu_custom_call.1} parent=15 // pred_fallthru
          _
        // Predicated region
        $region61: #{tpu_custom_call.1} parent=15 // pred_check
          %p817 = pneg %p359
        $region62: #{tpu_custom_call.1} parent=15 // pred_check_branch
          %819 = sbr.rel (%p817) target = $region64
        $region63: #{tpu_custom_call.1} parent=15 // pred_region
          %s820 = sand.u32 %s53, 1
          %s821 = scalar_lea.sflag [#allocation18], %s820
          %s822 = sand.u32 %s349, 1
          %s823 = scalar_lea.vmem [#allocation19], %s822
          %825 = vsyncadd %s821, 0
          %s826 = scalar_lea.hbm %s11, %s53
          %s828 = sshll.u32 %s826, 4
          %s829 = int_to_ptr.hbm [resolvable:$true] %s828
          %s830 = sshll.u32 %s823, 4
          %s831 = int_to_ptr.vmem [resolvable:$true] %s830
          %833 = dma.hbm_to_vmem [thread:$0]  %s829, 16, %s831, %s821
        $region64: #{tpu_custom_call.1} parent=15 // pred_fallthru
          _
        // Predicated region
        $region65: #{tpu_custom_call.1} parent=15 // pred_check
          %p834 = pneg %p385
        $region66: #{tpu_custom_call.1} parent=15 // pred_check_branch
          %836 = sbr.rel (%p834) target = $region68
        $region67: #{tpu_custom_call.1} parent=15 // pred_region
          %s837 = sand.u32 %s53, 1
          %s838 = scalar_lea.sflag [#allocation21], %s837
          %s839 = sand.u32 %s375, 1
          %s840 = smul.addr %s839, 128
          %s841 = scalar_lea.vmem [#allocation20], %s840
          %843 = vsyncadd %s838, 0
          %s844 = smul.addr %s53, 32
          %s845 = smul.addr %s844, 4
          %s846 = scalar_lea.hbm %s12, %s845
          %s847 = sshll.u32 %s846, 4
          %s848 = int_to_ptr.hbm [resolvable:$true] %s847
          %s849 = sshll.u32 %s841, 4
          %s850 = int_to_ptr.vmem [resolvable:$true] %s849
          %855 = dma.hbm_to_vmem [thread:$0]  %s848, 2048, %s850, %s838, 128, 128, 8
        $region68: #{tpu_custom_call.1} parent=15 // pred_fallthru
          _
        // Predicated region
        $region69: #{tpu_custom_call.1} parent=15 // pred_check
          %p856 = pneg %p411
        $region70: #{tpu_custom_call.1} parent=15 // pred_check_branch
          %858 = sbr.rel (%p856) target = $region72
        $region71: #{tpu_custom_call.1} parent=15 // pred_region
          %p859 = scmp.lt.s32.totalorder %s53, 1
          %s860 = scalar_select %p859, %s53, 1
          %s861 = smul.addr %s860, 2
          %s862 = scalar_lea.vmem %s13, %s861
        $region72: #{tpu_custom_call.1} parent=15 // pred_fallthru
          _
        // Predicated region
        $region73: #{tpu_custom_call.1} parent=15 // pred_check
          %p863 = pneg %p437
        $region74: #{tpu_custom_call.1} parent=15 // pred_check_branch
          %865 = sbr.rel (%p863) target = $region76
        $region75: #{tpu_custom_call.1} parent=15 // pred_region
          %s866 = sand.u32 %s53, 1
          %s867 = scalar_lea.sflag [#allocation21], %s866
          %s868 = sand.u32 %s427, 1
          %s869 = smul.addr %s868, 128
          %s870 = scalar_lea.vmem [#allocation22], %s869
          %872 = vsyncadd %s867, 0
          %s873 = smul.addr %s53, 32
          %s874 = smul.addr %s873, 4
          %s875 = scalar_lea.hbm %s14, %s874
          %s876 = sshll.u32 %s875, 4
          %s877 = int_to_ptr.hbm [resolvable:$true] %s876
          %s878 = sshll.u32 %s870, 4
          %s879 = int_to_ptr.vmem [resolvable:$true] %s878
          %884 = dma.hbm_to_vmem [thread:$0]  %s877, 2048, %s879, %s867, 64, 64, 4
        $region76: #{tpu_custom_call.1} parent=15 // pred_fallthru
          _
        // Predicated region
        $region77: #{tpu_custom_call.1} parent=15 // pred_check
          %p885 = pneg %p463
        $region78: #{tpu_custom_call.1} parent=15 // pred_check_branch
          %887 = sbr.rel (%p885) target = $region80
        $region79: #{tpu_custom_call.1} parent=15 // pred_region
          %p888 = scmp.lt.s32.totalorder %s53, 1
          %s889 = scalar_select %p888, %s53, 1
          %s890 = scalar_lea.vmem %s15, %s889
        $region80: #{tpu_custom_call.1} parent=15 // pred_fallthru
          _
        // Predicated region
        $region81: #{tpu_custom_call.1} parent=15 // pred_check
          %p891 = pneg %p489
        $region82: #{tpu_custom_call.1} parent=15 // pred_check_branch
          %893 = sbr.rel (%p891) target = $region84
        $region83: #{tpu_custom_call.1} parent=15 // pred_region
          %p894 = scmp.lt.s32.totalorder %s53, 1
          %s895 = scalar_select %p894, %s53, 1
          %s896 = scalar_lea.vmem %s16, %s895
        $region84: #{tpu_custom_call.1} parent=15 // pred_fallthru
          _
        // Predicated region
        $region85: #{tpu_custom_call.1} parent=15 // pred_check
          %p897 = pneg %p515
        $region86: #{tpu_custom_call.1} parent=15 // pred_check_branch
          %899 = sbr.rel (%p897) target = $region88
        $region87: #{tpu_custom_call.1} parent=15 // pred_region
          %p900 = scmp.lt.s32.totalorder %s53, 1
          %s901 = scalar_select %p900, %s53, 1
          %s902 = scalar_lea.vmem %s17, %s901
        $region88: #{tpu_custom_call.1} parent=15 // pred_fallthru
          _
        // Predicated region
        $region89: #{tpu_custom_call.1} parent=15 // pred_check
          %p903 = pneg %p541
        $region90: #{tpu_custom_call.1} parent=15 // pred_check_branch
          %905 = sbr.rel (%p903) target = $region92
        $region91: #{tpu_custom_call.1} parent=15 // pred_region
          %s906 = sand.u32 %s531, 1
          %s907 = scalar_lea.sflag [#allocation24], %s906
          %s908 = sand.u32 %s531, 1
          %s909 = smul.addr %s908, 64
          %s910 = scalar_lea.vmem [#allocation23], %s909
          %912 = vsyncadd %s907, 0
          %s913 = smul.addr %s53, 16
          %s914 = smul.addr %s913, 4
          %s915 = scalar_lea.hbm %s18, %s914
          %s916 = sshll.u32 %s915, 4
          %s917 = int_to_ptr.hbm [resolvable:$true] %s916
          %s918 = sshll.u32 %s910, 4
          %s919 = int_to_ptr.vmem [resolvable:$true] %s918
          %924 = dma.hbm_to_vmem [thread:$0]  %s917, 1024, %s919, %s907, 64, 64, 4
        $region92: #{tpu_custom_call.1} parent=15 // pred_fallthru
          _
        // Predicated region
        $region93: #{tpu_custom_call.1} parent=15 // pred_check
          %p925 = pneg %p567
        $region94: #{tpu_custom_call.1} parent=15 // pred_check_branch
          %927 = sbr.rel (%p925) target = $region96
        $region95: #{tpu_custom_call.1} parent=15 // pred_region
          %p928 = scmp.lt.s32.totalorder %s53, 1
          %s929 = scalar_select %p928, %s53, 1
          %s930 = scalar_lea.vmem %s19, %s929
        $region96: #{tpu_custom_call.1} parent=15 // pred_fallthru
          _
      $region16: #{tpu_custom_call.1} parent=5 // pred_fallthru
        _
      %p931 = scmp.le.s32.totalorder 1, %s53
      %p932 = scmp.lt.s32.totalorder %s53, 3
      %p933 = pnand %p931, %p932
      %p934 = pneg %p933
      // Predicated region
      $region97: #{tpu_custom_call.1} parent=5 // pred_check
        _
      $region98: #{tpu_custom_call.1} parent=5 // pred_check_branch
        %936 = sbr.rel (%p933) target = $region100
      $region99: #{tpu_custom_call.1} parent=5 // pred_region
        %s937 = ssub.s32 %s53, 1
        %s938 = sand.u32 %s66, 1
        %s939 = scalar_lea.sflag [#allocation3], %s938
        %s940 = sand.u32 %s66, 1
        %s941 = smul.addr %s940, 16
        %s942 = scalar_lea.vmem [#allocation2], %s941
        // Predicated region
        $region101: #{tpu_custom_call.1} parent=99 // pred_check
          %p943 = pneg %p79
        $region102: #{tpu_custom_call.1} parent=99 // pred_check_branch
          %945 = sbr.rel (%p943) target = $region104
        $region103: #{tpu_custom_call.1} parent=99 // pred_region
          %947 = dma.done %s939, 256
        $region104: #{tpu_custom_call.1} parent=99 // pred_fallthru
          _
        %s948 = sand.u32 %s58, 1
        %s949 = scalar_lea.sflag [#allocation6], %s948
        %s950 = sand.u32 %s92, 1
        %s951 = smul.addr %s950, 2
        %s952 = scalar_lea.vmem [#allocation5], %s951
        // Predicated region
        $region105: #{tpu_custom_call.1} parent=99 // pred_check
          %p953 = pneg %p105
        $region106: #{tpu_custom_call.1} parent=99 // pred_check_branch
          %955 = sbr.rel (%p953) target = $region108
        $region107: #{tpu_custom_call.1} parent=99 // pred_region
          %957 = dma.done %s949, 32
        $region108: #{tpu_custom_call.1} parent=99 // pred_fallthru
          _
        %s958 = sand.u32 %s58, 1
        %s959 = scalar_lea.sflag [#allocation6], %s958
        %s960 = sand.u32 %s118, 1
        %s961 = scalar_lea.vmem [#allocation7], %s960
        // Predicated region
        $region109: #{tpu_custom_call.1} parent=99 // pred_check
          %p962 = pneg %p131
        $region110: #{tpu_custom_call.1} parent=99 // pred_check_branch
          %964 = sbr.rel (%p962) target = $region112
        $region111: #{tpu_custom_call.1} parent=99 // pred_region
          %966 = dma.done %s959, 16
        $region112: #{tpu_custom_call.1} parent=99 // pred_fallthru
          _
        %s967 = sand.u32 %s58, 1
        %s968 = scalar_lea.sflag [#allocation9], %s967
        %s969 = sand.u32 %s144, 1
        %s970 = scalar_lea.vmem [#allocation8], %s969
        // Predicated region
        $region113: #{tpu_custom_call.1} parent=99 // pred_check
          %p971 = pneg %p157
        $region114: #{tpu_custom_call.1} parent=99 // pred_check_branch
          %973 = sbr.rel (%p971) target = $region116
        $region115: #{tpu_custom_call.1} parent=99 // pred_region
          %975 = dma.done %s968, 16
        $region116: #{tpu_custom_call.1} parent=99 // pred_fallthru
          _
        %s976 = sand.u32 %s58, 1
        %s977 = scalar_lea.sflag [#allocation9], %s976
        %s978 = sand.u32 %s170, 1
        %s979 = smul.addr %s978, 32
        %s980 = scalar_lea.vmem [#allocation10], %s979
        // Predicated region
        $region117: #{tpu_custom_call.1} parent=99 // pred_check
          %p981 = pneg %p183
        $region118: #{tpu_custom_call.1} parent=99 // pred_check_branch
          %983 = sbr.rel (%p981) target = $region120
        $region119: #{tpu_custom_call.1} parent=99 // pred_region
          %985 = dma.done %s977, 512
        $region120: #{tpu_custom_call.1} parent=99 // pred_fallthru
          _
        %s986 = sand.u32 %s58, 1
        %s987 = scalar_lea.sflag [#allocation12], %s986
        %s988 = sand.u32 %s196, 1
        %s989 = scalar_lea.vmem [#allocation11], %s988
        // Predicated region
        $region121: #{tpu_custom_call.1} parent=99 // pred_check
          %p990 = pneg %p209
        $region122: #{tpu_custom_call.1} parent=99 // pred_check_branch
          %992 = sbr.rel (%p990) target = $region124
        $region123: #{tpu_custom_call.1} parent=99 // pred_region
          %994 = dma.done %s987, 16
        $region124: #{tpu_custom_call.1} parent=99 // pred_fallthru
          _
        %s995 = sand.u32 %s58, 1
        %s996 = scalar_lea.sflag [#allocation12], %s995
        %s997 = sand.u32 %s222, 1
        %s998 = smul.addr %s997, 192
        %s999 = scalar_lea.vmem [#allocation13], %s998
        // Predicated region
        $region125: #{tpu_custom_call.1} parent=99 // pred_check
          %p1000 = pneg %p235
        $region126: #{tpu_custom_call.1} parent=99 // pred_check_branch
          %1002 = sbr.rel (%p1000) target = $region128
        $region127: #{tpu_custom_call.1} parent=99 // pred_region
          %1004 = dma.done %s996, 3072
        $region128: #{tpu_custom_call.1} parent=99 // pred_fallthru
          _
        %s1005 = sand.u32 %s58, 1
        %s1006 = scalar_lea.sflag [#allocation15], %s1005
        %s1007 = sand.u32 %s274, 1
        %s1008 = smul.addr %s1007, 64
        %s1009 = scalar_lea.vmem [#allocation14], %s1008
        // Predicated region
        $region129: #{tpu_custom_call.1} parent=99 // pred_check
          %p1010 = pneg %p287
        $region130: #{tpu_custom_call.1} parent=99 // pred_check_branch
          %1012 = sbr.rel (%p1010) target = $region132
        $region131: #{tpu_custom_call.1} parent=99 // pred_region
          %1014 = dma.done %s1006, 1024
        $region132: #{tpu_custom_call.1} parent=99 // pred_fallthru
          _
        %s1015 = sand.u32 %s58, 1
        %s1016 = scalar_lea.sflag [#allocation15], %s1015
        %s1017 = sand.u32 %s300, 1
        %s1018 = scalar_lea.vmem [#allocation16], %s1017
        // Predicated region
        $region133: #{tpu_custom_call.1} parent=99 // pred_check
          %p1019 = pneg %p313
        $region134: #{tpu_custom_call.1} parent=99 // pred_check_branch
          %1021 = sbr.rel (%p1019) target = $region136
        $region135: #{tpu_custom_call.1} parent=99 // pred_region
          %1023 = dma.done %s1016, 16
        $region136: #{tpu_custom_call.1} parent=99 // pred_fallthru
          _
        %s1024 = sand.u32 %s58, 1
        %s1025 = scalar_lea.sflag [#allocation18], %s1024
        %s1026 = sand.u32 %s326, 1
        %s1027 = scalar_lea.vmem [#allocation17], %s1026
        // Predicated region
        $region137: #{tpu_custom_call.1} parent=99 // pred_check
          %p1028 = pneg %p339
        $region138: #{tpu_custom_call.1} parent=99 // pred_check_branch
          %1030 = sbr.rel (%p1028) target = $region140
        $region139: #{tpu_custom_call.1} parent=99 // pred_region
          %1032 = dma.done %s1025, 16
        $region140: #{tpu_custom_call.1} parent=99 // pred_fallthru
          _
        %s1033 = sand.u32 %s58, 1
        %s1034 = scalar_lea.sflag [#allocation18], %s1033
        %s1035 = sand.u32 %s352, 1
        %s1036 = scalar_lea.vmem [#allocation19], %s1035
        // Predicated region
        $region141: #{tpu_custom_call.1} parent=99 // pred_check
          %p1037 = pneg %p365
        $region142: #{tpu_custom_call.1} parent=99 // pred_check_branch
          %1039 = sbr.rel (%p1037) target = $region144
        $region143: #{tpu_custom_call.1} parent=99 // pred_region
          %1041 = dma.done %s1034, 16
        $region144: #{tpu_custom_call.1} parent=99 // pred_fallthru
          _
        %s1042 = sand.u32 %s58, 1
        %s1043 = scalar_lea.sflag [#allocation21], %s1042
        %s1044 = sand.u32 %s378, 1
        %s1045 = smul.addr %s1044, 128
        %s1046 = scalar_lea.vmem [#allocation20], %s1045
        // Predicated region
        $region145: #{tpu_custom_call.1} parent=99 // pred_check
          %p1047 = pneg %p391
        $region146: #{tpu_custom_call.1} parent=99 // pred_check_branch
          %1049 = sbr.rel (%p1047) target = $region148
        $region147: #{tpu_custom_call.1} parent=99 // pred_region
          %1051 = dma.done %s1043, 2048
        $region148: #{tpu_custom_call.1} parent=99 // pred_fallthru
          _
        %s1052 = sand.u32 %s58, 1
        %s1053 = scalar_lea.sflag [#allocation21], %s1052
        %s1054 = sand.u32 %s430, 1
        %s1055 = smul.addr %s1054, 128
        %s1056 = scalar_lea.vmem [#allocation22], %s1055
        // Predicated region
        $region149: #{tpu_custom_call.1} parent=99 // pred_check
          %p1057 = pneg %p443
        $region150: #{tpu_custom_call.1} parent=99 // pred_check_branch
          %1059 = sbr.rel (%p1057) target = $region152
        $region151: #{tpu_custom_call.1} parent=99 // pred_region
          %1061 = dma.done %s1053, 2048
        $region152: #{tpu_custom_call.1} parent=99 // pred_fallthru
          _
        %s1062 = sand.u32 %s534, 1
        %s1063 = scalar_lea.sflag [#allocation24], %s1062
        %s1064 = sand.u32 %s534, 1
        %s1065 = smul.addr %s1064, 64
        %s1066 = scalar_lea.vmem [#allocation23], %s1065
        // Predicated region
        $region153: #{tpu_custom_call.1} parent=99 // pred_check
          %p1067 = pneg %p547
        $region154: #{tpu_custom_call.1} parent=99 // pred_check_branch
          %1069 = sbr.rel (%p1067) target = $region156
        $region155: #{tpu_custom_call.1} parent=99 // pred_region
          %1071 = dma.done %s1063, 1024
        $region156: #{tpu_custom_call.1} parent=99 // pred_fallthru
          _
        %s1072 = sand.u32 %s66, 1
        %s1073 = scalar_lea.sflag [#allocation3], %s1072
        %s1074 = sand.u32 %s66, 1
        %s1075 = smul.addr %s1074, 16
        %s1076 = scalar_lea.vmem [#allocation2], %s1075
        %p1077 = pneg %p79
        %p1078 = pneg %p76
        %s1079 = sand.u32 %s58, 1
        %s1080 = scalar_lea.sflag [#allocation6], %s1079
        %s1081 = sand.u32 %s92, 1
        %s1082 = smul.addr %s1081, 2
        %s1083 = scalar_lea.vmem [#allocation5], %s1082
        %p1084 = pneg %p105
        %p1085 = pneg %p102
        %s1086 = sand.u32 %s58, 1
        %s1087 = scalar_lea.sflag [#allocation6], %s1086
        %s1088 = sand.u32 %s118, 1
        %s1089 = scalar_lea.vmem [#allocation7], %s1088
        %p1090 = pneg %p131
        %p1091 = pneg %p128
        %s1092 = sand.u32 %s58, 1
        %s1093 = scalar_lea.sflag [#allocation9], %s1092
        %s1094 = sand.u32 %s144, 1
        %s1095 = scalar_lea.vmem [#allocation8], %s1094
        %p1096 = pneg %p157
        %p1097 = pneg %p154
        %s1098 = sand.u32 %s58, 1
        %s1099 = scalar_lea.sflag [#allocation9], %s1098
        %s1100 = sand.u32 %s170, 1
        %s1101 = smul.addr %s1100, 32
        %s1102 = scalar_lea.vmem [#allocation10], %s1101
        %p1103 = pneg %p183
        %p1104 = pneg %p180
        %s1105 = sand.u32 %s58, 1
        %s1106 = scalar_lea.sflag [#allocation12], %s1105
        %s1107 = sand.u32 %s196, 1
        %s1108 = scalar_lea.vmem [#allocation11], %s1107
        %p1109 = pneg %p209
        %p1110 = pneg %p206
        %s1111 = sand.u32 %s58, 1
        %s1112 = scalar_lea.sflag [#allocation12], %s1111
        %s1113 = sand.u32 %s222, 1
        %s1114 = smul.addr %s1113, 192
        %s1115 = scalar_lea.vmem [#allocation13], %s1114
        %p1116 = pneg %p235
        %p1117 = pneg %p232
        %p1118 = scmp.lt.s32.totalorder %s58, 1
        %s1119 = scalar_select %p1118, %s58, 1
        %s1120 = smul.addr %s1119, 3
        %s1121 = scalar_lea.vmem %s7, %s1120
        %p1122 = pneg %p261
        %p1123 = pneg %p258
        %s1124 = sand.u32 %s58, 1
        %s1125 = scalar_lea.sflag [#allocation15], %s1124
        %s1126 = sand.u32 %s274, 1
        %s1127 = smul.addr %s1126, 64
        %s1128 = scalar_lea.vmem [#allocation14], %s1127
        %p1129 = pneg %p287
        %p1130 = pneg %p284
        %s1131 = sand.u32 %s58, 1
        %s1132 = scalar_lea.sflag [#allocation15], %s1131
        %s1133 = sand.u32 %s300, 1
        %s1134 = scalar_lea.vmem [#allocation16], %s1133
        %p1135 = pneg %p313
        %p1136 = pneg %p310
        %s1137 = sand.u32 %s58, 1
        %s1138 = scalar_lea.sflag [#allocation18], %s1137
        %s1139 = sand.u32 %s326, 1
        %s1140 = scalar_lea.vmem [#allocation17], %s1139
        %p1141 = pneg %p339
        %p1142 = pneg %p336
        %s1143 = sand.u32 %s58, 1
        %s1144 = scalar_lea.sflag [#allocation18], %s1143
        %s1145 = sand.u32 %s352, 1
        %s1146 = scalar_lea.vmem [#allocation19], %s1145
        %p1147 = pneg %p365
        %p1148 = pneg %p362
        %s1149 = sand.u32 %s58, 1
        %s1150 = scalar_lea.sflag [#allocation21], %s1149
        %s1151 = sand.u32 %s378, 1
        %s1152 = smul.addr %s1151, 128
        %s1153 = scalar_lea.vmem [#allocation20], %s1152
        %p1154 = pneg %p391
        %p1155 = pneg %p388
        %p1156 = scmp.lt.s32.totalorder %s58, 1
        %s1157 = scalar_select %p1156, %s58, 1
        %s1158 = smul.addr %s1157, 2
        %s1159 = scalar_lea.vmem %s13, %s1158
        %p1160 = pneg %p417
        %p1161 = pneg %p414
        %s1162 = sand.u32 %s58, 1
        %s1163 = scalar_lea.sflag [#allocation21], %s1162
        %s1164 = sand.u32 %s430, 1
        %s1165 = smul.addr %s1164, 128
        %s1166 = scalar_lea.vmem [#allocation22], %s1165
        %p1167 = pneg %p443
        %p1168 = pneg %p440
        %p1169 = scmp.lt.s32.totalorder %s58, 1
        %s1170 = scalar_select %p1169, %s58, 1
        %s1171 = scalar_lea.vmem %s15, %s1170
        %p1172 = pneg %p469
        %p1173 = pneg %p466
        %p1174 = scmp.lt.s32.totalorder %s58, 1
        %s1175 = scalar_select %p1174, %s58, 1
        %s1176 = scalar_lea.vmem %s16, %s1175
        %p1177 = pneg %p495
        %p1178 = pneg %p492
        %p1179 = scmp.lt.s32.totalorder %s58, 1
        %s1180 = scalar_select %p1179, %s58, 1
        %s1181 = scalar_lea.vmem %s17, %s1180
        %p1182 = pneg %p521
        %p1183 = pneg %p518
        %s1184 = sand.u32 %s534, 1
        %s1185 = scalar_lea.sflag [#allocation24], %s1184
        %s1186 = sand.u32 %s534, 1
        %s1187 = smul.addr %s1186, 64
        %s1188 = scalar_lea.vmem [#allocation23], %s1187
        %p1189 = pneg %p547
        %p1190 = pneg %p544
        %p1191 = scmp.lt.s32.totalorder %s58, 1
        %s1192 = scalar_select %p1191, %s58, 1
        %s1193 = scalar_lea.vmem %s19, %s1192
        %p1194 = pneg %p573
        %p1195 = pneg %p570
        %p1196 = pneg %p599
        %p1197 = pneg %p596
        %s1198 = sand.u32 %s586, 1
        %s1199 = scalar_lea.sflag [#allocation4], %s1198
        %s1200 = sand.u32 %s586, 1
        %s1201 = smul.addr %s1200, 2
        %s1202 = scalar_lea.vmem [#allocation25], %s1201
        %p1203 = scmp.lt.s32.totalorder %s58, 1
        %s1204 = scalar_select %p1203, %s58, 1
        %s1205 = smul.addr %s1204, 3
        %s1206 = scalar_lea.vmem %s7, %s1205
        %p1207 = scmp.lt.s32.totalorder %s58, 1
        %s1208 = scalar_select %p1207, %s58, 1
        %s1209 = smul.addr %s1208, 2
        %s1210 = scalar_lea.vmem %s13, %s1209
        %p1211 = scmp.lt.s32.totalorder %s58, 1
        %s1212 = scalar_select %p1211, %s58, 1
        %s1213 = scalar_lea.vmem %s15, %s1212
        %p1214 = scmp.lt.s32.totalorder %s58, 1
        %s1215 = scalar_select %p1214, %s58, 1
        %s1216 = scalar_lea.vmem %s16, %s1215
        %p1217 = scmp.lt.s32.totalorder %s58, 1
        %s1218 = scalar_select %p1217, %s58, 1
        %s1219 = scalar_lea.vmem %s17, %s1218
        %p1220 = scmp.lt.s32.totalorder %s58, 1
        %s1221 = scalar_select %p1220, %s58, 1
        %s1222 = scalar_lea.vmem %s19, %s1221
        %v1224 = vld [vmem:[%s942] sm:$0xff]
        %v1225 = vld [vmem:[%s942 + $0x8] sm:$0xff]
        %vm1226 = vcmask 523264
        %v1227 = vsel %vm1226, %v1224, 0.0
        %1228 = vadd.xlane.f32.xlu0 %v1227
        %v1229 = vpop.xlane.xlu0 %1228
        %v1230 = vsel %vm1226, %v1225, 0.0
        %1231 = vadd.xlane.f32.xlu0 %v1230
        %v1232 = vpop.xlane.xlu0 %1231
        %v1233 = vrcp.pop 64.0
        %v1234 = vmul.f32 64.0, %v1233
        %v1235 = vsub.f32 1.0, %v1234
        %v1236 = vmul.f32 %v1233, %v1235
        %v1237 = vadd.f32 %v1233, %v1236
        %vm1238 = vweird.f32 %v1233
        %v1239 = vsel %vm1238, %v1233, %v1237
        %v1240 = vmul.f32 %v1229, %v1239
        %v1241 = vmul.f32 %v1232, %v1239
        %v1242 = vsub.f32 %v1224, %v1240
        %v1243 = vsub.f32 %v1225, %v1241
        %v1244 = vmul.f32 %v1242, %v1242
        %v1245 = vmul.f32 %v1243, %v1243
        %v1246 = vsel %vm1226, %v1244, 0.0
        %1247 = vadd.xlane.f32.xlu0 %v1246
        %v1248 = vpop.xlane.xlu0 %1247
        %v1249 = vsel %vm1226, %v1245, 0.0
        %1250 = vadd.xlane.f32.xlu0 %v1249
        %v1251 = vpop.xlane.xlu0 %1250
        %v1252 = vmul.f32 %v1248, %v1239
        %v1253 = vmul.f32 %v1251, %v1239
        %v1254 = vadd.f32 %v1252, 1e-12
        %v1255 = vadd.f32 %v1253, 1e-12
        %v1256 = vrsqrt.pop %v1254
        %v1257 = vmul.f32 %v1256, %v1254
        %v1258 = vmul.f32 %v1257, %v1256
        %v1259 = vmul.f32 0.5, %v1258
        %v1260 = vsub.f32 1.5, %v1259
        %v1261 = vmul.f32 %v1256, %v1260
        %vm1262 = vweird.f32 %v1254
        %vm1263 = vweird.f32 %v1256
        %vm1264 = vmor %vm1262, %vm1263
        %v1265 = vsel %vm1264, %v1256, %v1261
        %v1266 = vrsqrt.pop %v1255
        %v1267 = vmul.f32 %v1266, %v1255
        %v1268 = vmul.f32 %v1267, %v1266
        %v1269 = vmul.f32 0.5, %v1268
        %v1270 = vsub.f32 1.5, %v1269
        %v1271 = vmul.f32 %v1266, %v1270
        %vm1272 = vweird.f32 %v1255
        %vm1273 = vweird.f32 %v1266
        %vm1274 = vmor %vm1272, %vm1273
        %v1275 = vsel %vm1274, %v1266, %v1271
        %v1276 = vmul.f32 %v1242, %v1265
        %v1277 = vmul.f32 %v1243, %v1275
        %v1278 = vld [vmem:[%s961] sm:$0x1]
        %v1280 = vperm.slane %v1278, 0
        %v1282 = vmul.f32 %v1276, %v1280
        %v1283 = vmul.f32 %v1277, %v1280
        %v1284 = vld [vmem:[%s970] sm:$0x1]
        %v1286 = vperm.slane %v1284, 0
        %v1288 = vadd.f32 %v1282, %v1286
        %v1289 = vadd.f32 %v1283, %v1286
        %v1290 = vpack.c.bf16 %v1289, %v1288
        %v1291 = vld [vmem:[%s980] sm:$0xf]
        %v1292 = vld [vmem:[%s980 + $0x4] sm:$0xf]
        %v1293 = vld [vmem:[%s980 + $0x8] sm:$0xf]
        %v1294 = vld [vmem:[%s980 + $0xc] sm:$0xf]
        %v1295 = vld [vmem:[%s980 + $0x10] sm:$0xf]
        %v1296 = vld [vmem:[%s980 + $0x14] sm:$0xf]
        %v1297 = vld [vmem:[%s980 + $0x18] sm:$0xf]
        %v1298 = vld [vmem:[%s980 + $0x1c] sm:$0xf]
        %v1299 = vld [vmem:[%s989] sm:$0x1]
        %v1301 = vperm.slane %v1299, 0
        %v1311 = vunpack.c.l.b16 %v1291
        %v1312 = vunpack.c.l.b16 %v1292
        %v1313 = vunpack.c.l.b16 %v1293
        %v1314 = vunpack.c.l.b16 %v1294
        %v1315 = vunpack.c.l.b16 %v1295
        %v1316 = vunpack.c.l.b16 %v1296
        %v1317 = vunpack.c.l.b16 %v1297
        %v1318 = vunpack.c.l.b16 %v1298
        %v1319 = vpack.c.b16 %v1312, %v1311
        %v1320 = vpack.c.b16 %v1314, %v1313
        %v1321 = vpack.c.b16 %v1316, %v1315
        %v1322 = vpack.c.b16 %v1318, %v1317
        %v1328 = vsel %vm1226, %v1290, 0
        %1330 = vmatpush.bf16.msra.mxu0 0
        %1331 = vmatpush.bf16.msra.mxu0 0
        %1332 = vmatpush.bf16.msra.mxu0 0
        %1333 = vmatpush.bf16.msra.mxu0 0
        %1334 = vmatpush.bf16.msra.mxu0 %v1322
        %1335 = vmatpush.bf16.msra.mxu0 %v1321
        %1336 = vmatpush.bf16.msra.mxu0 %v1320
        %1337 = vmatpush.bf16.msra.mxu0 %v1319
        %1338 = vmatmul.bf16.gmra.mxu0 %v1328
        %v1339 = vpop.f32.mrf.mxu0
        %v1340 = vadd.f32 %v1301, %v1339
        %v1341 = vpop.f32.mrf.mxu0
        %v1342 = vadd.f32 %v1301, %v1341
        %1343 = vdwg.mxu0
        %v1344 = vld [vmem:[%s952] sm:$0x3]
        %v1345 = vpack.c.bf16 %v1342, %v1340
        %v1346 = vld [vmem:[%s999] sm:$0xff]
        %v1347 = vld [vmem:[%s999 + $0x8] sm:$0xf]
        %v1348 = vld [vmem:[%s999 + $0xc] sm:$0xff]
        %v1349 = vld [vmem:[%s999 + $0x14] sm:$0xf]
        %v1350 = vld [vmem:[%s999 + $0x18] sm:$0xff]
        %v1351 = vld [vmem:[%s999 + $0x20] sm:$0xf]
        %v1352 = vld [vmem:[%s999 + $0x24] sm:$0xff]
        %v1353 = vld [vmem:[%s999 + $0x2c] sm:$0xf]
        %v1354 = vld [vmem:[%s999 + $0x30] sm:$0xff]
        %v1355 = vld [vmem:[%s999 + $0x38] sm:$0xf]
        %v1356 = vld [vmem:[%s999 + $0x3c] sm:$0xff]
        %v1357 = vld [vmem:[%s999 + $0x44] sm:$0xf]
        %v1358 = vld [vmem:[%s999 + $0x48] sm:$0xff]
        %v1359 = vld [vmem:[%s999 + $0x50] sm:$0xf]
        %v1360 = vld [vmem:[%s999 + $0x54] sm:$0xff]
        %v1361 = vld [vmem:[%s999 + $0x5c] sm:$0xf]
        %v1362 = vld [vmem:[%s999 + $0x60] sm:$0xff]
        %v1363 = vld [vmem:[%s999 + $0x68] sm:$0xf]
        %v1364 = vld [vmem:[%s999 + $0x6c] sm:$0xff]
        %v1365 = vld [vmem:[%s999 + $0x74] sm:$0xf]
        %v1366 = vld [vmem:[%s999 + $0x78] sm:$0xff]
        %v1367 = vld [vmem:[%s999 + $0x80] sm:$0xf]
        %v1368 = vld [vmem:[%s999 + $0x84] sm:$0xff]
        %v1369 = vld [vmem:[%s999 + $0x8c] sm:$0xf]
        %v1370 = vld [vmem:[%s999 + $0x90] sm:$0xff]
        %v1371 = vld [vmem:[%s999 + $0x98] sm:$0xf]
        %v1372 = vld [vmem:[%s999 + $0x9c] sm:$0xff]
        %v1373 = vld [vmem:[%s999 + $0xa4] sm:$0xf]
        %v1374 = vld [vmem:[%s999 + $0xa8] sm:$0xff]
        %v1375 = vld [vmem:[%s999 + $0xb0] sm:$0xf]
        %v1376 = vld [vmem:[%s999 + $0xb4] sm:$0xff]
        %v1377 = vld [vmem:[%s999 + $0xbc] sm:$0xf]
        %v1378 = vld [vmem:[%s1206] sm:$0x7]
        %v1380 = vperm.slane %v1378, 0
        %v1381 = vperm.slane %v1378, 1
        %v1382 = vperm.slane %v1378, 2
        %v1418 = vunpack.c.l.b16 %v1346
        %v1419 = vunpack.c.h.b16 %v1346
        %v1420 = vunpack.c.l.b16 %v1347
        %v1421 = vunpack.c.l.b16 %v1348
        %v1422 = vunpack.c.h.b16 %v1348
        %v1423 = vunpack.c.l.b16 %v1349
        %v1424 = vunpack.c.l.b16 %v1350
        %v1425 = vunpack.c.h.b16 %v1350
        %v1426 = vunpack.c.l.b16 %v1351
        %v1427 = vunpack.c.l.b16 %v1352
        %v1428 = vunpack.c.h.b16 %v1352
        %v1429 = vunpack.c.l.b16 %v1353
        %v1430 = vunpack.c.l.b16 %v1354
        %v1431 = vunpack.c.h.b16 %v1354
        %v1432 = vunpack.c.l.b16 %v1355
        %v1433 = vunpack.c.l.b16 %v1356
        %v1434 = vunpack.c.h.b16 %v1356
        %v1435 = vunpack.c.l.b16 %v1357
        %v1436 = vunpack.c.l.b16 %v1358
        %v1437 = vunpack.c.h.b16 %v1358
        %v1438 = vunpack.c.l.b16 %v1359
        %v1439 = vunpack.c.l.b16 %v1360
        %v1440 = vunpack.c.h.b16 %v1360
        %v1441 = vunpack.c.l.b16 %v1361
        %v1442 = vunpack.c.l.b16 %v1362
        %v1443 = vunpack.c.h.b16 %v1362
        %v1444 = vunpack.c.l.b16 %v1363
        %v1445 = vunpack.c.l.b16 %v1364
        %v1446 = vunpack.c.h.b16 %v1364
        %v1447 = vunpack.c.l.b16 %v1365
        %v1448 = vunpack.c.l.b16 %v1366
        %v1449 = vunpack.c.h.b16 %v1366
        %v1450 = vunpack.c.l.b16 %v1367
        %v1451 = vunpack.c.l.b16 %v1368
        %v1452 = vunpack.c.h.b16 %v1368
        %v1453 = vunpack.c.l.b16 %v1369
        %v1454 = vunpack.c.l.b16 %v1370
        %v1455 = vunpack.c.h.b16 %v1370
        %v1456 = vunpack.c.l.b16 %v1371
        %v1457 = vunpack.c.l.b16 %v1372
        %v1458 = vunpack.c.h.b16 %v1372
        %v1459 = vunpack.c.l.b16 %v1373
        %v1460 = vunpack.c.l.b16 %v1374
        %v1461 = vunpack.c.h.b16 %v1374
        %v1462 = vunpack.c.l.b16 %v1375
        %v1463 = vunpack.c.l.b16 %v1376
        %v1464 = vunpack.c.h.b16 %v1376
        %v1465 = vunpack.c.l.b16 %v1377
        %v1466 = vpack.c.b16 %v1421, %v1418
        %v1467 = vpack.c.b16 %v1422, %v1419
        %v1468 = vpack.c.b16 %v1423, %v1420
        %v1469 = vpack.c.b16 %v1427, %v1424
        %v1470 = vpack.c.b16 %v1428, %v1425
        %v1471 = vpack.c.b16 %v1429, %v1426
        %v1472 = vpack.c.b16 %v1433, %v1430
        %v1473 = vpack.c.b16 %v1434, %v1431
        %v1474 = vpack.c.b16 %v1435, %v1432
        %v1475 = vpack.c.b16 %v1439, %v1436
        %v1476 = vpack.c.b16 %v1440, %v1437
        %v1477 = vpack.c.b16 %v1441, %v1438
        %v1478 = vpack.c.b16 %v1445, %v1442
        %v1479 = vpack.c.b16 %v1446, %v1443
        %v1480 = vpack.c.b16 %v1447, %v1444
        %v1481 = vpack.c.b16 %v1451, %v1448
        %v1482 = vpack.c.b16 %v1452, %v1449
        %v1483 = vpack.c.b16 %v1453, %v1450
        %v1484 = vpack.c.b16 %v1457, %v1454
        %v1485 = vpack.c.b16 %v1458, %v1455
        %v1486 = vpack.c.b16 %v1459, %v1456
        %v1487 = vpack.c.b16 %v1463, %v1460
        %v1488 = vpack.c.b16 %v1464, %v1461
        %v1489 = vpack.c.b16 %v1465, %v1462
        %1514 = vmatpush.bf16.msra.mxu0 %v1487
        %1515 = vmatpush.bf16.msra.mxu0 %v1484
        %1516 = vmatpush.bf16.msra.mxu0 %v1481
        %1517 = vmatpush.bf16.msra.mxu0 %v1478
        %1518 = vmatpush.bf16.msra.mxu0 %v1475
        %1519 = vmatpush.bf16.msra.mxu0 %v1472
        %1520 = vmatpush.bf16.msra.mxu0 %v1469
        %1521 = vmatpush.bf16.msra.mxu0 %v1466
        %1522 = vmatmul.bf16.gmra.mxu0 %v1345
        %v1523 = vpop.f32.mrf.mxu0
        %v1524 = vadd.f32 %v1380, %v1523
        %v1525 = vpop.f32.mrf.mxu0
        %v1526 = vadd.f32 %v1380, %v1525
        %1527 = vdwg.mxu0
        %1528 = vmatpush.bf16.msra.mxu0 %v1488
        %1529 = vmatpush.bf16.msra.mxu0 %v1485
        %1530 = vmatpush.bf16.msra.mxu0 %v1482
        %1531 = vmatpush.bf16.msra.mxu0 %v1479
        %1532 = vmatpush.bf16.msra.mxu0 %v1476
        %1533 = vmatpush.bf16.msra.mxu0 %v1473
        %1534 = vmatpush.bf16.msra.mxu0 %v1470
        %1535 = vmatpush.bf16.msra.mxu0 %v1467
        %1536 = vmatmul.bf16.gmra.mxu0 %v1345
        %v1537 = vpop.f32.mrf.mxu0
        %v1538 = vadd.f32 %v1381, %v1537
        %v1539 = vpop.f32.mrf.mxu0
        %v1540 = vadd.f32 %v1381, %v1539
        %1541 = vdwg.mxu0
        %1542 = vmatpush.bf16.msra.mxu0 %v1489
        %1543 = vmatpush.bf16.msra.mxu0 %v1486
        %1544 = vmatpush.bf16.msra.mxu0 %v1483
        %1545 = vmatpush.bf16.msra.mxu0 %v1480
        %1546 = vmatpush.bf16.msra.mxu0 %v1477
        %1547 = vmatpush.bf16.msra.mxu0 %v1474
        %1548 = vmatpush.bf16.msra.mxu0 %v1471
        %1549 = vmatpush.bf16.msra.mxu0 %v1468
        %1550 = vmatmul.bf16.gmra.mxu0 %v1345
        %v1551 = vpop.f32.mrf.mxu0
        %v1552 = vadd.f32 %v1382, %v1551
        %v1553 = vpop.f32.mrf.mxu0
        %v1554 = vadd.f32 %v1382, %v1553
        %1555 = vdwg.mxu0
        %v1556 = vpack.c.bf16 %v1524, %v1524
        %v1557 = vpack.c.bf16 %v1538, %v1538
        %v1559 = vsel %vm1226, %v1556, 0
        %v1562 = vsel %vm1226, %v1557, 0
        %1564 = vmatpush.bf16.xpose.msra.mxu0 0
        %1565 = vmatpush.bf16.xpose.msra.mxu0 0
        %1566 = vmatpush.bf16.xpose.msra.mxu0 0
        %1567 = vmatpush.bf16.xpose.msra.mxu0 0
        %1568 = vmatpush.bf16.xpose.msra.mxu0 0
        %1569 = vmatpush.bf16.xpose.msra.mxu0 0
        %1570 = vmatpush.bf16.xpose.msra.mxu0 0
        %1571 = vmatpush.bf16.xpose.msra.mxu0 %v1562
        %1572 = vmatmul.bf16.gmra.mxu0 %v1559
        %v1573 = vpop.f32.mrf.mxu0
        %v1574 = vadd.f32 0.0, %v1573
        %v1575 = vpop.f32.mrf.mxu0
        %1576 = vdwg.mxu0
        %v1577 = vmul.f32 %v1574, 0.125
        %v1578 = vperm.slane %v1344, 0
        %v1579 = vadd.f32 %v1577, %v1578
        %vm1580 = vcmask 64512
        %v1581 = vsel %vm1580, %v1579, -inf
        %1582 = vmax.xlane.f32.xlu0 %v1581
        %v1583 = vpop.xlane.xlu0 %1582
        %v1584 = vsub.f32 %v1579, %v1583
        %v1585 = vmul.f32 %v1584, 1.442695
        %v1586 = vpow.pop %v1585
        %v1587 = vsel %vm1580, %v1586, 0.0
        %1588 = vadd.xlane.f32.xlu0 %v1587
        %v1589 = vpop.xlane.xlu0 %1588
        %v1590 = vrcp.pop %v1589
        %v1591 = vmul.f32 %v1586, %v1590
        %v1592 = vpack.c.bf16 %v1591, %v1591
        %v1593 = vpack.c.bf16 %v1552, %v1552
        %v1595 = vsel %vm1580, %v1592, 0
        %vm1597 = vcmask 1043456
        %v1599 = vsel %vm1597, %v1593, 0
        %1601 = vmatpush.bf16.msra.mxu0 0
        %1602 = vmatpush.bf16.msra.mxu0 0
        %1603 = vmatpush.bf16.msra.mxu0 0
        %1604 = vmatpush.bf16.msra.mxu0 0
        %1605 = vmatpush.bf16.msra.mxu0 0
        %1606 = vmatpush.bf16.msra.mxu0 0
        %1607 = vmatpush.bf16.msra.mxu0 0
        %1608 = vmatpush.bf16.msra.mxu0 %v1599
        %1609 = vmatmul.bf16.gmra.mxu0 %v1595
        %v1610 = vpop.f32.mrf.mxu0
        %v1611 = vadd.f32 0.0, %v1610
        %v1612 = vpop.f32.mrf.mxu0
        %1613 = vdwg.mxu0
        %v1614 = vpack.c.bf16 %v1611, %v1611
        %v1615 = vld [vmem:[%s1009] sm:$0xf]
        %v1616 = vld [vmem:[%s1009 + $0x4] sm:$0xf]
        %v1617 = vld [vmem:[%s1009 + $0x8] sm:$0xf]
        %v1618 = vld [vmem:[%s1009 + $0xc] sm:$0xf]
        %v1619 = vld [vmem:[%s1009 + $0x10] sm:$0xf]
        %v1620 = vld [vmem:[%s1009 + $0x14] sm:$0xf]
        %v1621 = vld [vmem:[%s1009 + $0x18] sm:$0xf]
        %v1622 = vld [vmem:[%s1009 + $0x1c] sm:$0xf]
        %1624 = vrot.lane.b32.xlu0 %v1556, 64
        %v1625 = vpop.permute.xlu0 %1624
        %1627 = vrot.lane.b32.xlu0 %v1557, 64
        %v1628 = vpop.permute.xlu0 %1627
        %v1630 = vsel %vm1226, %v1625, 0
        %v1633 = vsel %vm1226, %v1628, 0
        %1635 = vmatpush.bf16.xpose.msra.mxu0 0
        %1636 = vmatpush.bf16.xpose.msra.mxu0 0
        %1637 = vmatpush.bf16.xpose.msra.mxu0 0
        %1638 = vmatpush.bf16.xpose.msra.mxu0 0
        %1639 = vmatpush.bf16.xpose.msra.mxu0 0
        %1640 = vmatpush.bf16.xpose.msra.mxu0 0
        %1641 = vmatpush.bf16.xpose.msra.mxu0 0
        %1642 = vmatpush.bf16.xpose.msra.mxu0 %v1633
        %1643 = vmatmul.bf16.gmra.mxu0 %v1630
        %v1644 = vpop.f32.mrf.mxu0
        %v1645 = vadd.f32 0.0, %v1644
        %v1646 = vpop.f32.mrf.mxu0
        %1647 = vdwg.mxu0
        %v1648 = vmul.f32 %v1645, 0.125
        %v1649 = vadd.f32 %v1648, %v1578
        %v1650 = vsel %vm1580, %v1649, -inf
        %1651 = vmax.xlane.f32.xlu0 %v1650
        %v1652 = vpop.xlane.xlu0 %1651
        %v1653 = vsub.f32 %v1649, %v1652
        %v1654 = vmul.f32 %v1653, 1.442695
        %v1655 = vpow.pop %v1654
        %v1656 = vsel %vm1580, %v1655, 0.0
        %1657 = vadd.xlane.f32.xlu0 %v1656
        %v1658 = vpop.xlane.xlu0 %1657
        %v1659 = vrcp.pop %v1658
        %v1660 = vmul.f32 %v1655, %v1659
        %v1661 = vpack.c.bf16 %v1660, %v1660
        %1663 = vrot.lane.b32.xlu0 %v1593, 64
        %v1664 = vpop.permute.xlu0 %1663
        %v1666 = vsel %vm1580, %v1661, 0
        %v1669 = vsel %vm1597, %v1664, 0
        %1671 = vmatpush.bf16.msra.mxu0 0
        %1672 = vmatpush.bf16.msra.mxu0 0
        %1673 = vmatpush.bf16.msra.mxu0 0
        %1674 = vmatpush.bf16.msra.mxu0 0
        %1675 = vmatpush.bf16.msra.mxu0 0
        %1676 = vmatpush.bf16.msra.mxu0 0
        %1677 = vmatpush.bf16.msra.mxu0 0
        %1678 = vmatpush.bf16.msra.mxu0 %v1669
        %1679 = vmatmul.bf16.gmra.mxu0 %v1666
        %v1680 = vpop.f32.mrf.mxu0
        %v1681 = vadd.f32 0.0, %v1680
        %v1682 = vpop.f32.mrf.mxu0
        %1683 = vdwg.mxu0
        %v1684 = vpack.c.bf16 %v1681, %v1681
        %v1685 = vld [vmem:[%s1009 + $0x20] sm:$0xf]
        %v1686 = vld [vmem:[%s1009 + $0x24] sm:$0xf]
        %v1687 = vld [vmem:[%s1009 + $0x28] sm:$0xf]
        %v1688 = vld [vmem:[%s1009 + $0x2c] sm:$0xf]
        %v1689 = vld [vmem:[%s1009 + $0x30] sm:$0xf]
        %v1690 = vld [vmem:[%s1009 + $0x34] sm:$0xf]
        %v1691 = vld [vmem:[%s1009 + $0x38] sm:$0xf]
        %v1692 = vld [vmem:[%s1009 + $0x3c] sm:$0xf]
        %v1701 = vunpack.c.l.b16 %v1685
        %v1702 = vunpack.c.l.b16 %v1686
        %v1703 = vunpack.c.l.b16 %v1687
        %v1704 = vunpack.c.l.b16 %v1688
        %v1705 = vunpack.c.l.b16 %v1689
        %v1706 = vunpack.c.l.b16 %v1690
        %v1707 = vunpack.c.l.b16 %v1691
        %v1708 = vunpack.c.l.b16 %v1692
        %v1709 = vpack.c.b16 %v1702, %v1701
        %v1710 = vpack.c.b16 %v1704, %v1703
        %v1711 = vpack.c.b16 %v1706, %v1705
        %v1712 = vpack.c.b16 %v1708, %v1707
        %v1718 = vsel %vm1226, %v1684, 0
        %1720 = vmatpush.bf16.msra.mxu0 0
        %1721 = vmatpush.bf16.msra.mxu0 0
        %1722 = vmatpush.bf16.msra.mxu0 0
        %1723 = vmatpush.bf16.msra.mxu0 0
        %1724 = vmatpush.bf16.msra.mxu0 %v1712
        %1725 = vmatpush.bf16.msra.mxu0 %v1711
        %1726 = vmatpush.bf16.msra.mxu0 %v1710
        %1727 = vmatpush.bf16.msra.mxu0 %v1709
        %1728 = vmatmul.bf16.gmra.mxu0 %v1718
        %v1729 = vpop.f32.mrf.mxu0
        %v1730 = vadd.f32 0.0, %v1729
        %v1731 = vpop.f32.mrf.mxu0
        %1732 = vdwg.mxu0
        %v1741 = vunpack.c.l.b16 %v1615
        %v1742 = vunpack.c.l.b16 %v1616
        %v1743 = vunpack.c.l.b16 %v1617
        %v1744 = vunpack.c.l.b16 %v1618
        %v1745 = vunpack.c.l.b16 %v1619
        %v1746 = vunpack.c.l.b16 %v1620
        %v1747 = vunpack.c.l.b16 %v1621
        %v1748 = vunpack.c.l.b16 %v1622
        %v1749 = vpack.c.b16 %v1742, %v1741
        %v1750 = vpack.c.b16 %v1744, %v1743
        %v1751 = vpack.c.b16 %v1746, %v1745
        %v1752 = vpack.c.b16 %v1748, %v1747
        %v1758 = vsel %vm1226, %v1614, 0
        %1760 = vmatpush.bf16.msra.mxu0 0
        %1761 = vmatpush.bf16.msra.mxu0 0
        %1762 = vmatpush.bf16.msra.mxu0 0
        %1763 = vmatpush.bf16.msra.mxu0 0
        %1764 = vmatpush.bf16.msra.mxu0 %v1752
        %1765 = vmatpush.bf16.msra.mxu0 %v1751
        %1766 = vmatpush.bf16.msra.mxu0 %v1750
        %1767 = vmatpush.bf16.msra.mxu0 %v1749
        %1768 = vmatmul.bf16.gmra.mxu0 %v1758
        %v1769 = vpop.f32.mrf.mxu0
        %v1770 = vadd.f32 %v1730, %v1769
        %v1771 = vpop.f32.mrf.mxu0
        %1772 = vdwg.mxu0
        %v1773 = vpack.c.bf16 %v1526, %v1526
        %v1774 = vpack.c.bf16 %v1540, %v1540
        %v1776 = vsel %vm1226, %v1773, 0
        %v1779 = vsel %vm1226, %v1774, 0
        %1781 = vmatpush.bf16.xpose.msra.mxu0 0
        %1782 = vmatpush.bf16.xpose.msra.mxu0 0
        %1783 = vmatpush.bf16.xpose.msra.mxu0 0
        %1784 = vmatpush.bf16.xpose.msra.mxu0 0
        %1785 = vmatpush.bf16.xpose.msra.mxu0 0
        %1786 = vmatpush.bf16.xpose.msra.mxu0 0
        %1787 = vmatpush.bf16.xpose.msra.mxu0 0
        %1788 = vmatpush.bf16.xpose.msra.mxu0 %v1779
        %1789 = vmatmul.bf16.gmra.mxu0 %v1776
        %v1790 = vpop.f32.mrf.mxu0
        %v1791 = vadd.f32 0.0, %v1790
        %v1792 = vpop.f32.mrf.mxu0
        %1793 = vdwg.mxu0
        %v1794 = vmul.f32 %v1791, 0.125
        %v1795 = vperm.slane %v1344, 1
        %v1796 = vadd.f32 %v1794, %v1795
        %v1797 = vsel %vm1580, %v1796, -inf
        %1798 = vmax.xlane.f32.xlu0 %v1797
        %v1799 = vpop.xlane.xlu0 %1798
        %v1800 = vsub.f32 %v1796, %v1799
        %v1801 = vmul.f32 %v1800, 1.442695
        %v1802 = vpow.pop %v1801
        %v1803 = vsel %vm1580, %v1802, 0.0
        %1804 = vadd.xlane.f32.xlu0 %v1803
        %v1805 = vpop.xlane.xlu0 %1804
        %v1806 = vrcp.pop %v1805
        %v1807 = vmul.f32 %v1802, %v1806
        %v1808 = vpack.c.bf16 %v1807, %v1807
        %v1809 = vpack.c.bf16 %v1554, %v1554
        %v1811 = vsel %vm1580, %v1808, 0
        %v1814 = vsel %vm1597, %v1809, 0
        %1816 = vmatpush.bf16.msra.mxu0 0
        %1817 = vmatpush.bf16.msra.mxu0 0
        %1818 = vmatpush.bf16.msra.mxu0 0
        %1819 = vmatpush.bf16.msra.mxu0 0
        %1820 = vmatpush.bf16.msra.mxu0 0
        %1821 = vmatpush.bf16.msra.mxu0 0
        %1822 = vmatpush.bf16.msra.mxu0 0
        %1823 = vmatpush.bf16.msra.mxu0 %v1814
        %1824 = vmatmul.bf16.gmra.mxu0 %v1811
        %v1825 = vpop.f32.mrf.mxu0
        %v1826 = vadd.f32 0.0, %v1825
        %v1827 = vpop.f32.mrf.mxu0
        %1828 = vdwg.mxu0
        %v1829 = vpack.c.bf16 %v1826, %v1826
        %1831 = vrot.lane.b32.xlu0 %v1773, 64
        %v1832 = vpop.permute.xlu0 %1831
        %1834 = vrot.lane.b32.xlu0 %v1774, 64
        %v1835 = vpop.permute.xlu0 %1834
        %v1837 = vsel %vm1226, %v1832, 0
        %v1840 = vsel %vm1226, %v1835, 0
        %1842 = vmatpush.bf16.xpose.msra.mxu0 0
        %1843 = vmatpush.bf16.xpose.msra.mxu0 0
        %1844 = vmatpush.bf16.xpose.msra.mxu0 0
        %1845 = vmatpush.bf16.xpose.msra.mxu0 0
        %1846 = vmatpush.bf16.xpose.msra.mxu0 0
        %1847 = vmatpush.bf16.xpose.msra.mxu0 0
        %1848 = vmatpush.bf16.xpose.msra.mxu0 0
        %1849 = vmatpush.bf16.xpose.msra.mxu0 %v1840
        %1850 = vmatmul.bf16.gmra.mxu0 %v1837
        %v1851 = vpop.f32.mrf.mxu0
        %v1852 = vadd.f32 0.0, %v1851
        %v1853 = vpop.f32.mrf.mxu0
        %1854 = vdwg.mxu0
        %v1855 = vmul.f32 %v1852, 0.125
        %v1856 = vadd.f32 %v1855, %v1795
        %v1857 = vsel %vm1580, %v1856, -inf
        %1858 = vmax.xlane.f32.xlu0 %v1857
        %v1859 = vpop.xlane.xlu0 %1858
        %v1860 = vsub.f32 %v1856, %v1859
        %v1861 = vmul.f32 %v1860, 1.442695
        %v1862 = vpow.pop %v1861
        %v1863 = vsel %vm1580, %v1862, 0.0
        %1864 = vadd.xlane.f32.xlu0 %v1863
        %v1865 = vpop.xlane.xlu0 %1864
        %v1866 = vrcp.pop %v1865
        %v1867 = vmul.f32 %v1862, %v1866
        %v1868 = vpack.c.bf16 %v1867, %v1867
        %1870 = vrot.lane.b32.xlu0 %v1809, 64
        %v1871 = vpop.permute.xlu0 %1870
        %v1873 = vsel %vm1580, %v1868, 0
        %v1876 = vsel %vm1597, %v1871, 0
        %1878 = vmatpush.bf16.msra.mxu0 0
        %1879 = vmatpush.bf16.msra.mxu0 0
        %1880 = vmatpush.bf16.msra.mxu0 0
        %1881 = vmatpush.bf16.msra.mxu0 0
        %1882 = vmatpush.bf16.msra.mxu0 0
        %1883 = vmatpush.bf16.msra.mxu0 0
        %1884 = vmatpush.bf16.msra.mxu0 0
        %1885 = vmatpush.bf16.msra.mxu0 %v1876
        %1886 = vmatmul.bf16.gmra.mxu0 %v1873
        %v1887 = vpop.f32.mrf.mxu0
        %v1888 = vadd.f32 0.0, %v1887
        %v1889 = vpop.f32.mrf.mxu0
        %1890 = vdwg.mxu0
        %v1891 = vpack.c.bf16 %v1888, %v1888
        %v1893 = vsel %vm1226, %v1891, 0
        %1895 = vmatpush.bf16.msra.mxu0 0
        %1896 = vmatpush.bf16.msra.mxu0 0
        %1897 = vmatpush.bf16.msra.mxu0 0
        %1898 = vmatpush.bf16.msra.mxu0 0
        %1899 = vmatpush.bf16.msra.mxu0 %v1712
        %1900 = vmatpush.bf16.msra.mxu0 %v1711
        %1901 = vmatpush.bf16.msra.mxu0 %v1710
        %1902 = vmatpush.bf16.msra.mxu0 %v1709
        %1903 = vmatmul.bf16.gmra.mxu0 %v1893
        %v1904 = vpop.f32.mrf.mxu0
        %v1905 = vadd.f32 0.0, %v1904
        %v1906 = vpop.f32.mrf.mxu0
        %1907 = vdwg.mxu0
        %v1909 = vsel %vm1226, %v1829, 0
        %1911 = vmatpush.bf16.msra.mxu0 0
        %1912 = vmatpush.bf16.msra.mxu0 0
        %1913 = vmatpush.bf16.msra.mxu0 0
        %1914 = vmatpush.bf16.msra.mxu0 0
        %1915 = vmatpush.bf16.msra.mxu0 %v1752
        %1916 = vmatpush.bf16.msra.mxu0 %v1751
        %1917 = vmatpush.bf16.msra.mxu0 %v1750
        %1918 = vmatpush.bf16.msra.mxu0 %v1749
        %1919 = vmatmul.bf16.gmra.mxu0 %v1909
        %v1920 = vpop.f32.mrf.mxu0
        %v1921 = vadd.f32 %v1905, %v1920
        %v1922 = vpop.f32.mrf.mxu0
        %1923 = vdwg.mxu0
        %v1924 = vld [vmem:[%s1018] sm:$0x1]
        %v1926 = vperm.slane %v1924, 0
        %v1928 = vadd.f32 %v1770, %v1926
        %v1929 = vadd.f32 %v1921, %v1926
        %v1930 = vadd.f32 %v1928, %v1340
        %v1931 = vadd.f32 %v1929, %v1342
        %1932 = vadd.xlane.f32.xlu0 %v1930
        %v1933 = vpop.xlane.xlu0 %1932
        %1934 = vadd.xlane.f32.xlu0 %v1931
        %v1935 = vpop.xlane.xlu0 %1934
        %v1936 = vrcp.pop 128.0
        %v1937 = vmul.f32 128.0, %v1936
        %v1938 = vsub.f32 1.0, %v1937
        %v1939 = vmul.f32 %v1936, %v1938
        %v1940 = vadd.f32 %v1936, %v1939
        %vm1941 = vweird.f32 %v1936
        %v1942 = vsel %vm1941, %v1936, %v1940
        %v1943 = vmul.f32 %v1933, %v1942
        %v1944 = vmul.f32 %v1935, %v1942
        %v1945 = vsub.f32 %v1930, %v1943
        %v1946 = vsub.f32 %v1931, %v1944
        %v1947 = vmul.f32 %v1945, %v1945
        %v1948 = vmul.f32 %v1946, %v1946
        %1949 = vadd.xlane.f32.xlu0 %v1947
        %v1950 = vpop.xlane.xlu0 %1949
        %1951 = vadd.xlane.f32.xlu0 %v1948
        %v1952 = vpop.xlane.xlu0 %1951
        %v1953 = vmul.f32 %v1950, %v1942
        %v1954 = vmul.f32 %v1952, %v1942
        %v1955 = vadd.f32 %v1953, 1e-12
        %v1956 = vadd.f32 %v1954, 1e-12
        %v1957 = vrsqrt.pop %v1955
        %v1958 = vmul.f32 %v1957, %v1955
        %v1959 = vmul.f32 %v1958, %v1957
        %v1960 = vmul.f32 0.5, %v1959
        %v1961 = vsub.f32 1.5, %v1960
        %v1962 = vmul.f32 %v1957, %v1961
        %vm1963 = vweird.f32 %v1955
        %vm1964 = vweird.f32 %v1957
        %vm1965 = vmor %vm1963, %vm1964
        %v1966 = vsel %vm1965, %v1957, %v1962
        %v1967 = vrsqrt.pop %v1956
        %v1968 = vmul.f32 %v1967, %v1956
        %v1969 = vmul.f32 %v1968, %v1967
        %v1970 = vmul.f32 0.5, %v1969
        %v1971 = vsub.f32 1.5, %v1970
        %v1972 = vmul.f32 %v1967, %v1971
        %vm1973 = vweird.f32 %v1956
        %vm1974 = vweird.f32 %v1967
        %vm1975 = vmor %vm1973, %vm1974
        %v1976 = vsel %vm1975, %v1967, %v1972
        %v1977 = vmul.f32 %v1945, %v1966
        %v1978 = vmul.f32 %v1946, %v1976
        %v1979 = vld [vmem:[%s1027] sm:$0x1]
        %v1981 = vperm.slane %v1979, 0
        %v1983 = vmul.f32 %v1977, %v1981
        %v1984 = vmul.f32 %v1978, %v1981
        %v1985 = vld [vmem:[%s1036] sm:$0x1]
        %v1987 = vperm.slane %v1985, 0
        %v1989 = vadd.f32 %v1983, %v1987
        %v1990 = vadd.f32 %v1984, %v1987
        %v1991 = vpack.c.bf16 %v1990, %v1989
        %v1992 = vld [vmem:[%s1046] sm:$0xff]
        %v1993 = vld [vmem:[%s1046 + $0x8] sm:$0xff]
        %v1994 = vld [vmem:[%s1046 + $0x10] sm:$0xff]
        %v1995 = vld [vmem:[%s1046 + $0x18] sm:$0xff]
        %v1996 = vld [vmem:[%s1046 + $0x20] sm:$0xff]
        %v1997 = vld [vmem:[%s1046 + $0x28] sm:$0xff]
        %v1998 = vld [vmem:[%s1046 + $0x30] sm:$0xff]
        %v1999 = vld [vmem:[%s1046 + $0x38] sm:$0xff]
        %v2000 = vld [vmem:[%s1046 + $0x40] sm:$0xff]
        %v2001 = vld [vmem:[%s1046 + $0x48] sm:$0xff]
        %v2002 = vld [vmem:[%s1046 + $0x50] sm:$0xff]
        %v2003 = vld [vmem:[%s1046 + $0x58] sm:$0xff]
        %v2004 = vld [vmem:[%s1046 + $0x60] sm:$0xff]
        %v2005 = vld [vmem:[%s1046 + $0x68] sm:$0xff]
        %v2006 = vld [vmem:[%s1046 + $0x70] sm:$0xff]
        %v2007 = vld [vmem:[%s1046 + $0x78] sm:$0xff]
        %v2008 = vld [vmem:[%s1210] sm:$0x3]
        %v2010 = vperm.slane %v2008, 0
        %v2011 = vperm.slane %v2008, 1
        %v2030 = vunpack.c.l.b16 %v1992
        %v2031 = vunpack.c.h.b16 %v1992
        %v2032 = vunpack.c.l.b16 %v1993
        %v2033 = vunpack.c.h.b16 %v1993
        %v2034 = vunpack.c.l.b16 %v1994
        %v2035 = vunpack.c.h.b16 %v1994
        %v2036 = vunpack.c.l.b16 %v1995
        %v2037 = vunpack.c.h.b16 %v1995
        %v2038 = vunpack.c.l.b16 %v1996
        %v2039 = vunpack.c.h.b16 %v1996
        %v2040 = vunpack.c.l.b16 %v1997
        %v2041 = vunpack.c.h.b16 %v1997
        %v2042 = vunpack.c.l.b16 %v1998
        %v2043 = vunpack.c.h.b16 %v1998
        %v2044 = vunpack.c.l.b16 %v1999
        %v2045 = vunpack.c.h.b16 %v1999
        %v2046 = vunpack.c.l.b16 %v2000
        %v2047 = vunpack.c.h.b16 %v2000
        %v2048 = vunpack.c.l.b16 %v2001
        %v2049 = vunpack.c.h.b16 %v2001
        %v2050 = vunpack.c.l.b16 %v2002
        %v2051 = vunpack.c.h.b16 %v2002
        %v2052 = vunpack.c.l.b16 %v2003
        %v2053 = vunpack.c.h.b16 %v2003
        %v2054 = vunpack.c.l.b16 %v2004
        %v2055 = vunpack.c.h.b16 %v2004
        %v2056 = vunpack.c.l.b16 %v2005
        %v2057 = vunpack.c.h.b16 %v2005
        %v2058 = vunpack.c.l.b16 %v2006
        %v2059 = vunpack.c.h.b16 %v2006
        %v2060 = vunpack.c.l.b16 %v2007
        %v2061 = vunpack.c.h.b16 %v2007
        %v2062 = vpack.c.b16 %v2032, %v2030
        %v2063 = vpack.c.b16 %v2033, %v2031
        %v2064 = vpack.c.b16 %v2036, %v2034
        %v2065 = vpack.c.b16 %v2037, %v2035
        %v2066 = vpack.c.b16 %v2040, %v2038
        %v2067 = vpack.c.b16 %v2041, %v2039
        %v2068 = vpack.c.b16 %v2044, %v2042
        %v2069 = vpack.c.b16 %v2045, %v2043
        %v2070 = vpack.c.b16 %v2048, %v2046
        %v2071 = vpack.c.b16 %v2049, %v2047
        %v2072 = vpack.c.b16 %v2052, %v2050
        %v2073 = vpack.c.b16 %v2053, %v2051
        %v2074 = vpack.c.b16 %v2056, %v2054
        %v2075 = vpack.c.b16 %v2057, %v2055
        %v2076 = vpack.c.b16 %v2060, %v2058
        %v2077 = vpack.c.b16 %v2061, %v2059
        %2094 = vmatpush.bf16.msra.mxu0 %v2076
        %2095 = vmatpush.bf16.msra.mxu0 %v2074
        %2096 = vmatpush.bf16.msra.mxu0 %v2072
        %2097 = vmatpush.bf16.msra.mxu0 %v2070
        %2098 = vmatpush.bf16.msra.mxu0 %v2068
        %2099 = vmatpush.bf16.msra.mxu0 %v2066
        %2100 = vmatpush.bf16.msra.mxu0 %v2064
        %2101 = vmatpush.bf16.msra.mxu0 %v2062
        %2102 = vmatmul.bf16.gmra.mxu0 %v1991
        %v2103 = vpop.f32.mrf.mxu0
        %v2104 = vadd.f32 %v2010, %v2103
        %v2105 = vpop.f32.mrf.mxu0
        %v2106 = vadd.f32 %v2010, %v2105
        %2107 = vdwg.mxu0
        %2108 = vmatpush.bf16.msra.mxu0 %v2077
        %2109 = vmatpush.bf16.msra.mxu0 %v2075
        %2110 = vmatpush.bf16.msra.mxu0 %v2073
        %2111 = vmatpush.bf16.msra.mxu0 %v2071
        %2112 = vmatpush.bf16.msra.mxu0 %v2069
        %2113 = vmatpush.bf16.msra.mxu0 %v2067
        %2114 = vmatpush.bf16.msra.mxu0 %v2065
        %2115 = vmatpush.bf16.msra.mxu0 %v2063
        %2116 = vmatmul.bf16.gmra.mxu0 %v1991
        %v2117 = vpop.f32.mrf.mxu0
        %v2118 = vadd.f32 %v2011, %v2117
        %v2119 = vpop.f32.mrf.mxu0
        %v2120 = vadd.f32 %v2011, %v2119
        %2121 = vdwg.mxu0
        %v2122 = vmul.f32 %v2104, 0.5
        %v2123 = vmul.f32 %v2118, 0.5
        %v2124 = vmul.f32 %v2106, 0.5
        %v2125 = vmul.f32 %v2120, 0.5
        %v2126 = vmul.f32 %v2104, 0.044715
        %v2127 = vmul.f32 %v2118, 0.044715
        %v2128 = vmul.f32 %v2106, 0.044715
        %v2129 = vmul.f32 %v2120, 0.044715
        %v2130 = vmul.f32 %v2126, %v2104
        %v2131 = vmul.f32 %v2127, %v2118
        %v2132 = vmul.f32 %v2128, %v2106
        %v2133 = vmul.f32 %v2129, %v2120
        %v2134 = vmul.f32 %v2130, %v2104
        %v2135 = vmul.f32 %v2131, %v2118
        %v2136 = vmul.f32 %v2132, %v2106
        %v2137 = vmul.f32 %v2133, %v2120
        %v2138 = vadd.f32 %v2104, %v2134
        %v2139 = vadd.f32 %v2118, %v2135
        %v2140 = vadd.f32 %v2106, %v2136
        %v2141 = vadd.f32 %v2120, %v2137
        %v2142 = vmul.f32 %v2138, 0.7978846
        %v2143 = vmul.f32 %v2139, 0.7978846
        %v2144 = vmul.f32 %v2140, 0.7978846
        %v2145 = vmul.f32 %v2141, 0.7978846
        %v2146 = vtanh.pop %v2142
        %v2147 = vtanh.pop %v2143
        %v2148 = vtanh.pop %v2144
        %v2149 = vtanh.pop %v2145
        %v2150 = vadd.f32 %v2146, 1.0
        %v2151 = vadd.f32 %v2147, 1.0
        %v2152 = vadd.f32 %v2148, 1.0
        %v2153 = vadd.f32 %v2149, 1.0
        %v2154 = vmul.f32 %v2122, %v2150
        %v2155 = vmul.f32 %v2123, %v2151
        %v2156 = vmul.f32 %v2124, %v2152
        %v2157 = vmul.f32 %v2125, %v2153
        %v2158 = vpack.c.bf16 %v2156, %v2154
        %v2159 = vpack.c.bf16 %v2157, %v2155
        %v2160 = vld [vmem:[%s1056] sm:$0xf]
        %v2161 = vld [vmem:[%s1056 + $0x4] sm:$0xf]
        %v2162 = vld [vmem:[%s1056 + $0x8] sm:$0xf]
        %v2163 = vld [vmem:[%s1056 + $0xc] sm:$0xf]
        %v2164 = vld [vmem:[%s1056 + $0x10] sm:$0xf]
        %v2165 = vld [vmem:[%s1056 + $0x14] sm:$0xf]
        %v2166 = vld [vmem:[%s1056 + $0x18] sm:$0xf]
        %v2167 = vld [vmem:[%s1056 + $0x1c] sm:$0xf]
        %v2168 = vld [vmem:[%s1056 + $0x20] sm:$0xf]
        %v2169 = vld [vmem:[%s1056 + $0x24] sm:$0xf]
        %v2170 = vld [vmem:[%s1056 + $0x28] sm:$0xf]
        %v2171 = vld [vmem:[%s1056 + $0x2c] sm:$0xf]
        %v2172 = vld [vmem:[%s1056 + $0x30] sm:$0xf]
        %v2173 = vld [vmem:[%s1056 + $0x34] sm:$0xf]
        %v2174 = vld [vmem:[%s1056 + $0x38] sm:$0xf]
        %v2175 = vld [vmem:[%s1056 + $0x3c] sm:$0xf]
        %v2176 = vld [vmem:[%s1056 + $0x40] sm:$0xf]
        %v2177 = vld [vmem:[%s1056 + $0x44] sm:$0xf]
        %v2178 = vld [vmem:[%s1056 + $0x48] sm:$0xf]
        %v2179 = vld [vmem:[%s1056 + $0x4c] sm:$0xf]
        %v2180 = vld [vmem:[%s1056 + $0x50] sm:$0xf]
        %v2181 = vld [vmem:[%s1056 + $0x54] sm:$0xf]
        %v2182 = vld [vmem:[%s1056 + $0x58] sm:$0xf]
        %v2183 = vld [vmem:[%s1056 + $0x5c] sm:$0xf]
        %v2184 = vld [vmem:[%s1056 + $0x60] sm:$0xf]
        %v2185 = vld [vmem:[%s1056 + $0x64] sm:$0xf]
        %v2186 = vld [vmem:[%s1056 + $0x68] sm:$0xf]
        %v2187 = vld [vmem:[%s1056 + $0x6c] sm:$0xf]
        %v2188 = vld [vmem:[%s1056 + $0x70] sm:$0xf]
        %v2189 = vld [vmem:[%s1056 + $0x74] sm:$0xf]
        %v2190 = vld [vmem:[%s1056 + $0x78] sm:$0xf]
        %v2191 = vld [vmem:[%s1056 + $0x7c] sm:$0xf]
        %v2192 = vld [vmem:[%s1213] sm:$0x1]
        %v2194 = vperm.slane %v2192, 0
        %v2228 = vunpack.c.l.b16 %v2160
        %v2229 = vunpack.c.l.b16 %v2161
        %v2230 = vunpack.c.l.b16 %v2162
        %v2231 = vunpack.c.l.b16 %v2163
        %v2232 = vunpack.c.l.b16 %v2164
        %v2233 = vunpack.c.l.b16 %v2165
        %v2234 = vunpack.c.l.b16 %v2166
        %v2235 = vunpack.c.l.b16 %v2167
        %v2236 = vunpack.c.l.b16 %v2168
        %v2237 = vunpack.c.l.b16 %v2169
        %v2238 = vunpack.c.l.b16 %v2170
        %v2239 = vunpack.c.l.b16 %v2171
        %v2240 = vunpack.c.l.b16 %v2172
        %v2241 = vunpack.c.l.b16 %v2173
        %v2242 = vunpack.c.l.b16 %v2174
        %v2243 = vunpack.c.l.b16 %v2175
        %v2244 = vunpack.c.l.b16 %v2176
        %v2245 = vunpack.c.l.b16 %v2177
        %v2246 = vunpack.c.l.b16 %v2178
        %v2247 = vunpack.c.l.b16 %v2179
        %v2248 = vunpack.c.l.b16 %v2180
        %v2249 = vunpack.c.l.b16 %v2181
        %v2250 = vunpack.c.l.b16 %v2182
        %v2251 = vunpack.c.l.b16 %v2183
        %v2252 = vunpack.c.l.b16 %v2184
        %v2253 = vunpack.c.l.b16 %v2185
        %v2254 = vunpack.c.l.b16 %v2186
        %v2255 = vunpack.c.l.b16 %v2187
        %v2256 = vunpack.c.l.b16 %v2188
        %v2257 = vunpack.c.l.b16 %v2189
        %v2258 = vunpack.c.l.b16 %v2190
        %v2259 = vunpack.c.l.b16 %v2191
        %v2260 = vpack.c.b16 %v2229, %v2228
        %v2261 = vpack.c.b16 %v2231, %v2230
        %v2262 = vpack.c.b16 %v2233, %v2232
        %v2263 = vpack.c.b16 %v2235, %v2234
        %v2264 = vpack.c.b16 %v2237, %v2236
        %v2265 = vpack.c.b16 %v2239, %v2238
        %v2266 = vpack.c.b16 %v2241, %v2240
        %v2267 = vpack.c.b16 %v2243, %v2242
        %v2268 = vpack.c.b16 %v2245, %v2244
        %v2269 = vpack.c.b16 %v2247, %v2246
        %v2270 = vpack.c.b16 %v2249, %v2248
        %v2271 = vpack.c.b16 %v2251, %v2250
        %v2272 = vpack.c.b16 %v2253, %v2252
        %v2273 = vpack.c.b16 %v2255, %v2254
        %v2274 = vpack.c.b16 %v2257, %v2256
        %v2275 = vpack.c.b16 %v2259, %v2258
        %2292 = vmatpush.bf16.msra.mxu0 %v2267
        %2293 = vmatpush.bf16.msra.mxu0 %v2266
        %2294 = vmatpush.bf16.msra.mxu0 %v2265
        %2295 = vmatpush.bf16.msra.mxu0 %v2264
        %2296 = vmatpush.bf16.msra.mxu0 %v2263
        %2297 = vmatpush.bf16.msra.mxu0 %v2262
        %2298 = vmatpush.bf16.msra.mxu0 %v2261
        %2299 = vmatpush.bf16.msra.mxu0 %v2260
        %2300 = vmatmul.bf16.gmra.mxu0 %v2158
        %v2301 = vpop.f32.mrf.mxu0
        %v2302 = vadd.f32 %v2194, %v2301
        %v2303 = vpop.f32.mrf.mxu0
        %v2304 = vadd.f32 %v2194, %v2303
        %2305 = vdwg.mxu0
        %2306 = vmatpush.bf16.msra.mxu0 %v2275
        %2307 = vmatpush.bf16.msra.mxu0 %v2274
        %2308 = vmatpush.bf16.msra.mxu0 %v2273
        %2309 = vmatpush.bf16.msra.mxu0 %v2272
        %2310 = vmatpush.bf16.msra.mxu0 %v2271
        %2311 = vmatpush.bf16.msra.mxu0 %v2270
        %2312 = vmatpush.bf16.msra.mxu0 %v2269
        %2313 = vmatpush.bf16.msra.mxu0 %v2268
        %2314 = vmatmul.bf16.gmra.mxu0 %v2159
        %v2315 = vpop.f32.mrf.mxu0
        %v2316 = vadd.f32 %v2302, %v2315
        %v2317 = vpop.f32.mrf.mxu0
        %v2318 = vadd.f32 %v2304, %v2317
        %2319 = vdwg.mxu0
        %v2320 = vadd.f32 %v2316, %v1989
        %v2321 = vadd.f32 %v2318, %v1990
        %2322 = vadd.xlane.f32.xlu0 %v2320
        %v2323 = vpop.xlane.xlu0 %2322
        %2324 = vadd.xlane.f32.xlu0 %v2321
        %v2325 = vpop.xlane.xlu0 %2324
        %v2326 = vmul.f32 %v2323, %v1942
        %v2327 = vmul.f32 %v2325, %v1942
        %v2328 = vsub.f32 %v2320, %v2326
        %v2329 = vsub.f32 %v2321, %v2327
        %v2330 = vmul.f32 %v2328, %v2328
        %v2331 = vmul.f32 %v2329, %v2329
        %2332 = vadd.xlane.f32.xlu0 %v2330
        %v2333 = vpop.xlane.xlu0 %2332
        %2334 = vadd.xlane.f32.xlu0 %v2331
        %v2335 = vpop.xlane.xlu0 %2334
        %v2336 = vmul.f32 %v2333, %v1942
        %v2337 = vmul.f32 %v2335, %v1942
        %v2338 = vadd.f32 %v2336, 1e-12
        %v2339 = vadd.f32 %v2337, 1e-12
        %v2340 = vrsqrt.pop %v2338
        %v2341 = vmul.f32 %v2340, %v2338
        %v2342 = vmul.f32 %v2341, %v2340
        %v2343 = vmul.f32 0.5, %v2342
        %v2344 = vsub.f32 1.5, %v2343
        %v2345 = vmul.f32 %v2340, %v2344
        %vm2346 = vweird.f32 %v2338
        %vm2347 = vweird.f32 %v2340
        %vm2348 = vmor %vm2346, %vm2347
        %v2349 = vsel %vm2348, %v2340, %v2345
        %v2350 = vrsqrt.pop %v2339
        %v2351 = vmul.f32 %v2350, %v2339
        %v2352 = vmul.f32 %v2351, %v2350
        %v2353 = vmul.f32 0.5, %v2352
        %v2354 = vsub.f32 1.5, %v2353
        %v2355 = vmul.f32 %v2350, %v2354
        %vm2356 = vweird.f32 %v2339
        %vm2357 = vweird.f32 %v2350
        %vm2358 = vmor %vm2356, %vm2357
        %v2359 = vsel %vm2358, %v2350, %v2355
        %v2360 = vmul.f32 %v2328, %v2349
        %v2361 = vmul.f32 %v2329, %v2359
        %v2362 = vld [vmem:[%s1216] sm:$0x1]
        %v2364 = vperm.slane %v2362, 0
        %v2366 = vmul.f32 %v2360, %v2364
        %v2367 = vmul.f32 %v2361, %v2364
        %v2368 = vld [vmem:[%s1219] sm:$0x1]
        %v2370 = vperm.slane %v2368, 0
        %v2372 = vadd.f32 %v2366, %v2370
        %v2373 = vadd.f32 %v2367, %v2370
        %v2374 = vpack.c.bf16 %v2373, %v2372
        %2375 = vmatpush.bf16.msra.mxu0 %v1487
        %2376 = vmatpush.bf16.msra.mxu0 %v1484
        %2377 = vmatpush.bf16.msra.mxu0 %v1481
        %2378 = vmatpush.bf16.msra.mxu0 %v1478
        %2379 = vmatpush.bf16.msra.mxu0 %v1475
        %2380 = vmatpush.bf16.msra.mxu0 %v1472
        %2381 = vmatpush.bf16.msra.mxu0 %v1469
        %2382 = vmatpush.bf16.msra.mxu0 %v1466
        %2383 = vmatmul.bf16.gmra.mxu0 %v2374
        %v2384 = vpop.f32.mrf.mxu0
        %v2385 = vadd.f32 %v1380, %v2384
        %v2386 = vpop.f32.mrf.mxu0
        %v2387 = vadd.f32 %v1380, %v2386
        %2388 = vdwg.mxu0
        %2389 = vmatpush.bf16.msra.mxu0 %v1488
        %2390 = vmatpush.bf16.msra.mxu0 %v1485
        %2391 = vmatpush.bf16.msra.mxu0 %v1482
        %2392 = vmatpush.bf16.msra.mxu0 %v1479
        %2393 = vmatpush.bf16.msra.mxu0 %v1476
        %2394 = vmatpush.bf16.msra.mxu0 %v1473
        %2395 = vmatpush.bf16.msra.mxu0 %v1470
        %2396 = vmatpush.bf16.msra.mxu0 %v1467
        %2397 = vmatmul.bf16.gmra.mxu0 %v2374
        %v2398 = vpop.f32.mrf.mxu0
        %v2399 = vadd.f32 %v1381, %v2398
        %v2400 = vpop.f32.mrf.mxu0
        %v2401 = vadd.f32 %v1381, %v2400
        %2402 = vdwg.mxu0
        %2403 = vmatpush.bf16.msra.mxu0 %v1489
        %2404 = vmatpush.bf16.msra.mxu0 %v1486
        %2405 = vmatpush.bf16.msra.mxu0 %v1483
        %2406 = vmatpush.bf16.msra.mxu0 %v1480
        %2407 = vmatpush.bf16.msra.mxu0 %v1477
        %2408 = vmatpush.bf16.msra.mxu0 %v1474
        %2409 = vmatpush.bf16.msra.mxu0 %v1471
        %2410 = vmatpush.bf16.msra.mxu0 %v1468
        %2411 = vmatmul.bf16.gmra.mxu0 %v2374
        %v2412 = vpop.f32.mrf.mxu0
        %v2413 = vadd.f32 %v1382, %v2412
        %v2414 = vpop.f32.mrf.mxu0
        %v2415 = vadd.f32 %v1382, %v2414
        %2416 = vdwg.mxu0
        %v2417 = vpack.c.bf16 %v2385, %v2385
        %v2418 = vpack.c.bf16 %v2399, %v2399
        %v2420 = vsel %vm1226, %v2417, 0
        %v2423 = vsel %vm1226, %v2418, 0
        %2425 = vmatpush.bf16.xpose.msra.mxu0 0
        %2426 = vmatpush.bf16.xpose.msra.mxu0 0
        %2427 = vmatpush.bf16.xpose.msra.mxu0 0
        %2428 = vmatpush.bf16.xpose.msra.mxu0 0
        %2429 = vmatpush.bf16.xpose.msra.mxu0 0
        %2430 = vmatpush.bf16.xpose.msra.mxu0 0
        %2431 = vmatpush.bf16.xpose.msra.mxu0 0
        %2432 = vmatpush.bf16.xpose.msra.mxu0 %v2423
        %2433 = vmatmul.bf16.gmra.mxu0 %v2420
        %v2434 = vpop.f32.mrf.mxu0
        %v2435 = vadd.f32 0.0, %v2434
        %v2436 = vpop.f32.mrf.mxu0
        %2437 = vdwg.mxu0
        %v2438 = vmul.f32 %v2435, 0.125
        %v2439 = vadd.f32 %v2438, %v1578
        %v2440 = vsel %vm1580, %v2439, -inf
        %2441 = vmax.xlane.f32.xlu0 %v2440
        %v2442 = vpop.xlane.xlu0 %2441
        %v2443 = vsub.f32 %v2439, %v2442
        %v2444 = vmul.f32 %v2443, 1.442695
        %v2445 = vpow.pop %v2444
        %v2446 = vsel %vm1580, %v2445, 0.0
        %2447 = vadd.xlane.f32.xlu0 %v2446
        %v2448 = vpop.xlane.xlu0 %2447
        %v2449 = vrcp.pop %v2448
        %v2450 = vmul.f32 %v2445, %v2449
        %v2451 = vpack.c.bf16 %v2450, %v2450
        %v2452 = vpack.c.bf16 %v2413, %v2413
        %v2454 = vsel %vm1580, %v2451, 0
        %v2457 = vsel %vm1597, %v2452, 0
        %2459 = vmatpush.bf16.msra.mxu0 0
        %2460 = vmatpush.bf16.msra.mxu0 0
        %2461 = vmatpush.bf16.msra.mxu0 0
        %2462 = vmatpush.bf16.msra.mxu0 0
        %2463 = vmatpush.bf16.msra.mxu0 0
        %2464 = vmatpush.bf16.msra.mxu0 0
        %2465 = vmatpush.bf16.msra.mxu0 0
        %2466 = vmatpush.bf16.msra.mxu0 %v2457
        %2467 = vmatmul.bf16.gmra.mxu0 %v2454
        %v2468 = vpop.f32.mrf.mxu0
        %v2469 = vadd.f32 0.0, %v2468
        %v2470 = vpop.f32.mrf.mxu0
        %2471 = vdwg.mxu0
        %v2472 = vpack.c.bf16 %v2469, %v2469
        %2474 = vrot.lane.b32.xlu0 %v2417, 64
        %v2475 = vpop.permute.xlu0 %2474
        %2477 = vrot.lane.b32.xlu0 %v2418, 64
        %v2478 = vpop.permute.xlu0 %2477
        %v2480 = vsel %vm1226, %v2475, 0
        %v2483 = vsel %vm1226, %v2478, 0
        %2485 = vmatpush.bf16.xpose.msra.mxu0 0
        %2486 = vmatpush.bf16.xpose.msra.mxu0 0
        %2487 = vmatpush.bf16.xpose.msra.mxu0 0
        %2488 = vmatpush.bf16.xpose.msra.mxu0 0
        %2489 = vmatpush.bf16.xpose.msra.mxu0 0
        %2490 = vmatpush.bf16.xpose.msra.mxu0 0
        %2491 = vmatpush.bf16.xpose.msra.mxu0 0
        %2492 = vmatpush.bf16.xpose.msra.mxu0 %v2483
        %2493 = vmatmul.bf16.gmra.mxu0 %v2480
        %v2494 = vpop.f32.mrf.mxu0
        %v2495 = vadd.f32 0.0, %v2494
        %v2496 = vpop.f32.mrf.mxu0
        %2497 = vdwg.mxu0
        %v2498 = vmul.f32 %v2495, 0.125
        %v2499 = vadd.f32 %v2498, %v1578
        %v2500 = vsel %vm1580, %v2499, -inf
        %2501 = vmax.xlane.f32.xlu0 %v2500
        %v2502 = vpop.xlane.xlu0 %2501
        %v2503 = vsub.f32 %v2499, %v2502
        %v2504 = vmul.f32 %v2503, 1.442695
        %v2505 = vpow.pop %v2504
        %v2506 = vsel %vm1580, %v2505, 0.0
        %2507 = vadd.xlane.f32.xlu0 %v2506
        %v2508 = vpop.xlane.xlu0 %2507
        %v2509 = vrcp.pop %v2508
        %v2510 = vmul.f32 %v2505, %v2509
        %v2511 = vpack.c.bf16 %v2510, %v2510
        %2513 = vrot.lane.b32.xlu0 %v2452, 64
        %v2514 = vpop.permute.xlu0 %2513
        %v2516 = vsel %vm1580, %v2511, 0
        %v2519 = vsel %vm1597, %v2514, 0
        %2521 = vmatpush.bf16.msra.mxu0 0
        %2522 = vmatpush.bf16.msra.mxu0 0
        %2523 = vmatpush.bf16.msra.mxu0 0
        %2524 = vmatpush.bf16.msra.mxu0 0
        %2525 = vmatpush.bf16.msra.mxu0 0
        %2526 = vmatpush.bf16.msra.mxu0 0
        %2527 = vmatpush.bf16.msra.mxu0 0
        %2528 = vmatpush.bf16.msra.mxu0 %v2519
        %2529 = vmatmul.bf16.gmra.mxu0 %v2516
        %v2530 = vpop.f32.mrf.mxu0
        %v2531 = vadd.f32 0.0, %v2530
        %v2532 = vpop.f32.mrf.mxu0
        %2533 = vdwg.mxu0
        %v2534 = vpack.c.bf16 %v2531, %v2531
        %v2536 = vsel %vm1226, %v2534, 0
        %2538 = vmatpush.bf16.msra.mxu0 0
        %2539 = vmatpush.bf16.msra.mxu0 0
        %2540 = vmatpush.bf16.msra.mxu0 0
        %2541 = vmatpush.bf16.msra.mxu0 0
        %2542 = vmatpush.bf16.msra.mxu0 %v1712
        %2543 = vmatpush.bf16.msra.mxu0 %v1711
        %2544 = vmatpush.bf16.msra.mxu0 %v1710
        %2545 = vmatpush.bf16.msra.mxu0 %v1709
        %2546 = vmatmul.bf16.gmra.mxu0 %v2536
        %v2547 = vpop.f32.mrf.mxu0
        %v2548 = vadd.f32 0.0, %v2547
        %v2549 = vpop.f32.mrf.mxu0
        %2550 = vdwg.mxu0
        %v2552 = vsel %vm1226, %v2472, 0
        %2554 = vmatpush.bf16.msra.mxu0 0
        %2555 = vmatpush.bf16.msra.mxu0 0
        %2556 = vmatpush.bf16.msra.mxu0 0
        %2557 = vmatpush.bf16.msra.mxu0 0
        %2558 = vmatpush.bf16.msra.mxu0 %v1752
        %2559 = vmatpush.bf16.msra.mxu0 %v1751
        %2560 = vmatpush.bf16.msra.mxu0 %v1750
        %2561 = vmatpush.bf16.msra.mxu0 %v1749
        %2562 = vmatmul.bf16.gmra.mxu0 %v2552
        %v2563 = vpop.f32.mrf.mxu0
        %v2564 = vadd.f32 %v2548, %v2563
        %v2565 = vpop.f32.mrf.mxu0
        %2566 = vdwg.mxu0
        %v2567 = vpack.c.bf16 %v2387, %v2387
        %v2568 = vpack.c.bf16 %v2401, %v2401
        %v2570 = vsel %vm1226, %v2567, 0
        %v2573 = vsel %vm1226, %v2568, 0
        %2575 = vmatpush.bf16.xpose.msra.mxu0 0
        %2576 = vmatpush.bf16.xpose.msra.mxu0 0
        %2577 = vmatpush.bf16.xpose.msra.mxu0 0
        %2578 = vmatpush.bf16.xpose.msra.mxu0 0
        %2579 = vmatpush.bf16.xpose.msra.mxu0 0
        %2580 = vmatpush.bf16.xpose.msra.mxu0 0
        %2581 = vmatpush.bf16.xpose.msra.mxu0 0
        %2582 = vmatpush.bf16.xpose.msra.mxu0 %v2573
        %2583 = vmatmul.bf16.gmra.mxu0 %v2570
        %v2584 = vpop.f32.mrf.mxu0
        %v2585 = vadd.f32 0.0, %v2584
        %v2586 = vpop.f32.mrf.mxu0
        %2587 = vdwg.mxu0
        %v2588 = vmul.f32 %v2585, 0.125
        %v2589 = vadd.f32 %v2588, %v1795
        %v2590 = vsel %vm1580, %v2589, -inf
        %2591 = vmax.xlane.f32.xlu0 %v2590
        %v2592 = vpop.xlane.xlu0 %2591
        %v2593 = vsub.f32 %v2589, %v2592
        %v2594 = vmul.f32 %v2593, 1.442695
        %v2595 = vpow.pop %v2594
        %v2596 = vsel %vm1580, %v2595, 0.0
        %2597 = vadd.xlane.f32.xlu0 %v2596
        %v2598 = vpop.xlane.xlu0 %2597
        %v2599 = vrcp.pop %v2598
        %v2600 = vmul.f32 %v2595, %v2599
        %v2601 = vpack.c.bf16 %v2600, %v2600
        %v2602 = vpack.c.bf16 %v2415, %v2415
        %v2604 = vsel %vm1580, %v2601, 0
        %v2607 = vsel %vm1597, %v2602, 0
        %2609 = vmatpush.bf16.msra.mxu0 0
        %2610 = vmatpush.bf16.msra.mxu0 0
        %2611 = vmatpush.bf16.msra.mxu0 0
        %2612 = vmatpush.bf16.msra.mxu0 0
        %2613 = vmatpush.bf16.msra.mxu0 0
        %2614 = vmatpush.bf16.msra.mxu0 0
        %2615 = vmatpush.bf16.msra.mxu0 0
        %2616 = vmatpush.bf16.msra.mxu0 %v2607
        %2617 = vmatmul.bf16.gmra.mxu0 %v2604
        %v2618 = vpop.f32.mrf.mxu0
        %v2619 = vadd.f32 0.0, %v2618
        %v2620 = vpop.f32.mrf.mxu0
        %2621 = vdwg.mxu0
        %v2622 = vpack.c.bf16 %v2619, %v2619
        %2624 = vrot.lane.b32.xlu0 %v2567, 64
        %v2625 = vpop.permute.xlu0 %2624
        %2627 = vrot.lane.b32.xlu0 %v2568, 64
        %v2628 = vpop.permute.xlu0 %2627
        %v2630 = vsel %vm1226, %v2625, 0
        %v2633 = vsel %vm1226, %v2628, 0
        %2635 = vmatpush.bf16.xpose.msra.mxu0 0
        %2636 = vmatpush.bf16.xpose.msra.mxu0 0
        %2637 = vmatpush.bf16.xpose.msra.mxu0 0
        %2638 = vmatpush.bf16.xpose.msra.mxu0 0
        %2639 = vmatpush.bf16.xpose.msra.mxu0 0
        %2640 = vmatpush.bf16.xpose.msra.mxu0 0
        %2641 = vmatpush.bf16.xpose.msra.mxu0 0
        %2642 = vmatpush.bf16.xpose.msra.mxu0 %v2633
        %2643 = vmatmul.bf16.gmra.mxu0 %v2630
        %v2644 = vpop.f32.mrf.mxu0
        %v2645 = vadd.f32 0.0, %v2644
        %v2646 = vpop.f32.mrf.mxu0
        %2647 = vdwg.mxu0
        %v2648 = vmul.f32 %v2645, 0.125
        %v2649 = vadd.f32 %v2648, %v1795
        %v2650 = vsel %vm1580, %v2649, -inf
        %2651 = vmax.xlane.f32.xlu0 %v2650
        %v2652 = vpop.xlane.xlu0 %2651
        %v2653 = vsub.f32 %v2649, %v2652
        %v2654 = vmul.f32 %v2653, 1.442695
        %v2655 = vpow.pop %v2654
        %v2656 = vsel %vm1580, %v2655, 0.0
        %2657 = vadd.xlane.f32.xlu0 %v2656
        %v2658 = vpop.xlane.xlu0 %2657
        %v2659 = vrcp.pop %v2658
        %v2660 = vmul.f32 %v2655, %v2659
        %v2661 = vpack.c.bf16 %v2660, %v2660
        %2663 = vrot.lane.b32.xlu0 %v2602, 64
        %v2664 = vpop.permute.xlu0 %2663
        %v2666 = vsel %vm1580, %v2661, 0
        %v2669 = vsel %vm1597, %v2664, 0
        %2671 = vmatpush.bf16.msra.mxu0 0
        %2672 = vmatpush.bf16.msra.mxu0 0
        %2673 = vmatpush.bf16.msra.mxu0 0
        %2674 = vmatpush.bf16.msra.mxu0 0
        %2675 = vmatpush.bf16.msra.mxu0 0
        %2676 = vmatpush.bf16.msra.mxu0 0
        %2677 = vmatpush.bf16.msra.mxu0 0
        %2678 = vmatpush.bf16.msra.mxu0 %v2669
        %2679 = vmatmul.bf16.gmra.mxu0 %v2666
        %v2680 = vpop.f32.mrf.mxu0
        %v2681 = vadd.f32 0.0, %v2680
        %v2682 = vpop.f32.mrf.mxu0
        %2683 = vdwg.mxu0
        %v2684 = vpack.c.bf16 %v2681, %v2681
        %v2686 = vsel %vm1226, %v2684, 0
        %2688 = vmatpush.bf16.msra.mxu0 0
        %2689 = vmatpush.bf16.msra.mxu0 0
        %2690 = vmatpush.bf16.msra.mxu0 0
        %2691 = vmatpush.bf16.msra.mxu0 0
        %2692 = vmatpush.bf16.msra.mxu0 %v1712
        %2693 = vmatpush.bf16.msra.mxu0 %v1711
        %2694 = vmatpush.bf16.msra.mxu0 %v1710
        %2695 = vmatpush.bf16.msra.mxu0 %v1709
        %2696 = vmatmul.bf16.gmra.mxu0 %v2686
        %v2697 = vpop.f32.mrf.mxu0
        %v2698 = vadd.f32 0.0, %v2697
        %v2699 = vpop.f32.mrf.mxu0
        %2700 = vdwg.mxu0
        %v2702 = vsel %vm1226, %v2622, 0
        %2704 = vmatpush.bf16.msra.mxu0 0
        %2705 = vmatpush.bf16.msra.mxu0 0
        %2706 = vmatpush.bf16.msra.mxu0 0
        %2707 = vmatpush.bf16.msra.mxu0 0
        %2708 = vmatpush.bf16.msra.mxu0 %v1752
        %2709 = vmatpush.bf16.msra.mxu0 %v1751
        %2710 = vmatpush.bf16.msra.mxu0 %v1750
        %2711 = vmatpush.bf16.msra.mxu0 %v1749
        %2712 = vmatmul.bf16.gmra.mxu0 %v2702
        %v2713 = vpop.f32.mrf.mxu0
        %v2714 = vadd.f32 %v2698, %v2713
        %v2715 = vpop.f32.mrf.mxu0
        %2716 = vdwg.mxu0
        %v2717 = vadd.f32 %v2564, %v1926
        %v2718 = vadd.f32 %v2714, %v1926
        %v2719 = vadd.f32 %v2717, %v2372
        %v2720 = vadd.f32 %v2718, %v2373
        %2721 = vadd.xlane.f32.xlu0 %v2719
        %v2722 = vpop.xlane.xlu0 %2721
        %2723 = vadd.xlane.f32.xlu0 %v2720
        %v2724 = vpop.xlane.xlu0 %2723
        %v2725 = vmul.f32 %v2722, %v1942
        %v2726 = vmul.f32 %v2724, %v1942
        %v2727 = vsub.f32 %v2719, %v2725
        %v2728 = vsub.f32 %v2720, %v2726
        %v2729 = vmul.f32 %v2727, %v2727
        %v2730 = vmul.f32 %v2728, %v2728
        %2731 = vadd.xlane.f32.xlu0 %v2729
        %v2732 = vpop.xlane.xlu0 %2731
        %2733 = vadd.xlane.f32.xlu0 %v2730
        %v2734 = vpop.xlane.xlu0 %2733
        %v2735 = vmul.f32 %v2732, %v1942
        %v2736 = vmul.f32 %v2734, %v1942
        %v2737 = vadd.f32 %v2735, 1e-12
        %v2738 = vadd.f32 %v2736, 1e-12
        %v2739 = vrsqrt.pop %v2737
        %v2740 = vmul.f32 %v2739, %v2737
        %v2741 = vmul.f32 %v2740, %v2739
        %v2742 = vmul.f32 0.5, %v2741
        %v2743 = vsub.f32 1.5, %v2742
        %v2744 = vmul.f32 %v2739, %v2743
        %vm2745 = vweird.f32 %v2737
        %vm2746 = vweird.f32 %v2739
        %vm2747 = vmor %vm2745, %vm2746
        %v2748 = vsel %vm2747, %v2739, %v2744
        %v2749 = vrsqrt.pop %v2738
        %v2750 = vmul.f32 %v2749, %v2738
        %v2751 = vmul.f32 %v2750, %v2749
        %v2752 = vmul.f32 0.5, %v2751
        %v2753 = vsub.f32 1.5, %v2752
        %v2754 = vmul.f32 %v2749, %v2753
        %vm2755 = vweird.f32 %v2738
        %vm2756 = vweird.f32 %v2749
        %vm2757 = vmor %vm2755, %vm2756
        %v2758 = vsel %vm2757, %v2749, %v2754
        %v2759 = vmul.f32 %v2727, %v2748
        %v2760 = vmul.f32 %v2728, %v2758
        %v2761 = vmul.f32 %v2759, %v1981
        %v2762 = vmul.f32 %v2760, %v1981
        %v2763 = vadd.f32 %v2761, %v1987
        %v2764 = vadd.f32 %v2762, %v1987
        %v2765 = vpack.c.bf16 %v2764, %v2763
        %2766 = vmatpush.bf16.msra.mxu0 %v2076
        %2767 = vmatpush.bf16.msra.mxu0 %v2074
        %2768 = vmatpush.bf16.msra.mxu0 %v2072
        %2769 = vmatpush.bf16.msra.mxu0 %v2070
        %2770 = vmatpush.bf16.msra.mxu0 %v2068
        %2771 = vmatpush.bf16.msra.mxu0 %v2066
        %2772 = vmatpush.bf16.msra.mxu0 %v2064
        %2773 = vmatpush.bf16.msra.mxu0 %v2062
        %2774 = vmatmul.bf16.gmra.mxu0 %v2765
        %v2775 = vpop.f32.mrf.mxu0
        %v2776 = vadd.f32 %v2010, %v2775
        %v2777 = vpop.f32.mrf.mxu0
        %v2778 = vadd.f32 %v2010, %v2777
        %2779 = vdwg.mxu0
        %2780 = vmatpush.bf16.msra.mxu0 %v2077
        %2781 = vmatpush.bf16.msra.mxu0 %v2075
        %2782 = vmatpush.bf16.msra.mxu0 %v2073
        %2783 = vmatpush.bf16.msra.mxu0 %v2071
        %2784 = vmatpush.bf16.msra.mxu0 %v2069
        %2785 = vmatpush.bf16.msra.mxu0 %v2067
        %2786 = vmatpush.bf16.msra.mxu0 %v2065
        %2787 = vmatpush.bf16.msra.mxu0 %v2063
        %2788 = vmatmul.bf16.gmra.mxu0 %v2765
        %v2789 = vpop.f32.mrf.mxu0
        %v2790 = vadd.f32 %v2011, %v2789
        %v2791 = vpop.f32.mrf.mxu0
        %v2792 = vadd.f32 %v2011, %v2791
        %2793 = vdwg.mxu0
        %v2794 = vmul.f32 %v2776, 0.5
        %v2795 = vmul.f32 %v2790, 0.5
        %v2796 = vmul.f32 %v2778, 0.5
        %v2797 = vmul.f32 %v2792, 0.5
        %v2798 = vmul.f32 %v2776, 0.044715
        %v2799 = vmul.f32 %v2790, 0.044715
        %v2800 = vmul.f32 %v2778, 0.044715
        %v2801 = vmul.f32 %v2792, 0.044715
        %v2802 = vmul.f32 %v2798, %v2776
        %v2803 = vmul.f32 %v2799, %v2790
        %v2804 = vmul.f32 %v2800, %v2778
        %v2805 = vmul.f32 %v2801, %v2792
        %v2806 = vmul.f32 %v2802, %v2776
        %v2807 = vmul.f32 %v2803, %v2790
        %v2808 = vmul.f32 %v2804, %v2778
        %v2809 = vmul.f32 %v2805, %v2792
        %v2810 = vadd.f32 %v2776, %v2806
        %v2811 = vadd.f32 %v2790, %v2807
        %v2812 = vadd.f32 %v2778, %v2808
        %v2813 = vadd.f32 %v2792, %v2809
        %v2814 = vmul.f32 %v2810, 0.7978846
        %v2815 = vmul.f32 %v2811, 0.7978846
        %v2816 = vmul.f32 %v2812, 0.7978846
        %v2817 = vmul.f32 %v2813, 0.7978846
        %v2818 = vtanh.pop %v2814
        %v2819 = vtanh.pop %v2815
        %v2820 = vtanh.pop %v2816
        %v2821 = vtanh.pop %v2817
        %v2822 = vadd.f32 %v2818, 1.0
        %v2823 = vadd.f32 %v2819, 1.0
        %v2824 = vadd.f32 %v2820, 1.0
        %v2825 = vadd.f32 %v2821, 1.0
        %v2826 = vmul.f32 %v2794, %v2822
        %v2827 = vmul.f32 %v2795, %v2823
        %v2828 = vmul.f32 %v2796, %v2824
        %v2829 = vmul.f32 %v2797, %v2825
        %v2830 = vpack.c.bf16 %v2828, %v2826
        %v2831 = vpack.c.bf16 %v2829, %v2827
        %2832 = vmatpush.bf16.msra.mxu0 %v2267
        %2833 = vmatpush.bf16.msra.mxu0 %v2266
        %2834 = vmatpush.bf16.msra.mxu0 %v2265
        %2835 = vmatpush.bf16.msra.mxu0 %v2264
        %2836 = vmatpush.bf16.msra.mxu0 %v2263
        %2837 = vmatpush.bf16.msra.mxu0 %v2262
        %2838 = vmatpush.bf16.msra.mxu0 %v2261
        %2839 = vmatpush.bf16.msra.mxu0 %v2260
        %2840 = vmatmul.bf16.gmra.mxu0 %v2830
        %v2841 = vpop.f32.mrf.mxu0
        %v2842 = vadd.f32 %v2194, %v2841
        %v2843 = vpop.f32.mrf.mxu0
        %v2844 = vadd.f32 %v2194, %v2843
        %2845 = vdwg.mxu0
        %2846 = vmatpush.bf16.msra.mxu0 %v2275
        %2847 = vmatpush.bf16.msra.mxu0 %v2274
        %2848 = vmatpush.bf16.msra.mxu0 %v2273
        %2849 = vmatpush.bf16.msra.mxu0 %v2272
        %2850 = vmatpush.bf16.msra.mxu0 %v2271
        %2851 = vmatpush.bf16.msra.mxu0 %v2270
        %2852 = vmatpush.bf16.msra.mxu0 %v2269
        %2853 = vmatpush.bf16.msra.mxu0 %v2268
        %2854 = vmatmul.bf16.gmra.mxu0 %v2831
        %v2855 = vpop.f32.mrf.mxu0
        %v2856 = vadd.f32 %v2842, %v2855
        %v2857 = vpop.f32.mrf.mxu0
        %v2858 = vadd.f32 %v2844, %v2857
        %2859 = vdwg.mxu0
        %v2860 = vadd.f32 %v2856, %v2763
        %v2861 = vadd.f32 %v2858, %v2764
        %2862 = vadd.xlane.f32.xlu0 %v2860
        %v2863 = vpop.xlane.xlu0 %2862
        %2864 = vadd.xlane.f32.xlu0 %v2861
        %v2865 = vpop.xlane.xlu0 %2864
        %v2866 = vmul.f32 %v2863, %v1942
        %v2867 = vmul.f32 %v2865, %v1942
        %v2868 = vsub.f32 %v2860, %v2866
        %v2869 = vsub.f32 %v2861, %v2867
        %v2870 = vmul.f32 %v2868, %v2868
        %v2871 = vmul.f32 %v2869, %v2869
        %2872 = vadd.xlane.f32.xlu0 %v2870
        %v2873 = vpop.xlane.xlu0 %2872
        %2874 = vadd.xlane.f32.xlu0 %v2871
        %v2875 = vpop.xlane.xlu0 %2874
        %v2876 = vmul.f32 %v2873, %v1942
        %v2877 = vmul.f32 %v2875, %v1942
        %v2878 = vadd.f32 %v2876, 1e-12
        %v2879 = vadd.f32 %v2877, 1e-12
        %v2880 = vrsqrt.pop %v2878
        %v2881 = vmul.f32 %v2880, %v2878
        %v2882 = vmul.f32 %v2881, %v2880
        %v2883 = vmul.f32 0.5, %v2882
        %v2884 = vsub.f32 1.5, %v2883
        %v2885 = vmul.f32 %v2880, %v2884
        %vm2886 = vweird.f32 %v2878
        %vm2887 = vweird.f32 %v2880
        %vm2888 = vmor %vm2886, %vm2887
        %v2889 = vsel %vm2888, %v2880, %v2885
        %v2890 = vrsqrt.pop %v2879
        %v2891 = vmul.f32 %v2890, %v2879
        %v2892 = vmul.f32 %v2891, %v2890
        %v2893 = vmul.f32 0.5, %v2892
        %v2894 = vsub.f32 1.5, %v2893
        %v2895 = vmul.f32 %v2890, %v2894
        %vm2896 = vweird.f32 %v2879
        %vm2897 = vweird.f32 %v2890
        %vm2898 = vmor %vm2896, %vm2897
        %v2899 = vsel %vm2898, %v2890, %v2895
        %v2900 = vmul.f32 %v2868, %v2889
        %v2901 = vmul.f32 %v2869, %v2899
        %v2902 = vmul.f32 %v2900, %v2364
        %v2903 = vmul.f32 %v2901, %v2364
        %v2904 = vadd.f32 %v2902, %v2370
        %v2905 = vadd.f32 %v2903, %v2370
        %v2906 = vpack.c.bf16 %v2904, %v2904
        %v2907 = vld [vmem:[%s1066] sm:$0xf]
        %v2908 = vld [vmem:[%s1066 + $0x4] sm:$0xf]
        %v2909 = vld [vmem:[%s1066 + $0x8] sm:$0xf]
        %v2910 = vld [vmem:[%s1066 + $0xc] sm:$0xf]
        %v2911 = vld [vmem:[%s1066 + $0x10] sm:$0xf]
        %v2912 = vld [vmem:[%s1066 + $0x14] sm:$0xf]
        %v2913 = vld [vmem:[%s1066 + $0x18] sm:$0xf]
        %v2914 = vld [vmem:[%s1066 + $0x1c] sm:$0xf]
        %v2915 = vld [vmem:[%s1066 + $0x20] sm:$0xf]
        %v2916 = vld [vmem:[%s1066 + $0x24] sm:$0xf]
        %v2917 = vld [vmem:[%s1066 + $0x28] sm:$0xf]
        %v2918 = vld [vmem:[%s1066 + $0x2c] sm:$0xf]
        %v2919 = vld [vmem:[%s1066 + $0x30] sm:$0xf]
        %v2920 = vld [vmem:[%s1066 + $0x34] sm:$0xf]
        %v2921 = vld [vmem:[%s1066 + $0x38] sm:$0xf]
        %v2922 = vld [vmem:[%s1066 + $0x3c] sm:$0xf]
        %v2923 = vld [vmem:[%s1222] sm:$0x1]
        %v2940 = vunpack.c.l.b16 %v2907
        %v2941 = vunpack.c.l.b16 %v2908
        %v2942 = vunpack.c.l.b16 %v2909
        %v2943 = vunpack.c.l.b16 %v2910
        %v2944 = vunpack.c.l.b16 %v2911
        %v2945 = vunpack.c.l.b16 %v2912
        %v2946 = vunpack.c.l.b16 %v2913
        %v2947 = vunpack.c.l.b16 %v2914
        %v2948 = vunpack.c.l.b16 %v2915
        %v2949 = vunpack.c.l.b16 %v2916
        %v2950 = vunpack.c.l.b16 %v2917
        %v2951 = vunpack.c.l.b16 %v2918
        %v2952 = vunpack.c.l.b16 %v2919
        %v2953 = vunpack.c.l.b16 %v2920
        %v2954 = vunpack.c.l.b16 %v2921
        %v2955 = vunpack.c.l.b16 %v2922
        %v2956 = vpack.c.b16 %v2941, %v2940
        %v2957 = vpack.c.b16 %v2943, %v2942
        %v2958 = vpack.c.b16 %v2945, %v2944
        %v2959 = vpack.c.b16 %v2947, %v2946
        %v2960 = vpack.c.b16 %v2949, %v2948
        %v2961 = vpack.c.b16 %v2951, %v2950
        %v2962 = vpack.c.b16 %v2953, %v2952
        %v2963 = vpack.c.b16 %v2955, %v2954
        %2972 = vmatpush.bf16.msra.mxu0 %v2963
        %2973 = vmatpush.bf16.msra.mxu0 %v2962
        %2974 = vmatpush.bf16.msra.mxu0 %v2961
        %2975 = vmatpush.bf16.msra.mxu0 %v2960
        %2976 = vmatpush.bf16.msra.mxu0 %v2959
        %2977 = vmatpush.bf16.msra.mxu0 %v2958
        %2978 = vmatpush.bf16.msra.mxu0 %v2957
        %2979 = vmatpush.bf16.msra.mxu0 %v2956
        %2980 = vmatmul.bf16.gmra.mxu0 %v2906
        %v2981 = vpop.f32.mrf.mxu0
        %v2982 = vadd.f32 %v2923, %v2981
        %v2983 = vpop.f32.mrf.mxu0
        %2984 = vdwg.mxu0
        %v2985 = vtanh.pop %v2982
        %2986 = vst [vmem:[%s1202] sm:$0x1] %v2985
        %v2987 = vpack.c.bf16 %v2905, %v2905
        %v2988 = vld [vmem:[%s1066] sm:$0xf]
        %v2989 = vld [vmem:[%s1066 + $0x4] sm:$0xf]
        %v2990 = vld [vmem:[%s1066 + $0x8] sm:$0xf]
        %v2991 = vld [vmem:[%s1066 + $0xc] sm:$0xf]
        %v2992 = vld [vmem:[%s1066 + $0x10] sm:$0xf]
        %v2993 = vld [vmem:[%s1066 + $0x14] sm:$0xf]
        %v2994 = vld [vmem:[%s1066 + $0x18] sm:$0xf]
        %v2995 = vld [vmem:[%s1066 + $0x1c] sm:$0xf]
        %v2996 = vld [vmem:[%s1066 + $0x20] sm:$0xf]
        %v2997 = vld [vmem:[%s1066 + $0x24] sm:$0xf]
        %v2998 = vld [vmem:[%s1066 + $0x28] sm:$0xf]
        %v2999 = vld [vmem:[%s1066 + $0x2c] sm:$0xf]
        %v3000 = vld [vmem:[%s1066 + $0x30] sm:$0xf]
        %v3001 = vld [vmem:[%s1066 + $0x34] sm:$0xf]
        %v3002 = vld [vmem:[%s1066 + $0x38] sm:$0xf]
        %v3003 = vld [vmem:[%s1066 + $0x3c] sm:$0xf]
        %v3004 = vld [vmem:[%s1222] sm:$0x1]
        %v3021 = vunpack.c.l.b16 %v2988
        %v3022 = vunpack.c.l.b16 %v2989
        %v3023 = vunpack.c.l.b16 %v2990
        %v3024 = vunpack.c.l.b16 %v2991
        %v3025 = vunpack.c.l.b16 %v2992
        %v3026 = vunpack.c.l.b16 %v2993
        %v3027 = vunpack.c.l.b16 %v2994
        %v3028 = vunpack.c.l.b16 %v2995
        %v3029 = vunpack.c.l.b16 %v2996
        %v3030 = vunpack.c.l.b16 %v2997
        %v3031 = vunpack.c.l.b16 %v2998
        %v3032 = vunpack.c.l.b16 %v2999
        %v3033 = vunpack.c.l.b16 %v3000
        %v3034 = vunpack.c.l.b16 %v3001
        %v3035 = vunpack.c.l.b16 %v3002
        %v3036 = vunpack.c.l.b16 %v3003
        %v3037 = vpack.c.b16 %v3022, %v3021
        %v3038 = vpack.c.b16 %v3024, %v3023
        %v3039 = vpack.c.b16 %v3026, %v3025
        %v3040 = vpack.c.b16 %v3028, %v3027
        %v3041 = vpack.c.b16 %v3030, %v3029
        %v3042 = vpack.c.b16 %v3032, %v3031
        %v3043 = vpack.c.b16 %v3034, %v3033
        %v3044 = vpack.c.b16 %v3036, %v3035
        %3053 = vmatpush.bf16.msra.mxu0 %v3044
        %3054 = vmatpush.bf16.msra.mxu0 %v3043
        %3055 = vmatpush.bf16.msra.mxu0 %v3042
        %3056 = vmatpush.bf16.msra.mxu0 %v3041
        %3057 = vmatpush.bf16.msra.mxu0 %v3040
        %3058 = vmatpush.bf16.msra.mxu0 %v3039
        %3059 = vmatpush.bf16.msra.mxu0 %v3038
        %3060 = vmatpush.bf16.msra.mxu0 %v3037
        %3061 = vmatmul.bf16.gmra.mxu0 %v2987
        %v3062 = vpop.f32.mrf.mxu0
        %v3063 = vadd.f32 %v3004, %v3062
        %v3064 = vpop.f32.mrf.mxu0
        %3065 = vdwg.mxu0
        %v3066 = vtanh.pop %v3063
        %3067 = vst [vmem:[%s1202 + $0x1] sm:$0x1] %v3066
        %s3068 = sand.u32 %s586, 1
        %s3069 = scalar_lea.sflag [#allocation4], %s3068
        %s3070 = sand.u32 %s586, 1
        %s3071 = smul.addr %s3070, 2
        %s3072 = scalar_lea.vmem [#allocation25], %s3071
        // Predicated region
        $region157: #{tpu_custom_call.1} parent=99 // pred_check
          %p3073 = pneg %p596
        $region158: #{tpu_custom_call.1} parent=99 // pred_check_branch
          %3075 = sbr.rel (%p3073) target = $region160
        $region159: #{tpu_custom_call.1} parent=99 // pred_region
          %3077 = vsyncadd %s3069, 0
          %s3078 = smul.addr %s58, 2
          %s3079 = scalar_lea.hbm %s20, %s3078
          %s3081 = sshll.u32 %s3072, 4
          %s3082 = int_to_ptr.vmem [resolvable:$true] %s3081
          %s3083 = sshll.u32 %s3079, 4
          %s3084 = int_to_ptr.hbm [resolvable:$true] %s3083
          %3086 = dma.vmem_to_hbm [thread:$0]  %s3082, 32, %s3084, %s3069
        $region160: #{tpu_custom_call.1} parent=99 // pred_fallthru
          _
      $region100: #{tpu_custom_call.1} parent=5 // pred_fallthru
        _
      %p3087 = scmp.le.s32.totalorder 2, %s53
      // Predicated region
      $region161: #{tpu_custom_call.1} parent=5 // pred_check
        %p3088 = pneg %p3087
      $region162: #{tpu_custom_call.1} parent=5 // pred_check_branch
        %3090 = sbr.rel (%p3088) target = $region164
      $region163: #{tpu_custom_call.1} parent=5 // pred_region
        %s3091 = ssub.s32 %s53, 2
        // Predicated region
        $region165: #{tpu_custom_call.1} parent=163 // pred_check
          %p3092 = pneg %p602
        $region166: #{tpu_custom_call.1} parent=163 // pred_check_branch
          %3094 = sbr.rel (%p3092) target = $region168
        $region167: #{tpu_custom_call.1} parent=163 // pred_region
          %s3095 = sand.u32 %s587, 1
          %s3096 = scalar_lea.sflag [#allocation4], %s3095
          %s3097 = sand.u32 %s587, 1
          %s3098 = smul.addr %s3097, 2
          %s3099 = scalar_lea.vmem [#allocation25], %s3098
          %3101 = dma.done %s3096, 32
        $region168: #{tpu_custom_call.1} parent=163 // pred_fallthru
          _
      $region164: #{tpu_custom_call.1} parent=5 // pred_fallthru
        _
    $region6: #{tpu_custom_call.1} parent=1 // loop_footer
      %s57 = sadd.s32 1, %s53
    $region7: #{tpu_custom_call.1} parent=1 // loop_footer_branch
      %52 = sbr.rel target = $region3
    $region8: #{tpu_custom_call.1} parent=1 // loop_exit
      _
    %3102 = vsyncpa [#allocation3], 1
    %s3103 = scalar_lea.sflag [#allocation3], 1
    %3104 = vsyncpa %s3103, 1
    %3105 = vsyncpa [#allocation6], 1
    %s3106 = scalar_lea.sflag [#allocation6], 1
    %3107 = vsyncpa %s3106, 1
    %3108 = vsyncpa [#allocation9], 1
    %s3109 = scalar_lea.sflag [#allocation9], 1
    %3110 = vsyncpa %s3109, 1
    %3111 = vsyncpa [#allocation12], 1
    %s3112 = scalar_lea.sflag [#allocation12], 1
    %3113 = vsyncpa %s3112, 1
    %3114 = vsyncpa [#allocation15], 1
    %s3115 = scalar_lea.sflag [#allocation15], 1
    %3116 = vsyncpa %s3115, 1
    %3117 = vsyncpa [#allocation18], 1
    %s3118 = scalar_lea.sflag [#allocation18], 1
    %3119 = vsyncpa %s3118, 1
    %3120 = vsyncpa [#allocation21], 1
    %s3121 = scalar_lea.sflag [#allocation21], 1
    %3122 = vsyncpa %s3121, 1
    %3123 = vsyncpa [#allocation24], 1
    %s3124 = scalar_lea.sflag [#allocation24], 1
    %3125 = vsyncpa %s3124, 1
    %3126 = vsyncpa [#allocation4], 1
    %s3127 = scalar_lea.sflag [#allocation4], 1
    %3128 = vsyncpa %s3127, 1

</llo_original>
